<compile_context>
chip_gen: v7x
topology: tpu7x:2x2x1
jax: 0.10.0
libtpu: 0.0.40
codegen_flags: <defaults>
</compile_context>

<pallas_src>
import functools
import math

import jax
import jax.numpy as jnp
from jax.experimental import pallas as pl
from jax.experimental.pallas import tpu as pltpu

EPS = 1e-5  # PyTorch nn.LayerNorm default


# --------------------------------------------------------------------------
# in-kernel helpers (operate on 2-D (T, C)-like tiles living in VMEM)
# --------------------------------------------------------------------------
def _layernorm(x, g, b):
    mean = jnp.mean(x, axis=-1, keepdims=True)
    var = jnp.mean(jnp.square(x - mean), axis=-1, keepdims=True)
    return (x - mean) * jax.lax.rsqrt(var + EPS) * g + b


def _time_shift(x, row_ids, col_ids):
    """nn.ZeroPad2d((0, 0, 1, -1)) on the first C//2 channels, identity on rest.
    row_ids: (T,1) iota, col_ids: (1,C) iota (hoisted by the caller)."""
    C = x.shape[1]
    shifted = pltpu.roll(x, shift=1, axis=0)              # XLU sublane rotate
    shifted = jnp.where(row_ids >= 1, shifted, 0.0)
    return jnp.where(col_ids < (C // 2), shifted, x)


def _cumsum_time(x, row_ids):
    """Inclusive prefix sum along axis 0 (log-depth Hillis-Steele scan on
    XLU/VPU; no (T,T) MXU pass).  row_ids: hoisted (T,1) iota."""
    T = x.shape[0]
    s = x
    d = 1
    while d < T:                                           # static trip count
        s = s + jnp.where(row_ids >= d, pltpu.roll(s, shift=d, axis=0), 0.0)
        d *= 2
    return s


def _mish(x):
    return x * jnp.tanh(jax.nn.softplus(x))


# --------------------------------------------------------------------------
# Fused per-layer kernel: grid = (batch, channelmix hidden tile)
# --------------------------------------------------------------------------
def layer_kernel(x_ref, g1_ref, b1_ref, g2_ref, b2_ref,
                 awkvr_ref, abkvr_ref, twrev_ref, alpha_ref, beta_ref,
                 awo_ref, abo_ref, tgam_ref,
                 mwkv_ref, mbkv_ref, mww_ref, mbw_ref, mwr_ref, mbr_ref,
                 o_ref, x1_scr, x2s_scr, gate2_scr, acc_scr):
    j = pl.program_id(1)
    T, C = x1_scr.shape
    n_head = alpha_ref.shape[0]
    hs = C // n_head
    th = mwkv_ref.shape[2] // 2

    @pl.when(j == 0)
    def _timemix_and_prep():
        # hoisted narrow index vectors (JAX does not CSE broadcast_in_dim)
        row_c = jax.lax.broadcasted_iota(jnp.int32, (T, 1), 0)   # time, column
        col_c = jax.lax.broadcasted_iota(jnp.int32, (1, C), 1)   # channel, row
        col_t = jax.lax.broadcasted_iota(jnp.int32, (1, T), 1)   # time, row
        tri = row_c >= col_t                                     # causal mask

        x = x_ref[0]

        # ---------------- TimeMix ----------------
        xn = _layernorm(x, g1_ref[...], b1_ref[...])
        xs = _time_shift(xn, row_c, col_c).astype(awkvr_ref.dtype)
        # fused k/v/r projection: one lane-dense (T,C)@(C,3C) bf16 MXU pass
        kvr = (jnp.dot(xs, awkvr_ref[...], preferred_element_type=jnp.float32)
               + abkvr_ref[...])
        k_log = jnp.clip(kvr[:, :C], -60.0, 30.0)
        # per-column max subtraction: exact (cancels in wkv / sum_k), keeps the
        # bf16 k*v operands well conditioned; min(.,20) keeps k >= exp(-80) > 0.
        m = jnp.minimum(jnp.max(k_log, axis=0, keepdims=True), 20.0)
        k = jnp.exp(k_log - m)
        v = kvr[:, C:2 * C]
        r = kvr[:, 2 * C:]
        sum_k = _cumsum_time(k, row_c)                           # once, full C
        gate = jax.nn.sigmoid(r) * pl.reciprocal(sum_k, approx=True)
        kv = (k * v).astype(jnp.bfloat16)

        tw_all = twrev_ref[...]       # (T, n_head): decay value per distance d
        alpha_all = alpha_ref[...]    # (n_head, T)
        beta_all = beta_ref[...]      # (T, n_head)

        parts = []
        for h in range(n_head):       # static unroll; n_head is small
            # Build wt[t,u] = time_w[h, TT-1-(t-u)] * alpha[h,u] * beta[h,t]
            # for u<=t by shifting the decay column down by u in column u
            # (log-depth conditional sublane rolls) - no (T,T) slab in HBM.
            wt = jnp.broadcast_to(tw_all[:, h:h + 1], (T, T))
            d = 1
            while d < T:
                rolled = pltpu.roll(wt, shift=d, axis=0)
                wt = jnp.where((col_t & d) != 0, rolled, wt)
                d *= 2
            wt = (jnp.where(tri, wt, 0.0)
                  * alpha_all[h:h + 1, :] * beta_all[:, h:h + 1])
            wkv_h = jnp.dot(wt.astype(jnp.bfloat16), kv[:, h * hs:(h + 1) * hs],
                            preferred_element_type=jnp.float32)
            parts.append(gate[:, h * hs:(h + 1) * hs] * wkv_h)
        rwkv = jnp.concatenate(parts, axis=1).astype(awo_ref.dtype)

        # single MXU-efficient (T,C)@(C,C) output projection (no per-head acc)
        attn = (jnp.dot(rwkv, awo_ref[...], preferred_element_type=jnp.float32)
                + abo_ref[...]) * tgam_ref[...]
        x1 = x + attn
        x1_scr[...] = x1

        # ---------------- ChannelMix shared prep ----------------
        xn2 = _layernorm(x1, g2_ref[...], b2_ref[...])
        xs2 = _time_shift(xn2, row_c, col_c)
        x2s_scr[...] = xs2.astype(x2s_scr.dtype)
        rr = (jnp.dot(xs2.astype(mwr_ref.dtype), mwr_ref[...],
                      preferred_element_type=jnp.float32) + mbr_ref[...])
        gate2_scr[...] = jax.nn.sigmoid(rr)
        acc_scr[...] = jnp.zeros_like(acc_scr)

    # ---------------- ChannelMix hidden tile j ----------------
    proj = (jnp.dot(x2s_scr[...], mwkv_ref[0], preferred_element_type=jnp.float32)
            + mbkv_ref[0])
    kk = proj[:, :th]
    vv = proj[:, th:]
    acc_scr[...] += jnp.dot((_mish(kk) * vv).astype(mww_ref.dtype), mww_ref[0],
                            preferred_element_type=jnp.float32)

    @pl.when(j == pl.num_programs(1) - 1)
    def _finish():
        o_ref[0] = x1_scr[...] + gate2_scr[...] * (acc_scr[...] + mbw_ref[...])


# --------------------------------------------------------------------------
# Wrapper glue
# --------------------------------------------------------------------------
def _const_spec(shape):
    shape = tuple(shape)
    return pl.BlockSpec(shape, lambda *_: (0,) * len(shape))


def _nbytes(shape, dtype):
    return math.prod(shape) * jnp.dtype(dtype).itemsize


def _vmem_limit_bytes(streamed, consts, scratch, internal):
    """Streamed (pipelined) blocks x2, grid-invariant blocks x1, scratch x1,
    plus an estimate of in-kernel temporaries; capped below the physical VMEM
    of the current TPU generation (64 MiB on v7x, 128 on v5e/v6e)."""
    need = sum(2 * _nbytes(*s) for s in streamed)
    need += sum(_nbytes(*s) for s in consts)
    need += sum(_nbytes(*s) for s in scratch)
    need += internal + 2 * 1024 * 1024
    try:
        cap = int(pltpu.get_tpu_info().vmem_capacity_bytes)
    except Exception:  # pragma: no cover - conservative fallback
        cap = 64 * 1024 * 1024
    return int(min(max(need, 32 * 1024 * 1024), int(cap * 0.9)))


def prepare_params(params, n_head, tile_h=None):
    """One-time packing / casting of the weights for the Pallas layer kernel
    (done per parameter set, NOT per forward call).  For production shapes,
    hid_dim, hid_dim//n_head and tile_h should be multiples of 128 so every
    fused-projection slice is lane-aligned."""
    cdt = jnp.bfloat16
    layers = []
    for lp in params["layers"]:
        C = lp["wk"].shape[0]
        H = lp["cwk"].shape[1]
        th = tile_h if tile_h is not None else (H if H <= 512 else 512)
        nj = -(-H // th)
        Hp = nj * th
        padc = ((0, 0), (0, Hp - H))
        cwk = jnp.pad(lp["cwk"], padc)
        cwv = jnp.pad(lp["cwv"], padc)
        cbk = jnp.pad(lp["cbk"], padc)
        cbv = jnp.pad(lp["cbv"], padc)
        cww = jnp.pad(lp["cww"], ((0, Hp - H), (0, 0)))

        def tile_cols(w):                      # (R, Hp) -> (nj, R, th)
            return w.reshape(w.shape[0], nj, th).transpose(1, 0, 2)

        mix_wkv = jnp.concatenate([tile_cols(cwk), tile_cols(cwv)], axis=2).astype(cdt)
        mix_bkv = jnp.concatenate([tile_cols(cbk), tile_cols(cbv)], axis=2)
        mix_ww = cww.reshape(nj, th, C).astype(cdt)

        layers.append(dict(
            g1=lp["g1"], b1=lp["b1"], g2=lp["g2"], b2=lp["b2"],
            att_wkvr=jnp.concatenate([lp["wk"], lp["wv"], lp["wr"]],
                                     axis=1).astype(cdt),          # (C, 3C)
            att_bkvr=jnp.concatenate([lp["bk"], lp["bv"], lp["br"]], axis=1),
            tw_rev=jnp.flip(lp["time_w"], axis=1).T,  # (ctx, n_head); [d,h]=w[h,ctx-1-d]
            alpha=lp["time_alpha"][:, 0, :],          # (n_head, ctx)
            beta=lp["time_beta"][:, :, 0].T,          # (ctx, n_head)
            att_wo=lp["wo"].astype(cdt), att_bo=lp["bo"],
            tgamma=lp["time_gamma"],                  # (ctx, 1)
            mix_wkv=mix_wkv, mix_bkv=mix_bkv, mix_ww=mix_ww,
            mix_bw=lp["cbw"], mix_wr=lp["cwr"].astype(cdt), mix_br=lp["cbr"],
        ))
    return dict(emb_w=params["emb_w"], emb_b=params["emb_b"], layers=layers)


def rwkv_layer(x, lp, n_head):
    B, T, C = x.shape
    assert C % 2 == 0 and C % n_head == 0
    nj, _, th2 = lp["mix_wkv"].shape
    th = th2 // 2
    cdt = lp["att_wkvr"].dtype
    f32 = jnp.float32

    tw_rev = lp["tw_rev"][:T]      # (T, n_head)
    alpha = lp["alpha"][:, :T]     # (n_head, T)
    beta = lp["beta"][:T]          # (T, n_head)
    tgamma = lp["tgamma"][:T]      # (T, 1)

    streamed = [((1, T, C), x.dtype), ((1, T, C), f32),
                ((1, C, 2 * th), cdt), ((1, 1, 2 * th), f32), ((1, th, C), cdt)]
    consts = ([((1, C), f32)] * 4
              + [((C, 3 * C), cdt), ((1, 3 * C), f32),
                 ((T, n_head), f32), ((n_head, T), f32), ((T, n_head), f32),
                 ((C, C), cdt), ((1, C), f32), ((T, 1), f32),
                 ((1, C), f32), ((C, C), cdt), ((1, C), f32)])
    scratch = [((T, C), f32), ((T, C), cdt), ((T, C), f32), ((T, C), f32)]
    # in-kernel temporaries of the j==0 phase (kvr, k/v/r/kv/sum_k/gate, wt)
    internal = 4 * (3 * T * C + 6 * T * C + 3 * T * T)

    return pl.pallas_call(
        layer_kernel,
        out_shape=jax.ShapeDtypeStruct((B, T, C), jnp.float32),
        grid=(B, nj),
        in_specs=[
            pl.BlockSpec((1, T, C), lambda b, j: (b, 0, 0)),        # x (residual)
            _const_spec((1, C)), _const_spec((1, C)),               # ln1 gamma/beta
            _const_spec((1, C)), _const_spec((1, C)),               # ln2 gamma/beta
            _const_spec((C, 3 * C)), _const_spec((1, 3 * C)),       # fused k/v/r
            _const_spec((T, n_head)),                               # decay per dist
            _const_spec((n_head, T)),                               # time_alpha
            _const_spec((T, n_head)),                               # time_beta
            _const_spec((C, C)), _const_spec((1, C)),               # out proj
            _const_spec((T, 1)),                                    # time_gamma
            pl.BlockSpec((1, C, 2 * th), lambda b, j: (j, 0, 0)),   # cwk|cwv tile
            pl.BlockSpec((1, 1, 2 * th), lambda b, j: (j, 0, 0)),   # bias tile
            pl.BlockSpec((1, th, C), lambda b, j: (j, 0, 0)),       # cww tile
            _const_spec((1, C)),                                    # cbw
            _const_spec((C, C)), _const_spec((1, C)),               # cwr / cbr
        ],
        out_specs=pl.BlockSpec((1, T, C), lambda b, j: (b, 0, 0)),
        scratch_shapes=[pltpu.VMEM((T, C), jnp.float32),  # post-TimeMix residual
                        pltpu.VMEM((T, C), cdt),          # shifted LN2(x1)
                        pltpu.VMEM((T, C), jnp.float32),  # sigmoid(rr) gate
                        pltpu.VMEM((T, C), jnp.float32)], # channelmix accumulator
        input_output_aliases={0: 0},
        compiler_params=pltpu.CompilerParams(
            dimension_semantics=("parallel", "arbitrary"),
            vmem_limit_bytes=_vmem_limit_bytes(streamed, consts, scratch, internal)),
    )(x, lp["g1"], lp["b1"], lp["g2"], lp["b2"],
      lp["att_wkvr"], lp["att_bkvr"], tw_rev, alpha, beta,
      lp["att_wo"], lp["att_bo"], tgamma,
      lp["mix_wkv"], lp["mix_bkv"], lp["mix_ww"],
      lp["mix_bw"], lp["mix_wr"], lp["mix_br"])


def encoder_forward(x, prep, n_head):
    B, T, _ = x.shape
    ctx_len = prep["layers"][0]["tgamma"].shape[0]
    assert T <= ctx_len, "len(input) > model ctx_len"
    hi = jax.lax.Precision.HIGHEST
    # K = input_dim is tiny; a Pallas kernel would waste the MXU - plain XLA matmul.
    h = jnp.einsum("bti,ih->bth", x, prep["emb_w"], precision=hi) + prep["emb_b"]
    for lp in prep["layers"]:
        h = rwkv_layer(h, lp, n_head)
    return h
    # (ln_f / time_out / head / head_q / head_k / copy_mask exist in __init__ but
    #  are unused by Encoder.forward, so they are not part of this kernel.)


# --------------------------------------------------------------------------
# Deterministic parameter initialisation
# --------------------------------------------------------------------------
def _linear(key, fan_in, fan_out, scale=0.1):
    kw, kb = jax.random.split(key)
    w = jax.random.normal(kw, (fan_in, fan_out), jnp.float32) * scale
    b = jax.random.normal(kb, (1, fan_out), jnp.float32) * 0.01
    return w, b


def init_params(key, input_dim, hid_dim, n_layers, n_head, ctx_len, n_ffn):
    keys = jax.random.split(key, 1 + n_layers)
    emb_w, emb_b = _linear(keys[0], input_dim, hid_dim)

    # RWKV-v1 time_w decay-curve init
    curve = jnp.arange(ctx_len, dtype=jnp.float32) - (ctx_len - 1)
    ww = []
    for h in range(n_head):
        decay = math.pow(ctx_len, -(h + 1) / (n_head - 1)) if h < n_head - 1 else 0.0
        ww.append(jnp.exp(curve * decay))
    time_w_init = jnp.stack(ww).astype(jnp.float32)

    hidden_sz = 5 * n_ffn // 2
    layers = []
    for li in range(n_layers):
        lk = jax.random.split(keys[1 + li], 8)
        wk, bk = _linear(lk[0], hid_dim, hid_dim)       # n_attn == hid_dim
        wv, bv = _linear(lk[1], hid_dim, hid_dim)
        wr, br = _linear(lk[2], hid_dim, hid_dim)
        wo, bo = _linear(lk[3], hid_dim, hid_dim)
        cwk, cbk = _linear(lk[4], hid_dim, hidden_sz)
        cwv, cbv = _linear(lk[5], hid_dim, hidden_sz)
        cww, cbw = _linear(lk[6], hidden_sz, hid_dim)
        cwr, cbr = _linear(lk[7], hid_dim, hid_dim)
        layers.append(dict(
            g1=jnp.ones((1, hid_dim), jnp.float32),
            b1=jnp.zeros((1, hid_dim), jnp.float32),
            g2=jnp.ones((1, hid_dim), jnp.float32),
            b2=jnp.zeros((1, hid_dim), jnp.float32),
            time_w=time_w_init,
            time_alpha=jnp.ones((n_head, 1, ctx_len), jnp.float32),
            time_beta=jnp.ones((n_head, ctx_len, 1), jnp.float32),
            time_gamma=jnp.ones((ctx_len, 1), jnp.float32),
            wk=wk, bk=bk, wv=wv, bv=bv, wr=wr, br=br, wo=wo, bo=bo,
            cwk=cwk, cbk=cbk, cwv=cwv, cbv=cbv,
            cww=cww, cbw=cbw, cwr=cwr, cbr=cbr,
        ))
    return dict(emb_w=emb_w, emb_b=emb_b, layers=layers)


# --------------------------------------------------------------------------
# Pure-JAX reference (f32, HIGHEST precision) for a sanity check of the kernels
# --------------------------------------------------------------------------
def build_time_w(time_w, time_alpha, time_beta, T):
    # Replicates the circulant construction from RWKV_TimeMix.forward.
    H, TT = time_w.shape
    w = jnp.pad(time_w, ((0, 0), (0, TT)))
    w = jnp.tile(w, (1, TT))
    w = w[:, :-TT].reshape(H, TT, 2 * TT - 1)
    w = w[:, :, TT - 1:]                       # circulant (H, TT, TT)
    w = w[:, :T, :T] * time_alpha[:, :, :T] * time_beta[:, :T, :]
    return w.astype(jnp.float32)


def _ref_ln(x, g, b):
    m = jnp.mean(x, axis=-1, keepdims=True)
    v = jnp.mean(jnp.square(x - m), axis=-1, keepdims=True)
    return (x - m) * jax.lax.rsqrt(v + EPS) * g + b


def _ref_shift(x):
    B, T, C = x.shape
    half = C // 2
    sh = jnp.concatenate([jnp.zeros((B, 1, half)), x[:, :-1, :half]], axis=1)
    return jnp.concatenate([sh, x[:, :, half:]], axis=2)


def _ref_layer(x, p, n_head):
    B, T, C = x.shape
    hi = jax.lax.Precision.HIGHEST
    w = build_time_w(p["time_w"], p["time_alpha"], p["time_beta"], T)
    xs = _ref_shift(_ref_ln(x, p["g1"], p["b1"]))
    k = jnp.einsum("btc,ca->bta", xs, p["wk"], precision=hi) + p["bk"]
    v = jnp.einsum("btc,ca->bta", xs, p["wv"], precision=hi) + p["bv"]
    r = jnp.einsum("btc,ca->bta", xs, p["wr"], precision=hi) + p["br"]
    k = jnp.exp(jnp.clip(k, -60.0, 30.0))
    sum_k = jnp.cumsum(k, axis=1)
    hs = C // n_head
    kv = (k * v).reshape(B, T, n_head, hs)
    wkv = jnp.einsum("htu,buhc->bthc", w, kv, precision=hi).reshape(B, T, -1)
    rwkv = jax.nn.sigmoid(r) * wkv / sum_k
    attn = (jnp.einsum("bta,ac->btc", rwkv, p["wo"], precision=hi)
            + p["bo"]) * p["time_gamma"][:T, :]
    x = x + attn
    xs2 = _ref_shift(_ref_ln(x, p["g2"], p["b2"]))
    kk = jnp.einsum("btc,ch->bth", xs2, p["cwk"], precision=hi) + p["cbk"]
    vv = jnp.einsum("btc,ch->bth", xs2, p["cwv"], precision=hi) + p["cbv"]
    rr = jnp.einsum("btc,cd->btd", xs2, p["cwr"], precision=hi) + p["cbr"]
    mish = kk * jnp.tanh(jax.nn.softplus(kk))
    wkv2 = jnp.einsum("bth,hc->btc", mish * vv, p["cww"], precision=hi) + p["cbw"]
    return x + jax.nn.sigmoid(rr) * wkv2


def encoder_reference(x, params, n_head):
    hi = jax.lax.Precision.HIGHEST
    x = jnp.einsum("bti,ih->bth", x, params["emb_w"], precision=hi) + params["emb_b"]
    for lp in params["layers"]:
        x = _ref_layer(x, lp, n_head)
    return x


# --------------------------------------------------------------------------
if __name__ == "__main__":
    B, T = 2, 8
    input_dim, hid_dim, n_layers, n_heads, ctx_len, n_ffn = 4, 32, 2, 4, 8, 32

    key = jax.random.PRNGKey(0)
    kp, kx = jax.random.split(key)
    params = init_params(kp, input_dim, hid_dim, n_layers, n_heads, ctx_len, n_ffn)
    x = jax.random.normal(kx, (B, T, input_dim), jnp.float32)

    # Weight packing / casting happens once per parameter set, not per forward.
    prep = prepare_params(params, n_heads)

    fwd = jax.jit(functools.partial(encoder_forward, n_head=n_heads))
    out = jax.block_until_ready(fwd(x, prep))
    assert out.shape == (B, T, hid_dim)

    ref = encoder_reference(x, params, n_heads)
    max_err = float(jnp.max(jnp.abs(out - ref)))
    # matmuls use bf16 operands (f32 accumulation), so the tolerance is looser
    # than a pure-f32 check.
    assert max_err < 3e-2, f"mismatch vs reference: {max_err}"

    print("KERNEL_OK")
</pallas_src>

<mosaic_0001>
module attributes {stable_mosaic.version = 11 : i64} {
  func.func @layer_kernel(%arg0: i32, %arg1: i32, %arg2: memref<1x8x32xf32, #tpu.memory_space<vmem>>, %arg3: memref<1x32xf32, #tpu.memory_space<vmem>>, %arg4: memref<1x32xf32, #tpu.memory_space<vmem>>, %arg5: memref<1x32xf32, #tpu.memory_space<vmem>>, %arg6: memref<1x32xf32, #tpu.memory_space<vmem>>, %arg7: memref<32x96xbf16, #tpu.memory_space<vmem>>, %arg8: memref<1x96xf32, #tpu.memory_space<vmem>>, %arg9: memref<8x4xf32, #tpu.memory_space<vmem>>, %arg10: memref<4x8xf32, #tpu.memory_space<vmem>>, %arg11: memref<8x4xf32, #tpu.memory_space<vmem>>, %arg12: memref<32x32xbf16, #tpu.memory_space<vmem>>, %arg13: memref<1x32xf32, #tpu.memory_space<vmem>>, %arg14: memref<8x1xf32, #tpu.memory_space<vmem>>, %arg15: memref<1x32x160xbf16, #tpu.memory_space<vmem>>, %arg16: memref<1x1x160xf32, #tpu.memory_space<vmem>>, %arg17: memref<1x80x32xbf16, #tpu.memory_space<vmem>>, %arg18: memref<1x32xf32, #tpu.memory_space<vmem>>, %arg19: memref<32x32xbf16, #tpu.memory_space<vmem>>, %arg20: memref<1x32xf32, #tpu.memory_space<vmem>>, %arg21: memref<1x8x32xf32, #tpu.memory_space<vmem>>, %arg22: memref<8x32xf32, #tpu.memory_space<vmem>>, %arg23: memref<8x32xbf16, #tpu.memory_space<vmem>>, %arg24: memref<8x32xf32, #tpu.memory_space<vmem>>, %arg25: memref<8x32xf32, #tpu.memory_space<vmem>>) attributes {dimension_semantics = [#tpu.dimension_semantics<parallel>, #tpu.dimension_semantics<arbitrary>], iteration_bounds = array<i64: 2, 1>, scalar_prefetch = 0 : i64, scratch_operands = 4 : i64, tpu.core_type = #tpu.core_type<tc>, window_params = [{transform_indices = @transform_0, window_bounds = array<i64: 1, 8, 32>}, {pipeline_mode = #tpu.pipeline_mode<synchronous>, transform_indices = @transform_1, window_bounds = array<i64: 1, 32>}, {pipeline_mode = #tpu.pipeline_mode<synchronous>, transform_indices = @transform_2, window_bounds = array<i64: 1, 32>}, {pipeline_mode = #tpu.pipeline_mode<synchronous>, transform_indices = @transform_3, window_bounds = array<i64: 1, 32>}, {pipeline_mode = #tpu.pipeline_mode<synchronous>, transform_indices = @transform_4, window_bounds = array<i64: 1, 32>}, {pipeline_mode = #tpu.pipeline_mode<synchronous>, transform_indices = @transform_5, window_bounds = array<i64: 32, 96>}, {pipeline_mode = #tpu.pipeline_mode<synchronous>, transform_indices = @transform_6, window_bounds = array<i64: 1, 96>}, {pipeline_mode = #tpu.pipeline_mode<synchronous>, transform_indices = @transform_7, window_bounds = array<i64: 8, 4>}, {pipeline_mode = #tpu.pipeline_mode<synchronous>, transform_indices = @transform_8, window_bounds = array<i64: 4, 8>}, {pipeline_mode = #tpu.pipeline_mode<synchronous>, transform_indices = @transform_9, window_bounds = array<i64: 8, 4>}, {pipeline_mode = #tpu.pipeline_mode<synchronous>, transform_indices = @transform_10, window_bounds = array<i64: 32, 32>}, {pipeline_mode = #tpu.pipeline_mode<synchronous>, transform_indices = @transform_11, window_bounds = array<i64: 1, 32>}, {pipeline_mode = #tpu.pipeline_mode<synchronous>, transform_indices = @transform_12, window_bounds = array<i64: 8, 1>}, {transform_indices = @transform_13, window_bounds = array<i64: 1, 32, 160>}, {transform_indices = @transform_14, window_bounds = array<i64: 1, 1, 160>}, {transform_indices = @transform_15, window_bounds = array<i64: 1, 80, 32>}, {pipeline_mode = #tpu.pipeline_mode<synchronous>, transform_indices = @transform_16, window_bounds = array<i64: 1, 32>}, {pipeline_mode = #tpu.pipeline_mode<synchronous>, transform_indices = @transform_17, window_bounds = array<i64: 32, 32>}, {pipeline_mode = #tpu.pipeline_mode<synchronous>, transform_indices = @transform_18, window_bounds = array<i64: 1, 32>}, {transform_indices = @transform_19, window_bounds = array<i64: 1, 8, 32>}]} {
    %c0_i32 = arith.constant 0 : i32
    %0 = arith.cmpi eq, %arg1, %c0_i32 : i32
    %1 = arith.extui %0 : i1 to i32
    %c0_i32_0 = arith.constant 0 : i32
    %2 = arith.cmpi ne, %1, %c0_i32_0 : i32
    scf.if %2 {
      %40 = tpu.iota {dimensions = array<i32: 0>} : vector<8x1xi32>
      %41 = tpu.iota {dimensions = array<i32: 1>} : vector<1x32xi32>
      %42 = tpu.iota {dimensions = array<i32: 1>} : vector<1x8xi32>
      %43 = vector.broadcast %40 : vector<8x1xi32> to vector<8x8xi32>
      %44 = vector.broadcast %42 : vector<1x8xi32> to vector<8x8xi32>
      %45 = arith.cmpi sge, %43, %44 : vector<8x8xi32>
      %c0_20 = arith.constant 0 : index
      %c0_21 = arith.constant 0 : index
      %c0_22 = arith.constant 0 : index
      %46 = vector.load %arg2[%c0_20, %c0_21, %c0_22] : memref<1x8x32xf32, #tpu.memory_space<vmem>>, vector<1x8x32xf32>
      %47 = vector.shape_cast %46 : vector<1x8x32xf32> to vector<8x32xf32>
      %c0_23 = arith.constant 0 : index
      %c0_24 = arith.constant 0 : index
      %48 = vector.load %arg3[%c0_23, %c0_24] : memref<1x32xf32, #tpu.memory_space<vmem>>, vector<1x32xf32>
      %c0_25 = arith.constant 0 : index
      %c0_26 = arith.constant 0 : index
      %49 = vector.load %arg4[%c0_25, %c0_26] : memref<1x32xf32, #tpu.memory_space<vmem>>, vector<1x32xf32>
      %cst_27 = arith.constant dense<0.000000e+00> : vector<8xf32>
      %50 = vector.multi_reduction <add>, %47, %cst_27 [1] : vector<8x32xf32> to vector<8xf32>
      %51 = vector.shape_cast %50 : vector<8xf32> to vector<8x1xf32>
      %cst_28 = arith.constant 3.200000e+01 : f32
      %52 = vector.broadcast %cst_28 : f32 to vector<8x1xf32>
      %53 = arith.divf %51, %52 : vector<8x1xf32>
      %54 = vector.broadcast %53 : vector<8x1xf32> to vector<8x32xf32>
      %55 = arith.subf %47, %54 : vector<8x32xf32>
      %56 = arith.mulf %55, %55 : vector<8x32xf32>
      %cst_29 = arith.constant dense<0.000000e+00> : vector<8xf32>
      %57 = vector.multi_reduction <add>, %56, %cst_29 [1] : vector<8x32xf32> to vector<8xf32>
      %58 = vector.shape_cast %57 : vector<8xf32> to vector<8x1xf32>
      %cst_30 = arith.constant 3.200000e+01 : f32
      %59 = vector.broadcast %cst_30 : f32 to vector<8x1xf32>
      %60 = arith.divf %58, %59 : vector<8x1xf32>
      %61 = vector.broadcast %53 : vector<8x1xf32> to vector<8x32xf32>
      %62 = arith.subf %47, %61 : vector<8x32xf32>
      %cst_31 = arith.constant 9.99999974E-6 : f32
      %63 = vector.broadcast %cst_31 : f32 to vector<8x1xf32>
      %64 = arith.addf %60, %63 : vector<8x1xf32>
      %65 = math.rsqrt %64 : vector<8x1xf32>
      %66 = vector.broadcast %65 : vector<8x1xf32> to vector<8x32xf32>
      %67 = arith.mulf %62, %66 : vector<8x32xf32>
      %68 = vector.broadcast %48 : vector<1x32xf32> to vector<8x32xf32>
      %69 = arith.mulf %67, %68 : vector<8x32xf32>
      %70 = vector.broadcast %49 : vector<1x32xf32> to vector<8x32xf32>
      %71 = arith.addf %69, %70 : vector<8x32xf32>
      %c1_i32 = arith.constant 1 : i32
      %72 = tpu.dynamic_rotate %71 by %c1_i32 dim 0 : vector<8x32xf32>, i32 -> vector<8x32xf32>
      %c1_i32_32 = arith.constant 1 : i32
      %73 = vector.broadcast %c1_i32_32 : i32 to vector<8x1xi32>
      %74 = arith.cmpi sge, %40, %73 : vector<8x1xi32>
      %cst_33 = arith.constant 0.000000e+00 : f32
      %75 = vector.shape_cast %74 : vector<8x1xi1> to vector<8x1xi1>
      %76 = vector.broadcast %75 : vector<8x1xi1> to vector<8x32xi1>
      %77 = vector.broadcast %cst_33 : f32 to vector<8x32xf32>
      %78 = arith.select %76, %72, %77 : vector<8x32xi1>, vector<8x32xf32>
      %c16_i32 = arith.constant 16 : i32
      %79 = vector.broadcast %c16_i32 : i32 to vector<1x32xi32>
      %80 = arith.cmpi slt, %41, %79 : vector<1x32xi32>
      %81 = vector.shape_cast %80 : vector<1x32xi1> to vector<1x32xi1>
      %82 = vector.broadcast %81 : vector<1x32xi1> to vector<8x32xi1>
      %83 = arith.select %82, %78, %71 : vector<8x32xi1>, vector<8x32xf32>
      %84 = arith.truncf %83 : vector<8x32xf32> to vector<8x32xbf16>
      %c0_34 = arith.constant 0 : index
      %c0_35 = arith.constant 0 : index
      %85 = vector.load %arg7[%c0_34, %c0_35] : memref<32x96xbf16, #tpu.memory_space<vmem>>, vector<32x96xbf16>
      %cst_36 = arith.constant dense<0.000000e+00> : vector<8x96xf32>
      %86 = tpu.matmul %84, %85, %cst_36 {dimension_numbers = #tpu.dot_dimension_numbers<[1], [0], [0], [1], [0, 0, 1, 1], [], []>} : vector<8x32xbf16>, vector<32x96xbf16>, vector<8x96xf32> -> vector<8x96xf32>
      %c0_37 = arith.constant 0 : index
      %c0_38 = arith.constant 0 : index
      %87 = vector.load %arg8[%c0_37, %c0_38] : memref<1x96xf32, #tpu.memory_space<vmem>>, vector<1x96xf32>
      %88 = vector.broadcast %87 : vector<1x96xf32> to vector<8x96xf32>
      %89 = arith.addf %86, %88 : vector<8x96xf32>
      %90 = vector.extract_strided_slice %89 {offsets = [0, 0], sizes = [8, 32], strides = [1, 1]} : vector<8x96xf32> to vector<8x32xf32>
      %cst_39 = arith.constant -6.000000e+01 : f32
      %cst_40 = arith.constant 3.000000e+01 : f32
      %91 = vector.broadcast %cst_39 : f32 to vector<8x32xf32>
      %92 = arith.maximumf %91, %90 : vector<8x32xf32>
      %93 = vector.broadcast %cst_40 : f32 to vector<8x32xf32>
      %94 = arith.minimumf %93, %92 : vector<8x32xf32>
      %cst_41 = arith.constant dense<0xFF800000> : vector<32xf32>
      %95 = vector.multi_reduction <maximumf>, %94, %cst_41 [0] : vector<8x32xf32> to vector<32xf32>
      %96 = vector.shape_cast %95 : vector<32xf32> to vector<1x32xf32>
      %cst_42 = arith.constant 2.000000e+01 : f32
      %97 = vector.broadcast %cst_42 : f32 to vector<1x32xf32>
      %98 = arith.minimumf %96, %97 : vector<1x32xf32>
      %99 = vector.broadcast %98 : vector<1x32xf32> to vector<8x32xf32>
      %100 = arith.subf %94, %99 : vector<8x32xf32>
      %101 = math.exp %100 : vector<8x32xf32>
      %102 = vector.extract_strided_slice %89 {offsets = [0, 32], sizes = [8, 32], strides = [1, 1]} : vector<8x96xf32> to vector<8x32xf32>
      %103 = vector.extract_strided_slice %89 {offsets = [0, 64], sizes = [8, 32], strides = [1, 1]} : vector<8x96xf32> to vector<8x32xf32>
      %c1_i32_43 = arith.constant 1 : i32
      %104 = vector.broadcast %c1_i32_43 : i32 to vector<8x1xi32>
      %105 = arith.cmpi sge, %40, %104 : vector<8x1xi32>
      %c1_i32_44 = arith.constant 1 : i32
      %106 = tpu.dynamic_rotate %101 by %c1_i32_44 dim 0 : vector<8x32xf32>, i32 -> vector<8x32xf32>
      %cst_45 = arith.constant 0.000000e+00 : f32
      %107 = vector.shape_cast %105 : vector<8x1xi1> to vector<8x1xi1>
      %108 = vector.broadcast %107 : vector<8x1xi1> to vector<8x32xi1>
      %109 = vector.broadcast %cst_45 : f32 to vector<8x32xf32>
      %110 = arith.select %108, %106, %109 : vector<8x32xi1>, vector<8x32xf32>
      %111 = arith.addf %101, %110 : vector<8x32xf32>
      %c2_i32 = arith.constant 2 : i32
      %112 = vector.broadcast %c2_i32 : i32 to vector<8x1xi32>
      %113 = arith.cmpi sge, %40, %112 : vector<8x1xi32>
      %c2_i32_46 = arith.constant 2 : i32
      %114 = tpu.dynamic_rotate %111 by %c2_i32_46 dim 0 : vector<8x32xf32>, i32 -> vector<8x32xf32>
      %cst_47 = arith.constant 0.000000e+00 : f32
      %115 = vector.shape_cast %113 : vector<8x1xi1> to vector<8x1xi1>
      %116 = vector.broadcast %115 : vector<8x1xi1> to vector<8x32xi1>
      %117 = vector.broadcast %cst_47 : f32 to vector<8x32xf32>
      %118 = arith.select %116, %114, %117 : vector<8x32xi1>, vector<8x32xf32>
      %119 = arith.addf %111, %118 : vector<8x32xf32>
      %c4_i32 = arith.constant 4 : i32
      %120 = vector.broadcast %c4_i32 : i32 to vector<8x1xi32>
      %121 = arith.cmpi sge, %40, %120 : vector<8x1xi32>
      %c4_i32_48 = arith.constant 4 : i32
      %122 = tpu.dynamic_rotate %119 by %c4_i32_48 dim 0 : vector<8x32xf32>, i32 -> vector<8x32xf32>
      %cst_49 = arith.constant 0.000000e+00 : f32
      %123 = vector.shape_cast %121 : vector<8x1xi1> to vector<8x1xi1>
      %124 = vector.broadcast %123 : vector<8x1xi1> to vector<8x32xi1>
      %125 = vector.broadcast %cst_49 : f32 to vector<8x32xf32>
      %126 = arith.select %124, %122, %125 : vector<8x32xi1>, vector<8x32xf32>
      %127 = arith.addf %119, %126 : vector<8x32xf32>
      %128 = arith.negf %103 : vector<8x32xf32>
      %129 = math.exp %128 : vector<8x32xf32>
      %cst_50 = arith.constant 1.000000e+00 : f32
      %130 = vector.broadcast %cst_50 : f32 to vector<8x32xf32>
      %131 = arith.addf %130, %129 : vector<8x32xf32>
      %132 = arith.divf %130, %131 : vector<8x32xf32>
      %133 = tpu.reciprocal %127 {approx = true} : vector<8x32xf32> -> vector<8x32xf32>
      %134 = arith.mulf %132, %133 : vector<8x32xf32>
      %135 = arith.mulf %101, %102 : vector<8x32xf32>
      %136 = arith.truncf %135 : vector<8x32xf32> to vector<8x32xbf16>
      %c0_51 = arith.constant 0 : index
      %c0_52 = arith.constant 0 : index
      %137 = vector.load %arg9[%c0_51, %c0_52] : memref<8x4xf32, #tpu.memory_space<vmem>>, vector<8x4xf32>
      %c0_53 = arith.constant 0 : index
      %c0_54 = arith.constant 0 : index
      %138 = vector.load %arg10[%c0_53, %c0_54] : memref<4x8xf32, #tpu.memory_space<vmem>>, vector<4x8xf32>
      %c0_55 = arith.constant 0 : index
      %c0_56 = arith.constant 0 : index
      %139 = vector.load %arg11[%c0_55, %c0_56] : memref<8x4xf32, #tpu.memory_space<vmem>>, vector<8x4xf32>
      %140 = vector.extract_strided_slice %137 {offsets = [0, 0], sizes = [8, 1], strides = [1, 1]} : vector<8x4xf32> to vector<8x1xf32>
      %141 = vector.shape_cast %140 : vector<8x1xf32> to vector<8x1xf32>
      %142 = vector.broadcast %141 : vector<8x1xf32> to vector<8x8xf32>
      %c1_i32_57 = arith.constant 1 : i32
      %143 = tpu.dynamic_rotate %142 by %c1_i32_57 dim 0 : vector<8x8xf32>, i32 -> vector<8x8xf32>
      %c1_i32_58 = arith.constant 1 : i32
      %144 = vector.broadcast %c1_i32_58 : i32 to vector<1x8xi32>
      %145 = arith.andi %42, %144 : vector<1x8xi32>
      %c0_i32_59 = arith.constant 0 : i32
      %146 = vector.broadcast %c0_i32_59 : i32 to vector<1x8xi32>
      %147 = arith.cmpi ne, %145, %146 : vector<1x8xi32>
      %148 = vector.shape_cast %147 : vector<1x8xi1> to vector<1x8xi1>
      %149 = vector.broadcast %148 : vector<1x8xi1> to vector<8x8xi1>
      %150 = arith.select %149, %143, %142 : vector<8x8xi1>, vector<8x8xf32>
      %c2_i32_60 = arith.constant 2 : i32
      %151 = tpu.dynamic_rotate %150 by %c2_i32_60 dim 0 : vector<8x8xf32>, i32 -> vector<8x8xf32>
      %c2_i32_61 = arith.constant 2 : i32
      %152 = vector.broadcast %c2_i32_61 : i32 to vector<1x8xi32>
      %153 = arith.andi %42, %152 : vector<1x8xi32>
      %c0_i32_62 = arith.constant 0 : i32
      %154 = vector.broadcast %c0_i32_62 : i32 to vector<1x8xi32>
      %155 = arith.cmpi ne, %153, %154 : vector<1x8xi32>
      %156 = vector.shape_cast %155 : vector<1x8xi1> to vector<1x8xi1>
      %157 = vector.broadcast %156 : vector<1x8xi1> to vector<8x8xi1>
      %158 = arith.select %157, %151, %150 : vector<8x8xi1>, vector<8x8xf32>
      %c4_i32_63 = arith.constant 4 : i32
      %159 = tpu.dynamic_rotate %158 by %c4_i32_63 dim 0 : vector<8x8xf32>, i32 -> vector<8x8xf32>
      %c4_i32_64 = arith.constant 4 : i32
      %160 = vector.broadcast %c4_i32_64 : i32 to vector<1x8xi32>
      %161 = arith.andi %42, %160 : vector<1x8xi32>
      %c0_i32_65 = arith.constant 0 : i32
      %162 = vector.broadcast %c0_i32_65 : i32 to vector<1x8xi32>
      %163 = arith.cmpi ne, %161, %162 : vector<1x8xi32>
      %164 = vector.shape_cast %163 : vector<1x8xi1> to vector<1x8xi1>
      %165 = vector.broadcast %164 : vector<1x8xi1> to vector<8x8xi1>
      %166 = arith.select %165, %159, %158 : vector<8x8xi1>, vector<8x8xf32>
      %cst_66 = arith.constant 0.000000e+00 : f32
      %167 = vector.broadcast %cst_66 : f32 to vector<8x8xf32>
      %168 = arith.select %45, %166, %167 : vector<8x8xi1>, vector<8x8xf32>
      %169 = vector.extract_strided_slice %138 {offsets = [0, 0], sizes = [1, 8], strides = [1, 1]} : vector<4x8xf32> to vector<1x8xf32>
      %170 = vector.broadcast %169 : vector<1x8xf32> to vector<8x8xf32>
      %171 = arith.mulf %168, %170 : vector<8x8xf32>
      %172 = vector.extract_strided_slice %139 {offsets = [0, 0], sizes = [8, 1], strides = [1, 1]} : vector<8x4xf32> to vector<8x1xf32>
      %173 = vector.broadcast %172 : vector<8x1xf32> to vector<8x8xf32>
      %174 = arith.mulf %171, %173 : vector<8x8xf32>
      %175 = arith.truncf %174 : vector<8x8xf32> to vector<8x8xbf16>
      %176 = vector.extract_strided_slice %136 {offsets = [0, 0], sizes = [8, 8], strides = [1, 1]} : vector<8x32xbf16> to vector<8x8xbf16>
      %cst_67 = arith.constant dense<0.000000e+00> : vector<8x8xf32>
      %177 = tpu.matmul %175, %176, %cst_67 {dimension_numbers = #tpu.dot_dimension_numbers<[1], [0], [0], [1], [0, 0, 1, 1], [], []>} : vector<8x8xbf16>, vector<8x8xbf16>, vector<8x8xf32> -> vector<8x8xf32>
      %178 = vector.extract_strided_slice %134 {offsets = [0, 0], sizes = [8, 8], strides = [1, 1]} : vector<8x32xf32> to vector<8x8xf32>
      %179 = arith.mulf %178, %177 : vector<8x8xf32>
      %180 = vector.extract_strided_slice %137 {offsets = [0, 1], sizes = [8, 1], strides = [1, 1]} : vector<8x4xf32> to vector<8x1xf32>
      %181 = vector.shape_cast %180 : vector<8x1xf32> to vector<8x1xf32>
      %182 = vector.broadcast %181 : vector<8x1xf32> to vector<8x8xf32>
      %c1_i32_68 = arith.constant 1 : i32
      %183 = tpu.dynamic_rotate %182 by %c1_i32_68 dim 0 : vector<8x8xf32>, i32 -> vector<8x8xf32>
      %c1_i32_69 = arith.constant 1 : i32
      %184 = vector.broadcast %c1_i32_69 : i32 to vector<1x8xi32>
      %185 = arith.andi %42, %184 : vector<1x8xi32>
      %c0_i32_70 = arith.constant 0 : i32
      %186 = vector.broadcast %c0_i32_70 : i32 to vector<1x8xi32>
      %187 = arith.cmpi ne, %185, %186 : vector<1x8xi32>
      %188 = vector.shape_cast %187 : vector<1x8xi1> to vector<1x8xi1>
      %189 = vector.broadcast %188 : vector<1x8xi1> to vector<8x8xi1>
      %190 = arith.select %189, %183, %182 : vector<8x8xi1>, vector<8x8xf32>
      %c2_i32_71 = arith.constant 2 : i32
      %191 = tpu.dynamic_rotate %190 by %c2_i32_71 dim 0 : vector<8x8xf32>, i32 -> vector<8x8xf32>
      %c2_i32_72 = arith.constant 2 : i32
      %192 = vector.broadcast %c2_i32_72 : i32 to vector<1x8xi32>
      %193 = arith.andi %42, %192 : vector<1x8xi32>
      %c0_i32_73 = arith.constant 0 : i32
      %194 = vector.broadcast %c0_i32_73 : i32 to vector<1x8xi32>
      %195 = arith.cmpi ne, %193, %194 : vector<1x8xi32>
      %196 = vector.shape_cast %195 : vector<1x8xi1> to vector<1x8xi1>
      %197 = vector.broadcast %196 : vector<1x8xi1> to vector<8x8xi1>
      %198 = arith.select %197, %191, %190 : vector<8x8xi1>, vector<8x8xf32>
      %c4_i32_74 = arith.constant 4 : i32
      %199 = tpu.dynamic_rotate %198 by %c4_i32_74 dim 0 : vector<8x8xf32>, i32 -> vector<8x8xf32>
      %c4_i32_75 = arith.constant 4 : i32
      %200 = vector.broadcast %c4_i32_75 : i32 to vector<1x8xi32>
      %201 = arith.andi %42, %200 : vector<1x8xi32>
      %c0_i32_76 = arith.constant 0 : i32
      %202 = vector.broadcast %c0_i32_76 : i32 to vector<1x8xi32>
      %203 = arith.cmpi ne, %201, %202 : vector<1x8xi32>
      %204 = vector.shape_cast %203 : vector<1x8xi1> to vector<1x8xi1>
      %205 = vector.broadcast %204 : vector<1x8xi1> to vector<8x8xi1>
      %206 = arith.select %205, %199, %198 : vector<8x8xi1>, vector<8x8xf32>
      %cst_77 = arith.constant 0.000000e+00 : f32
      %207 = vector.broadcast %cst_77 : f32 to vector<8x8xf32>
      %208 = arith.select %45, %206, %207 : vector<8x8xi1>, vector<8x8xf32>
      %209 = vector.extract_strided_slice %138 {offsets = [1, 0], sizes = [1, 8], strides = [1, 1]} : vector<4x8xf32> to vector<1x8xf32>
      %210 = vector.broadcast %209 : vector<1x8xf32> to vector<8x8xf32>
      %211 = arith.mulf %208, %210 : vector<8x8xf32>
      %212 = vector.extract_strided_slice %139 {offsets = [0, 1], sizes = [8, 1], strides = [1, 1]} : vector<8x4xf32> to vector<8x1xf32>
      %213 = vector.broadcast %212 : vector<8x1xf32> to vector<8x8xf32>
      %214 = arith.mulf %211, %213 : vector<8x8xf32>
      %215 = arith.truncf %214 : vector<8x8xf32> to vector<8x8xbf16>
      %216 = vector.extract_strided_slice %136 {offsets = [0, 8], sizes = [8, 8], strides = [1, 1]} : vector<8x32xbf16> to vector<8x8xbf16>
      %cst_78 = arith.constant dense<0.000000e+00> : vector<8x8xf32>
      %217 = tpu.matmul %215, %216, %cst_78 {dimension_numbers = #tpu.dot_dimension_numbers<[1], [0], [0], [1], [0, 0, 1, 1], [], []>} : vector<8x8xbf16>, vector<8x8xbf16>, vector<8x8xf32> -> vector<8x8xf32>
      %218 = vector.extract_strided_slice %134 {offsets = [0, 8], sizes = [8, 8], strides = [1, 1]} : vector<8x32xf32> to vector<8x8xf32>
      %219 = arith.mulf %218, %217 : vector<8x8xf32>
      %220 = vector.extract_strided_slice %137 {offsets = [0, 2], sizes = [8, 1], strides = [1, 1]} : vector<8x4xf32> to vector<8x1xf32>
      %221 = vector.shape_cast %220 : vector<8x1xf32> to vector<8x1xf32>
      %222 = vector.broadcast %221 : vector<8x1xf32> to vector<8x8xf32>
      %c1_i32_79 = arith.constant 1 : i32
      %223 = tpu.dynamic_rotate %222 by %c1_i32_79 dim 0 : vector<8x8xf32>, i32 -> vector<8x8xf32>
      %c1_i32_80 = arith.constant 1 : i32
      %224 = vector.broadcast %c1_i32_80 : i32 to vector<1x8xi32>
      %225 = arith.andi %42, %224 : vector<1x8xi32>
      %c0_i32_81 = arith.constant 0 : i32
      %226 = vector.broadcast %c0_i32_81 : i32 to vector<1x8xi32>
      %227 = arith.cmpi ne, %225, %226 : vector<1x8xi32>
      %228 = vector.shape_cast %227 : vector<1x8xi1> to vector<1x8xi1>
      %229 = vector.broadcast %228 : vector<1x8xi1> to vector<8x8xi1>
      %230 = arith.select %229, %223, %222 : vector<8x8xi1>, vector<8x8xf32>
      %c2_i32_82 = arith.constant 2 : i32
      %231 = tpu.dynamic_rotate %230 by %c2_i32_82 dim 0 : vector<8x8xf32>, i32 -> vector<8x8xf32>
      %c2_i32_83 = arith.constant 2 : i32
      %232 = vector.broadcast %c2_i32_83 : i32 to vector<1x8xi32>
      %233 = arith.andi %42, %232 : vector<1x8xi32>
      %c0_i32_84 = arith.constant 0 : i32
      %234 = vector.broadcast %c0_i32_84 : i32 to vector<1x8xi32>
      %235 = arith.cmpi ne, %233, %234 : vector<1x8xi32>
      %236 = vector.shape_cast %235 : vector<1x8xi1> to vector<1x8xi1>
      %237 = vector.broadcast %236 : vector<1x8xi1> to vector<8x8xi1>
      %238 = arith.select %237, %231, %230 : vector<8x8xi1>, vector<8x8xf32>
      %c4_i32_85 = arith.constant 4 : i32
      %239 = tpu.dynamic_rotate %238 by %c4_i32_85 dim 0 : vector<8x8xf32>, i32 -> vector<8x8xf32>
      %c4_i32_86 = arith.constant 4 : i32
      %240 = vector.broadcast %c4_i32_86 : i32 to vector<1x8xi32>
      %241 = arith.andi %42, %240 : vector<1x8xi32>
      %c0_i32_87 = arith.constant 0 : i32
      %242 = vector.broadcast %c0_i32_87 : i32 to vector<1x8xi32>
      %243 = arith.cmpi ne, %241, %242 : vector<1x8xi32>
      %244 = vector.shape_cast %243 : vector<1x8xi1> to vector<1x8xi1>
      %245 = vector.broadcast %244 : vector<1x8xi1> to vector<8x8xi1>
      %246 = arith.select %245, %239, %238 : vector<8x8xi1>, vector<8x8xf32>
      %cst_88 = arith.constant 0.000000e+00 : f32
      %247 = vector.broadcast %cst_88 : f32 to vector<8x8xf32>
      %248 = arith.select %45, %246, %247 : vector<8x8xi1>, vector<8x8xf32>
      %249 = vector.extract_strided_slice %138 {offsets = [2, 0], sizes = [1, 8], strides = [1, 1]} : vector<4x8xf32> to vector<1x8xf32>
      %250 = vector.broadcast %249 : vector<1x8xf32> to vector<8x8xf32>
      %251 = arith.mulf %248, %250 : vector<8x8xf32>
      %252 = vector.extract_strided_slice %139 {offsets = [0, 2], sizes = [8, 1], strides = [1, 1]} : vector<8x4xf32> to vector<8x1xf32>
      %253 = vector.broadcast %252 : vector<8x1xf32> to vector<8x8xf32>
      %254 = arith.mulf %251, %253 : vector<8x8xf32>
      %255 = arith.truncf %254 : vector<8x8xf32> to vector<8x8xbf16>
      %256 = vector.extract_strided_slice %136 {offsets = [0, 16], sizes = [8, 8], strides = [1, 1]} : vector<8x32xbf16> to vector<8x8xbf16>
      %cst_89 = arith.constant dense<0.000000e+00> : vector<8x8xf32>
      %257 = tpu.matmul %255, %256, %cst_89 {dimension_numbers = #tpu.dot_dimension_numbers<[1], [0], [0], [1], [0, 0, 1, 1], [], []>} : vector<8x8xbf16>, vector<8x8xbf16>, vector<8x8xf32> -> vector<8x8xf32>
      %258 = vector.extract_strided_slice %134 {offsets = [0, 16], sizes = [8, 8], strides = [1, 1]} : vector<8x32xf32> to vector<8x8xf32>
      %259 = arith.mulf %258, %257 : vector<8x8xf32>
      %260 = vector.extract_strided_slice %137 {offsets = [0, 3], sizes = [8, 1], strides = [1, 1]} : vector<8x4xf32> to vector<8x1xf32>
      %261 = vector.shape_cast %260 : vector<8x1xf32> to vector<8x1xf32>
      %262 = vector.broadcast %261 : vector<8x1xf32> to vector<8x8xf32>
      %c1_i32_90 = arith.constant 1 : i32
      %263 = tpu.dynamic_rotate %262 by %c1_i32_90 dim 0 : vector<8x8xf32>, i32 -> vector<8x8xf32>
      %c1_i32_91 = arith.constant 1 : i32
      %264 = vector.broadcast %c1_i32_91 : i32 to vector<1x8xi32>
      %265 = arith.andi %42, %264 : vector<1x8xi32>
      %c0_i32_92 = arith.constant 0 : i32
      %266 = vector.broadcast %c0_i32_92 : i32 to vector<1x8xi32>
      %267 = arith.cmpi ne, %265, %266 : vector<1x8xi32>
      %268 = vector.shape_cast %267 : vector<1x8xi1> to vector<1x8xi1>
      %269 = vector.broadcast %268 : vector<1x8xi1> to vector<8x8xi1>
      %270 = arith.select %269, %263, %262 : vector<8x8xi1>, vector<8x8xf32>
      %c2_i32_93 = arith.constant 2 : i32
      %271 = tpu.dynamic_rotate %270 by %c2_i32_93 dim 0 : vector<8x8xf32>, i32 -> vector<8x8xf32>
      %c2_i32_94 = arith.constant 2 : i32
      %272 = vector.broadcast %c2_i32_94 : i32 to vector<1x8xi32>
      %273 = arith.andi %42, %272 : vector<1x8xi32>
      %c0_i32_95 = arith.constant 0 : i32
      %274 = vector.broadcast %c0_i32_95 : i32 to vector<1x8xi32>
      %275 = arith.cmpi ne, %273, %274 : vector<1x8xi32>
      %276 = vector.shape_cast %275 : vector<1x8xi1> to vector<1x8xi1>
      %277 = vector.broadcast %276 : vector<1x8xi1> to vector<8x8xi1>
      %278 = arith.select %277, %271, %270 : vector<8x8xi1>, vector<8x8xf32>
      %c4_i32_96 = arith.constant 4 : i32
      %279 = tpu.dynamic_rotate %278 by %c4_i32_96 dim 0 : vector<8x8xf32>, i32 -> vector<8x8xf32>
      %c4_i32_97 = arith.constant 4 : i32
      %280 = vector.broadcast %c4_i32_97 : i32 to vector<1x8xi32>
      %281 = arith.andi %42, %280 : vector<1x8xi32>
      %c0_i32_98 = arith.constant 0 : i32
      %282 = vector.broadcast %c0_i32_98 : i32 to vector<1x8xi32>
      %283 = arith.cmpi ne, %281, %282 : vector<1x8xi32>
      %284 = vector.shape_cast %283 : vector<1x8xi1> to vector<1x8xi1>
      %285 = vector.broadcast %284 : vector<1x8xi1> to vector<8x8xi1>
      %286 = arith.select %285, %279, %278 : vector<8x8xi1>, vector<8x8xf32>
      %cst_99 = arith.constant 0.000000e+00 : f32
      %287 = vector.broadcast %cst_99 : f32 to vector<8x8xf32>
      %288 = arith.select %45, %286, %287 : vector<8x8xi1>, vector<8x8xf32>
      %289 = vector.extract_strided_slice %138 {offsets = [3, 0], sizes = [1, 8], strides = [1, 1]} : vector<4x8xf32> to vector<1x8xf32>
      %290 = vector.broadcast %289 : vector<1x8xf32> to vector<8x8xf32>
      %291 = arith.mulf %288, %290 : vector<8x8xf32>
      %292 = vector.extract_strided_slice %139 {offsets = [0, 3], sizes = [8, 1], strides = [1, 1]} : vector<8x4xf32> to vector<8x1xf32>
      %293 = vector.broadcast %292 : vector<8x1xf32> to vector<8x8xf32>
      %294 = arith.mulf %291, %293 : vector<8x8xf32>
      %295 = arith.truncf %294 : vector<8x8xf32> to vector<8x8xbf16>
      %296 = vector.extract_strided_slice %136 {offsets = [0, 24], sizes = [8, 8], strides = [1, 1]} : vector<8x32xbf16> to vector<8x8xbf16>
      %cst_100 = arith.constant dense<0.000000e+00> : vector<8x8xf32>
      %297 = tpu.matmul %295, %296, %cst_100 {dimension_numbers = #tpu.dot_dimension_numbers<[1], [0], [0], [1], [0, 0, 1, 1], [], []>} : vector<8x8xbf16>, vector<8x8xbf16>, vector<8x8xf32> -> vector<8x8xf32>
      %298 = vector.extract_strided_slice %134 {offsets = [0, 24], sizes = [8, 8], strides = [1, 1]} : vector<8x32xf32> to vector<8x8xf32>
      %299 = arith.mulf %298, %297 : vector<8x8xf32>
      %300 = tpu.concatenate %179, %219, %259, %299 in 1 : vector<8x8xf32>, vector<8x8xf32>, vector<8x8xf32>, vector<8x8xf32> -> vector<8x32xf32>
      %301 = arith.truncf %300 : vector<8x32xf32> to vector<8x32xbf16>
      %c0_101 = arith.constant 0 : index
      %c0_102 = arith.constant 0 : index
      %302 = vector.load %arg12[%c0_101, %c0_102] : memref<32x32xbf16, #tpu.memory_space<vmem>>, vector<32x32xbf16>
      %cst_103 = arith.constant dense<0.000000e+00> : vector<8x32xf32>
      %303 = tpu.matmul %301, %302, %cst_103 {dimension_numbers = #tpu.dot_dimension_numbers<[1], [0], [0], [1], [0, 0, 1, 1], [], []>} : vector<8x32xbf16>, vector<32x32xbf16>, vector<8x32xf32> -> vector<8x32xf32>
      %c0_104 = arith.constant 0 : index
      %c0_105 = arith.constant 0 : index
      %304 = vector.load %arg13[%c0_104, %c0_105] : memref<1x32xf32, #tpu.memory_space<vmem>>, vector<1x32xf32>
      %305 = vector.broadcast %304 : vector<1x32xf32> to vector<8x32xf32>
      %306 = arith.addf %303, %305 : vector<8x32xf32>
      %c0_106 = arith.constant 0 : index
      %c0_107 = arith.constant 0 : index
      %307 = vector.load %arg14[%c0_106, %c0_107] : memref<8x1xf32, #tpu.memory_space<vmem>>, vector<8x1xf32>
      %308 = vector.broadcast %307 : vector<8x1xf32> to vector<8x32xf32>
      %309 = arith.mulf %306, %308 : vector<8x32xf32>
      %310 = arith.addf %47, %309 : vector<8x32xf32>
      %c0_108 = arith.constant 0 : index
      %c0_109 = arith.constant 0 : index
      %311 = vector.load %arg22[%c0_108, %c0_109] : memref<8x32xf32, #tpu.memory_space<vmem>>, vector<8x32xf32>
      tpu.vector_store %arg22[%c0_108, %c0_109], %310 {strides = array<i32>} : memref<8x32xf32, #tpu.memory_space<vmem>>, vector<8x32xf32>,
      %c0_110 = arith.constant 0 : index
      %c0_111 = arith.constant 0 : index
      %312 = vector.load %arg5[%c0_110, %c0_111] : memref<1x32xf32, #tpu.memory_space<vmem>>, vector<1x32xf32>
      %c0_112 = arith.constant 0 : index
      %c0_113 = arith.constant 0 : index
      %313 = vector.load %arg6[%c0_112, %c0_113] : memref<1x32xf32, #tpu.memory_space<vmem>>, vector<1x32xf32>
      %cst_114 = arith.constant dense<0.000000e+00> : vector<8xf32>
      %314 = vector.multi_reduction <add>, %310, %cst_114 [1] : vector<8x32xf32> to vector<8xf32>
      %315 = vector.shape_cast %314 : vector<8xf32> to vector<8x1xf32>
      %cst_115 = arith.constant 3.200000e+01 : f32
      %316 = vector.broadcast %cst_115 : f32 to vector<8x1xf32>
      %317 = arith.divf %315, %316 : vector<8x1xf32>
      %318 = vector.broadcast %317 : vector<8x1xf32> to vector<8x32xf32>
      %319 = arith.subf %310, %318 : vector<8x32xf32>
      %320 = arith.mulf %319, %319 : vector<8x32xf32>
      %cst_116 = arith.constant dense<0.000000e+00> : vector<8xf32>
      %321 = vector.multi_reduction <add>, %320, %cst_116 [1] : vector<8x32xf32> to vector<8xf32>
      %322 = vector.shape_cast %321 : vector<8xf32> to vector<8x1xf32>
      %cst_117 = arith.constant 3.200000e+01 : f32
      %323 = vector.broadcast %cst_117 : f32 to vector<8x1xf32>
      %324 = arith.divf %322, %323 : vector<8x1xf32>
      %325 = vector.broadcast %317 : vector<8x1xf32> to vector<8x32xf32>
      %326 = arith.subf %310, %325 : vector<8x32xf32>
      %cst_118 = arith.constant 9.99999974E-6 : f32
      %327 = vector.broadcast %cst_118 : f32 to vector<8x1xf32>
      %328 = arith.addf %324, %327 : vector<8x1xf32>
      %329 = math.rsqrt %328 : vector<8x1xf32>
      %330 = vector.broadcast %329 : vector<8x1xf32> to vector<8x32xf32>
      %331 = arith.mulf %326, %330 : vector<8x32xf32>
      %332 = vector.broadcast %312 : vector<1x32xf32> to vector<8x32xf32>
      %333 = arith.mulf %331, %332 : vector<8x32xf32>
      %334 = vector.broadcast %313 : vector<1x32xf32> to vector<8x32xf32>
      %335 = arith.addf %333, %334 : vector<8x32xf32>
      %c1_i32_119 = arith.constant 1 : i32
      %336 = tpu.dynamic_rotate %335 by %c1_i32_119 dim 0 : vector<8x32xf32>, i32 -> vector<8x32xf32>
      %c1_i32_120 = arith.constant 1 : i32
      %337 = vector.broadcast %c1_i32_120 : i32 to vector<8x1xi32>
      %338 = arith.cmpi sge, %40, %337 : vector<8x1xi32>
      %cst_121 = arith.constant 0.000000e+00 : f32
      %339 = vector.shape_cast %338 : vector<8x1xi1> to vector<8x1xi1>
      %340 = vector.broadcast %339 : vector<8x1xi1> to vector<8x32xi1>
      %341 = vector.broadcast %cst_121 : f32 to vector<8x32xf32>
      %342 = arith.select %340, %336, %341 : vector<8x32xi1>, vector<8x32xf32>
      %c16_i32_122 = arith.constant 16 : i32
      %343 = vector.broadcast %c16_i32_122 : i32 to vector<1x32xi32>
      %344 = arith.cmpi slt, %41, %343 : vector<1x32xi32>
      %345 = vector.shape_cast %344 : vector<1x32xi1> to vector<1x32xi1>
      %346 = vector.broadcast %345 : vector<1x32xi1> to vector<8x32xi1>
      %347 = arith.select %346, %342, %335 : vector<8x32xi1>, vector<8x32xf32>
      %348 = arith.truncf %347 : vector<8x32xf32> to vector<8x32xbf16>
      %c0_123 = arith.constant 0 : index
      %c0_124 = arith.constant 0 : index
      %349 = vector.load %arg23[%c0_123, %c0_124] : memref<8x32xbf16, #tpu.memory_space<vmem>>, vector<8x32xbf16>
      tpu.vector_store %arg23[%c0_123, %c0_124], %348 {strides = array<i32>} : memref<8x32xbf16, #tpu.memory_space<vmem>>, vector<8x32xbf16>,
      %350 = arith.truncf %347 : vector<8x32xf32> to vector<8x32xbf16>
      %c0_125 = arith.constant 0 : index
      %c0_126 = arith.constant 0 : index
      %351 = vector.load %arg19[%c0_125, %c0_126] : memref<32x32xbf16, #tpu.memory_space<vmem>>, vector<32x32xbf16>
      %cst_127 = arith.constant dense<0.000000e+00> : vector<8x32xf32>
      %352 = tpu.matmul %350, %351, %cst_127 {dimension_numbers = #tpu.dot_dimension_numbers<[1], [0], [0], [1], [0, 0, 1, 1], [], []>} : vector<8x32xbf16>, vector<32x32xbf16>, vector<8x32xf32> -> vector<8x32xf32>
      %c0_128 = arith.constant 0 : index
      %c0_129 = arith.constant 0 : index
      %353 = vector.load %arg20[%c0_128, %c0_129] : memref<1x32xf32, #tpu.memory_space<vmem>>, vector<1x32xf32>
      %354 = vector.broadcast %353 : vector<1x32xf32> to vector<8x32xf32>
      %355 = arith.addf %352, %354 : vector<8x32xf32>
      %356 = arith.negf %355 : vector<8x32xf32>
      %357 = math.exp %356 : vector<8x32xf32>
      %cst_130 = arith.constant 1.000000e+00 : f32
      %358 = vector.broadcast %cst_130 : f32 to vector<8x32xf32>
      %359 = arith.addf %358, %357 : vector<8x32xf32>
      %360 = arith.divf %358, %359 : vector<8x32xf32>
      %c0_131 = arith.constant 0 : index
      %c0_132 = arith.constant 0 : index
      %361 = vector.load %arg24[%c0_131, %c0_132] : memref<8x32xf32, #tpu.memory_space<vmem>>, vector<8x32xf32>
      tpu.vector_store %arg24[%c0_131, %c0_132], %360 {strides = array<i32>} : memref<8x32xf32, #tpu.memory_space<vmem>>, vector<8x32xf32>,
      %cst_133 = arith.constant 0.000000e+00 : f32
      %362 = vector.broadcast %cst_133 : f32 to vector<8x32xf32>
      %c0_134 = arith.constant 0 : index
      %c0_135 = arith.constant 0 : index
      %363 = vector.load %arg25[%c0_134, %c0_135] : memref<8x32xf32, #tpu.memory_space<vmem>>, vector<8x32xf32>
      tpu.vector_store %arg25[%c0_134, %c0_135], %362 {strides = array<i32>} : memref<8x32xf32, #tpu.memory_space<vmem>>, vector<8x32xf32>,
    } else {
    }
    %c0 = arith.constant 0 : index
    %c0_1 = arith.constant 0 : index
    %3 = vector.load %arg23[%c0, %c0_1] : memref<8x32xbf16, #tpu.memory_space<vmem>>, vector<8x32xbf16>
    %c0_2 = arith.constant 0 : index
    %c0_3 = arith.constant 0 : index
    %c0_4 = arith.constant 0 : index
    %4 = vector.load %arg15[%c0_2, %c0_3, %c0_4] : memref<1x32x160xbf16, #tpu.memory_space<vmem>>, vector<1x32x160xbf16>
    %5 = vector.shape_cast %4 : vector<1x32x160xbf16> to vector<32x160xbf16>
    %cst = arith.constant dense<0.000000e+00> : vector<8x160xf32>
    %6 = tpu.matmul %3, %5, %cst {dimension_numbers = #tpu.dot_dimension_numbers<[1], [0], [0], [1], [0, 0, 1, 1], [], []>} : vector<8x32xbf16>, vector<32x160xbf16>, vector<8x160xf32> -> vector<8x160xf32>
    %c0_5 = arith.constant 0 : index
    %c0_6 = arith.constant 0 : index
    %c0_7 = arith.constant 0 : index
    %7 = vector.load %arg16[%c0_5, %c0_6, %c0_7] : memref<1x1x160xf32, #tpu.memory_space<vmem>>, vector<1x1x160xf32>
    %8 = vector.shape_cast %7 : vector<1x1x160xf32> to vector<1x160xf32>
    %9 = vector.broadcast %8 : vector<1x160xf32> to vector<8x160xf32>
    %10 = arith.addf %6, %9 : vector<8x160xf32>
    %11 = vector.extract_strided_slice %10 {offsets = [0, 0], sizes = [8, 80], strides = [1, 1]} : vector<8x160xf32> to vector<8x80xf32>
    %12 = vector.extract_strided_slice %10 {offsets = [0, 80], sizes = [8, 80], strides = [1, 1]} : vector<8x160xf32> to vector<8x80xf32>
    %c0_8 = arith.constant 0 : index
    %c0_9 = arith.constant 0 : index
    %13 = vector.load %arg25[%c0_8, %c0_9] : memref<8x32xf32, #tpu.memory_space<vmem>>, vector<8x32xf32>
    %cst_10 = arith.constant 0.000000e+00 : f32
    %14 = vector.broadcast %cst_10 : f32 to vector<8x80xf32>
    %15 = arith.maximumf %11, %14 : vector<8x80xf32>
    %16 = vector.broadcast %cst_10 : f32 to vector<8x80xf32>
    %17 = arith.subf %11, %16 : vector<8x80xf32>
    %18 = arith.cmpf one, %17, %17 : vector<8x80xf32>
    %19 = vector.broadcast %cst_10 : f32 to vector<8x80xf32>
    %20 = arith.addf %11, %19 : vector<8x80xf32>
    %21 = math.absf %17 : vector<8x80xf32>
    %cst_11 = arith.constant 0.000000e+00 : f32
    %22 = vector.broadcast %cst_11 : f32 to vector<8x80xf32>
    %23 = arith.subf %22, %21 : vector<8x80xf32>
    %24 = math.exp %23 : vector<8x80xf32>
    %25 = math.log1p %24 : vector<8x80xf32>
    %26 = arith.addf %15, %25 : vector<8x80xf32>
    %27 = arith.select %18, %20, %26 : vector<8x80xi1>, vector<8x80xf32>
    %28 = math.tanh %27 : vector<8x80xf32>
    %29 = arith.mulf %11, %28 : vector<8x80xf32>
    %30 = arith.mulf %29, %12 : vector<8x80xf32>
    %31 = arith.truncf %30 : vector<8x80xf32> to vector<8x80xbf16>
    %c0_12 = arith.constant 0 : index
    %c0_13 = arith.constant 0 : index
    %c0_14 = arith.constant 0 : index
    %32 = vector.load %arg17[%c0_12, %c0_13, %c0_14] : memref<1x80x32xbf16, #tpu.memory_space<vmem>>, vector<1x80x32xbf16>
    %33 = vector.shape_cast %32 : vector<1x80x32xbf16> to vector<80x32xbf16>
    %cst_15 = arith.constant dense<0.000000e+00> : vector<8x32xf32>
    %34 = tpu.matmul %31, %33, %cst_15 {dimension_numbers = #tpu.dot_dimension_numbers<[1], [0], [0], [1], [0, 0, 1, 1], [], []>} : vector<8x80xbf16>, vector<80x32xbf16>, vector<8x32xf32> -> vector<8x32xf32>
    %35 = arith.addf %13, %34 : vector<8x32xf32>
    %c0_16 = arith.constant 0 : index
    %c0_17 = arith.constant 0 : index
    %36 = vector.load %arg25[%c0_16, %c0_17] : memref<8x32xf32, #tpu.memory_space<vmem>>, vector<8x32xf32>
    tpu.vector_store %arg25[%c0_16, %c0_17], %35 {strides = array<i32>} : memref<8x32xf32, #tpu.memory_space<vmem>>, vector<8x32xf32>,
    %c0_i32_18 = arith.constant 0 : i32
    %37 = arith.cmpi eq, %arg1, %c0_i32_18 : i32
    %38 = arith.extui %37 : i1 to i32
    %c0_i32_19 = arith.constant 0 : i32
    %39 = arith.cmpi ne, %38, %c0_i32_19 : i32
    scf.if %39 {
      %c0_20 = arith.constant 0 : index
      %c0_21 = arith.constant 0 : index
      %40 = vector.load %arg22[%c0_20, %c0_21] : memref<8x32xf32, #tpu.memory_space<vmem>>, vector<8x32xf32>
      %c0_22 = arith.constant 0 : index
      %c0_23 = arith.constant 0 : index
      %41 = vector.load %arg24[%c0_22, %c0_23] : memref<8x32xf32, #tpu.memory_space<vmem>>, vector<8x32xf32>
      %c0_24 = arith.constant 0 : index
      %c0_25 = arith.constant 0 : index
      %42 = vector.load %arg25[%c0_24, %c0_25] : memref<8x32xf32, #tpu.memory_space<vmem>>, vector<8x32xf32>
      %c0_26 = arith.constant 0 : index
      %c0_27 = arith.constant 0 : index
      %43 = vector.load %arg18[%c0_26, %c0_27] : memref<1x32xf32, #tpu.memory_space<vmem>>, vector<1x32xf32>
      %44 = vector.broadcast %43 : vector<1x32xf32> to vector<8x32xf32>
      %45 = arith.addf %42, %44 : vector<8x32xf32>
      %46 = arith.mulf %41, %45 : vector<8x32xf32>
      %47 = arith.addf %40, %46 : vector<8x32xf32>
      %c0_28 = arith.constant 0 : index
      %c0_29 = arith.constant 0 : index
      %c0_30 = arith.constant 0 : index
      %48 = vector.load %arg21[%c0_28, %c0_29, %c0_30] : memref<1x8x32xf32, #tpu.memory_space<vmem>>, vector<1x8x32xf32>
      %49 = vector.shape_cast %48 : vector<1x8x32xf32> to vector<8x32xf32>
      %50 = vector.shape_cast %47 : vector<8x32xf32> to vector<1x8x32xf32>
      tpu.vector_store %arg21[%c0_28, %c0_29, %c0_30], %50 {strides = array<i32>} : memref<1x8x32xf32, #tpu.memory_space<vmem>>, vector<1x8x32xf32>,
    } else {
    }
    return
  }
  func.func @transform_0(%arg0: i32, %arg1: i32) -> (i32, i32, i32) {
    %c0_i32 = arith.constant 0 : i32
    %c0_i32_0 = arith.constant 0 : i32
    %c0_i32_1 = arith.constant 0 : i32
    return %arg0, %c0_i32, %c0_i32_0 : i32, i32, i32
  }
  func.func @transform_1(%arg0: i32, %arg1: i32) -> (i32, i32) {
    %c0_i32 = arith.constant 0 : i32
    %c0_i32_0 = arith.constant 0 : i32
    %c0_i32_1 = arith.constant 0 : i32
    return %c0_i32, %c0_i32_0 : i32, i32
  }
  func.func @transform_2(%arg0: i32, %arg1: i32) -> (i32, i32) {
    %c0_i32 = arith.constant 0 : i32
    %c0_i32_0 = arith.constant 0 : i32
    %c0_i32_1 = arith.constant 0 : i32
    return %c0_i32, %c0_i32_0 : i32, i32
  }
  func.func @transform_3(%arg0: i32, %arg1: i32) -> (i32, i32) {
    %c0_i32 = arith.constant 0 : i32
    %c0_i32_0 = arith.constant 0 : i32
    %c0_i32_1 = arith.constant 0 : i32
    return %c0_i32, %c0_i32_0 : i32, i32
  }
  func.func @transform_4(%arg0: i32, %arg1: i32) -> (i32, i32) {
    %c0_i32 = arith.constant 0 : i32
    %c0_i32_0 = arith.constant 0 : i32
    %c0_i32_1 = arith.constant 0 : i32
    return %c0_i32, %c0_i32_0 : i32, i32
  }
  func.func @transform_5(%arg0: i32, %arg1: i32) -> (i32, i32) {
    %c0_i32 = arith.constant 0 : i32
    %c0_i32_0 = arith.constant 0 : i32
    %c0_i32_1 = arith.constant 0 : i32
    return %c0_i32, %c0_i32_0 : i32, i32
  }
  func.func @transform_6(%arg0: i32, %arg1: i32) -> (i32, i32) {
    %c0_i32 = arith.constant 0 : i32
    %c0_i32_0 = arith.constant 0 : i32
    %c0_i32_1 = arith.constant 0 : i32
    return %c0_i32, %c0_i32_0 : i32, i32
  }
  func.func @transform_7(%arg0: i32, %arg1: i32) -> (i32, i32) {
    %c0_i32 = arith.constant 0 : i32
    %c0_i32_0 = arith.constant 0 : i32
    %c0_i32_1 = arith.constant 0 : i32
    return %c0_i32, %c0_i32_0 : i32, i32
  }
  func.func @transform_8(%arg0: i32, %arg1: i32) -> (i32, i32) {
    %c0_i32 = arith.constant 0 : i32
    %c0_i32_0 = arith.constant 0 : i32
    %c0_i32_1 = arith.constant 0 : i32
    return %c0_i32, %c0_i32_0 : i32, i32
  }
  func.func @transform_9(%arg0: i32, %arg1: i32) -> (i32, i32) {
    %c0_i32 = arith.constant 0 : i32
    %c0_i32_0 = arith.constant 0 : i32
    %c0_i32_1 = arith.constant 0 : i32
    return %c0_i32, %c0_i32_0 : i32, i32
  }
  func.func @transform_10(%arg0: i32, %arg1: i32) -> (i32, i32) {
    %c0_i32 = arith.constant 0 : i32
    %c0_i32_0 = arith.constant 0 : i32
    %c0_i32_1 = arith.constant 0 : i32
    return %c0_i32, %c0_i32_0 : i32, i32
  }
  func.func @transform_11(%arg0: i32, %arg1: i32) -> (i32, i32) {
    %c0_i32 = arith.constant 0 : i32
    %c0_i32_0 = arith.constant 0 : i32
    %c0_i32_1 = arith.constant 0 : i32
    return %c0_i32, %c0_i32_0 : i32, i32
  }
  func.func @transform_12(%arg0: i32, %arg1: i32) -> (i32, i32) {
    %c0_i32 = arith.constant 0 : i32
    %c0_i32_0 = arith.constant 0 : i32
    %c0_i32_1 = arith.constant 0 : i32
    return %c0_i32, %c0_i32_0 : i32, i32
  }
  func.func @transform_13(%arg0: i32, %arg1: i32) -> (i32, i32, i32) {
    %c0_i32 = arith.constant 0 : i32
    %c0_i32_0 = arith.constant 0 : i32
    %c0_i32_1 = arith.constant 0 : i32
    return %arg1, %c0_i32, %c0_i32_0 : i32, i32, i32
  }
  func.func @transform_14(%arg0: i32, %arg1: i32) -> (i32, i32, i32) {
    %c0_i32 = arith.constant 0 : i32
    %c0_i32_0 = arith.constant 0 : i32
    %c0_i32_1 = arith.constant 0 : i32
    return %arg1, %c0_i32, %c0_i32_0 : i32, i32, i32
  }
  func.func @transform_15(%arg0: i32, %arg1: i32) -> (i32, i32, i32) {
    %c0_i32 = arith.constant 0 : i32
    %c0_i32_0 = arith.constant 0 : i32
    %c0_i32_1 = arith.constant 0 : i32
    return %arg1, %c0_i32, %c0_i32_0 : i32, i32, i32
  }
  func.func @transform_16(%arg0: i32, %arg1: i32) -> (i32, i32) {
    %c0_i32 = arith.constant 0 : i32
    %c0_i32_0 = arith.constant 0 : i32
    %c0_i32_1 = arith.constant 0 : i32
    return %c0_i32, %c0_i32_0 : i32, i32
  }
  func.func @transform_17(%arg0: i32, %arg1: i32) -> (i32, i32) {
    %c0_i32 = arith.constant 0 : i32
    %c0_i32_0 = arith.constant 0 : i32
    %c0_i32_1 = arith.constant 0 : i32
    return %c0_i32, %c0_i32_0 : i32, i32
  }
  func.func @transform_18(%arg0: i32, %arg1: i32) -> (i32, i32) {
    %c0_i32 = arith.constant 0 : i32
    %c0_i32_0 = arith.constant 0 : i32
    %c0_i32_1 = arith.constant 0 : i32
    return %c0_i32, %c0_i32_0 : i32, i32
  }
  func.func @transform_19(%arg0: i32, %arg1: i32) -> (i32, i32, i32) {
    %c0_i32 = arith.constant 0 : i32
    %c0_i32_0 = arith.constant 0 : i32
    %c0_i32_1 = arith.constant 0 : i32
    return %arg0, %c0_i32, %c0_i32_0 : i32, i32, i32
  }
}

module attributes {stable_mosaic.version = 11 : i64} {
  func.func @layer_kernel(%arg0: i32, %arg1: i32, %arg2: memref<1x8x32xf32, #tpu.memory_space<vmem>>, %arg3: memref<1x32xf32, #tpu.memory_space<vmem>>, %arg4: memref<1x32xf32, #tpu.memory_space<vmem>>, %arg5: memref<1x32xf32, #tpu.memory_space<vmem>>, %arg6: memref<1x32xf32, #tpu.memory_space<vmem>>, %arg7: memref<32x96xbf16, #tpu.memory_space<vmem>>, %arg8: memref<1x96xf32, #tpu.memory_space<vmem>>, %arg9: memref<8x4xf32, #tpu.memory_space<vmem>>, %arg10: memref<4x8xf32, #tpu.memory_space<vmem>>, %arg11: memref<8x4xf32, #tpu.memory_space<vmem>>, %arg12: memref<32x32xbf16, #tpu.memory_space<vmem>>, %arg13: memref<1x32xf32, #tpu.memory_space<vmem>>, %arg14: memref<8x1xf32, #tpu.memory_space<vmem>>, %arg15: memref<1x32x160xbf16, #tpu.memory_space<vmem>>, %arg16: memref<1x1x160xf32, #tpu.memory_space<vmem>>, %arg17: memref<1x80x32xbf16, #tpu.memory_space<vmem>>, %arg18: memref<1x32xf32, #tpu.memory_space<vmem>>, %arg19: memref<32x32xbf16, #tpu.memory_space<vmem>>, %arg20: memref<1x32xf32, #tpu.memory_space<vmem>>, %arg21: memref<1x8x32xf32, #tpu.memory_space<vmem>>, %arg22: memref<8x32xf32, #tpu.memory_space<vmem>>, %arg23: memref<8x32xbf16, #tpu.memory_space<vmem>>, %arg24: memref<8x32xf32, #tpu.memory_space<vmem>>, %arg25: memref<8x32xf32, #tpu.memory_space<vmem>>) attributes {dimension_semantics = [#tpu.dimension_semantics<parallel>, #tpu.dimension_semantics<arbitrary>], iteration_bounds = array<i64: 2, 1>, scalar_prefetch = 0 : i64, scratch_operands = 4 : i64, tpu.core_type = #tpu.core_type<tc>, window_params = [{transform_indices = @transform_0, window_bounds = array<i64: 1, 8, 32>}, {pipeline_mode = #tpu.pipeline_mode<synchronous>, transform_indices = @transform_1, window_bounds = array<i64: 1, 32>}, {pipeline_mode = #tpu.pipeline_mode<synchronous>, transform_indices = @transform_2, window_bounds = array<i64: 1, 32>}, {pipeline_mode = #tpu.pipeline_mode<synchronous>, transform_indices = @transform_3, window_bounds = array<i64: 1, 32>}, {pipeline_mode = #tpu.pipeline_mode<synchronous>, transform_indices = @transform_4, window_bounds = array<i64: 1, 32>}, {pipeline_mode = #tpu.pipeline_mode<synchronous>, transform_indices = @transform_5, window_bounds = array<i64: 32, 96>}, {pipeline_mode = #tpu.pipeline_mode<synchronous>, transform_indices = @transform_6, window_bounds = array<i64: 1, 96>}, {pipeline_mode = #tpu.pipeline_mode<synchronous>, transform_indices = @transform_7, window_bounds = array<i64: 8, 4>}, {pipeline_mode = #tpu.pipeline_mode<synchronous>, transform_indices = @transform_8, window_bounds = array<i64: 4, 8>}, {pipeline_mode = #tpu.pipeline_mode<synchronous>, transform_indices = @transform_9, window_bounds = array<i64: 8, 4>}, {pipeline_mode = #tpu.pipeline_mode<synchronous>, transform_indices = @transform_10, window_bounds = array<i64: 32, 32>}, {pipeline_mode = #tpu.pipeline_mode<synchronous>, transform_indices = @transform_11, window_bounds = array<i64: 1, 32>}, {pipeline_mode = #tpu.pipeline_mode<synchronous>, transform_indices = @transform_12, window_bounds = array<i64: 8, 1>}, {transform_indices = @transform_13, window_bounds = array<i64: 1, 32, 160>}, {transform_indices = @transform_14, window_bounds = array<i64: 1, 1, 160>}, {transform_indices = @transform_15, window_bounds = array<i64: 1, 80, 32>}, {pipeline_mode = #tpu.pipeline_mode<synchronous>, transform_indices = @transform_16, window_bounds = array<i64: 1, 32>}, {pipeline_mode = #tpu.pipeline_mode<synchronous>, transform_indices = @transform_17, window_bounds = array<i64: 32, 32>}, {pipeline_mode = #tpu.pipeline_mode<synchronous>, transform_indices = @transform_18, window_bounds = array<i64: 1, 32>}, {transform_indices = @transform_19, window_bounds = array<i64: 1, 8, 32>}]} {
    %c0_i32 = arith.constant 0 : i32
    %0 = arith.cmpi eq, %arg1, %c0_i32 : i32
    %1 = arith.extui %0 : i1 to i32
    %c0_i32_0 = arith.constant 0 : i32
    %2 = arith.cmpi ne, %1, %c0_i32_0 : i32
    scf.if %2 {
      %40 = tpu.iota {dimensions = array<i32: 0>} : vector<8x1xi32>
      %41 = tpu.iota {dimensions = array<i32: 1>} : vector<1x32xi32>
      %42 = tpu.iota {dimensions = array<i32: 1>} : vector<1x8xi32>
      %43 = vector.broadcast %40 : vector<8x1xi32> to vector<8x8xi32>
      %44 = vector.broadcast %42 : vector<1x8xi32> to vector<8x8xi32>
      %45 = arith.cmpi sge, %43, %44 : vector<8x8xi32>
      %c0_20 = arith.constant 0 : index
      %c0_21 = arith.constant 0 : index
      %c0_22 = arith.constant 0 : index
      %46 = vector.load %arg2[%c0_20, %c0_21, %c0_22] : memref<1x8x32xf32, #tpu.memory_space<vmem>>, vector<1x8x32xf32>
      %47 = vector.shape_cast %46 : vector<1x8x32xf32> to vector<8x32xf32>
      %c0_23 = arith.constant 0 : index
      %c0_24 = arith.constant 0 : index
      %48 = vector.load %arg3[%c0_23, %c0_24] : memref<1x32xf32, #tpu.memory_space<vmem>>, vector<1x32xf32>
      %c0_25 = arith.constant 0 : index
      %c0_26 = arith.constant 0 : index
      %49 = vector.load %arg4[%c0_25, %c0_26] : memref<1x32xf32, #tpu.memory_space<vmem>>, vector<1x32xf32>
      %cst_27 = arith.constant dense<0.000000e+00> : vector<8xf32>
      %50 = vector.multi_reduction <add>, %47, %cst_27 [1] : vector<8x32xf32> to vector<8xf32>
      %51 = vector.shape_cast %50 : vector<8xf32> to vector<8x1xf32>
      %cst_28 = arith.constant 3.200000e+01 : f32
      %52 = vector.broadcast %cst_28 : f32 to vector<8x1xf32>
      %53 = arith.divf %51, %52 : vector<8x1xf32>
      %54 = vector.broadcast %53 : vector<8x1xf32> to vector<8x32xf32>
      %55 = arith.subf %47, %54 : vector<8x32xf32>
      %56 = arith.mulf %55, %55 : vector<8x32xf32>
      %cst_29 = arith.constant dense<0.000000e+00> : vector<8xf32>
      %57 = vector.multi_reduction <add>, %56, %cst_29 [1] : vector<8x32xf32> to vector<8xf32>
      %58 = vector.shape_cast %57 : vector<8xf32> to vector<8x1xf32>
      %cst_30 = arith.constant 3.200000e+01 : f32
      %59 = vector.broadcast %cst_30 : f32 to vector<8x1xf32>
      %60 = arith.divf %58, %59 : vector<8x1xf32>
      %61 = vector.broadcast %53 : vector<8x1xf32> to vector<8x32xf32>
      %62 = arith.subf %47, %61 : vector<8x32xf32>
      %cst_31 = arith.constant 9.99999974E-6 : f32
      %63 = vector.broadcast %cst_31 : f32 to vector<8x1xf32>
      %64 = arith.addf %60, %63 : vector<8x1xf32>
      %65 = math.rsqrt %64 : vector<8x1xf32>
      %66 = vector.broadcast %65 : vector<8x1xf32> to vector<8x32xf32>
      %67 = arith.mulf %62, %66 : vector<8x32xf32>
      %68 = vector.broadcast %48 : vector<1x32xf32> to vector<8x32xf32>
      %69 = arith.mulf %67, %68 : vector<8x32xf32>
      %70 = vector.broadcast %49 : vector<1x32xf32> to vector<8x32xf32>
      %71 = arith.addf %69, %70 : vector<8x32xf32>
      %c1_i32 = arith.constant 1 : i32
      %72 = tpu.dynamic_rotate %71 by %c1_i32 dim 0 : vector<8x32xf32>, i32 -> vector<8x32xf32>
      %c1_i32_32 = arith.constant 1 : i32
      %73 = vector.broadcast %c1_i32_32 : i32 to vector<8x1xi32>
      %74 = arith.cmpi sge, %40, %73 : vector<8x1xi32>
      %cst_33 = arith.constant 0.000000e+00 : f32
      %75 = vector.shape_cast %74 : vector<8x1xi1> to vector<8x1xi1>
      %76 = vector.broadcast %75 : vector<8x1xi1> to vector<8x32xi1>
      %77 = vector.broadcast %cst_33 : f32 to vector<8x32xf32>
      %78 = arith.select %76, %72, %77 : vector<8x32xi1>, vector<8x32xf32>
      %c16_i32 = arith.constant 16 : i32
      %79 = vector.broadcast %c16_i32 : i32 to vector<1x32xi32>
      %80 = arith.cmpi slt, %41, %79 : vector<1x32xi32>
      %81 = vector.shape_cast %80 : vector<1x32xi1> to vector<1x32xi1>
      %82 = vector.broadcast %81 : vector<1x32xi1> to vector<8x32xi1>
      %83 = arith.select %82, %78, %71 : vector<8x32xi1>, vector<8x32xf32>
      %84 = arith.truncf %83 : vector<8x32xf32> to vector<8x32xbf16>
      %c0_34 = arith.constant 0 : index
      %c0_35 = arith.constant 0 : index
      %85 = vector.load %arg7[%c0_34, %c0_35] : memref<32x96xbf16, #tpu.memory_space<vmem>>, vector<32x96xbf16>
      %cst_36 = arith.constant dense<0.000000e+00> : vector<8x96xf32>
      %86 = tpu.matmul %84, %85, %cst_36 {dimension_numbers = #tpu.dot_dimension_numbers<[1], [0], [0], [1], [0, 0, 1, 1], [], []>} : vector<8x32xbf16>, vector<32x96xbf16>, vector<8x96xf32> -> vector<8x96xf32>
      %c0_37 = arith.constant 0 : index
      %c0_38 = arith.constant 0 : index
      %87 = vector.load %arg8[%c0_37, %c0_38] : memref<1x96xf32, #tpu.memory_space<vmem>>, vector<1x96xf32>
      %88 = vector.broadcast %87 : vector<1x96xf32> to vector<8x96xf32>
      %89 = arith.addf %86, %88 : vector<8x96xf32>
      %90 = vector.extract_strided_slice %89 {offsets = [0, 0], sizes = [8, 32], strides = [1, 1]} : vector<8x96xf32> to vector<8x32xf32>
      %cst_39 = arith.constant -6.000000e+01 : f32
      %cst_40 = arith.constant 3.000000e+01 : f32
      %91 = vector.broadcast %cst_39 : f32 to vector<8x32xf32>
      %92 = arith.maximumf %91, %90 : vector<8x32xf32>
      %93 = vector.broadcast %cst_40 : f32 to vector<8x32xf32>
      %94 = arith.minimumf %93, %92 : vector<8x32xf32>
      %cst_41 = arith.constant dense<0xFF800000> : vector<32xf32>
      %95 = vector.multi_reduction <maximumf>, %94, %cst_41 [0] : vector<8x32xf32> to vector<32xf32>
      %96 = vector.shape_cast %95 : vector<32xf32> to vector<1x32xf32>
      %cst_42 = arith.constant 2.000000e+01 : f32
      %97 = vector.broadcast %cst_42 : f32 to vector<1x32xf32>
      %98 = arith.minimumf %96, %97 : vector<1x32xf32>
      %99 = vector.broadcast %98 : vector<1x32xf32> to vector<8x32xf32>
      %100 = arith.subf %94, %99 : vector<8x32xf32>
      %101 = math.exp %100 : vector<8x32xf32>
      %102 = vector.extract_strided_slice %89 {offsets = [0, 32], sizes = [8, 32], strides = [1, 1]} : vector<8x96xf32> to vector<8x32xf32>
      %103 = vector.extract_strided_slice %89 {offsets = [0, 64], sizes = [8, 32], strides = [1, 1]} : vector<8x96xf32> to vector<8x32xf32>
      %c1_i32_43 = arith.constant 1 : i32
      %104 = vector.broadcast %c1_i32_43 : i32 to vector<8x1xi32>
      %105 = arith.cmpi sge, %40, %104 : vector<8x1xi32>
      %c1_i32_44 = arith.constant 1 : i32
      %106 = tpu.dynamic_rotate %101 by %c1_i32_44 dim 0 : vector<8x32xf32>, i32 -> vector<8x32xf32>
      %cst_45 = arith.constant 0.000000e+00 : f32
      %107 = vector.shape_cast %105 : vector<8x1xi1> to vector<8x1xi1>
      %108 = vector.broadcast %107 : vector<8x1xi1> to vector<8x32xi1>
      %109 = vector.broadcast %cst_45 : f32 to vector<8x32xf32>
      %110 = arith.select %108, %106, %109 : vector<8x32xi1>, vector<8x32xf32>
      %111 = arith.addf %101, %110 : vector<8x32xf32>
      %c2_i32 = arith.constant 2 : i32
      %112 = vector.broadcast %c2_i32 : i32 to vector<8x1xi32>
      %113 = arith.cmpi sge, %40, %112 : vector<8x1xi32>
      %c2_i32_46 = arith.constant 2 : i32
      %114 = tpu.dynamic_rotate %111 by %c2_i32_46 dim 0 : vector<8x32xf32>, i32 -> vector<8x32xf32>
      %cst_47 = arith.constant 0.000000e+00 : f32
      %115 = vector.shape_cast %113 : vector<8x1xi1> to vector<8x1xi1>
      %116 = vector.broadcast %115 : vector<8x1xi1> to vector<8x32xi1>
      %117 = vector.broadcast %cst_47 : f32 to vector<8x32xf32>
      %118 = arith.select %116, %114, %117 : vector<8x32xi1>, vector<8x32xf32>
      %119 = arith.addf %111, %118 : vector<8x32xf32>
      %c4_i32 = arith.constant 4 : i32
      %120 = vector.broadcast %c4_i32 : i32 to vector<8x1xi32>
      %121 = arith.cmpi sge, %40, %120 : vector<8x1xi32>
      %c4_i32_48 = arith.constant 4 : i32
      %122 = tpu.dynamic_rotate %119 by %c4_i32_48 dim 0 : vector<8x32xf32>, i32 -> vector<8x32xf32>
      %cst_49 = arith.constant 0.000000e+00 : f32
      %123 = vector.shape_cast %121 : vector<8x1xi1> to vector<8x1xi1>
      %124 = vector.broadcast %123 : vector<8x1xi1> to vector<8x32xi1>
      %125 = vector.broadcast %cst_49 : f32 to vector<8x32xf32>
      %126 = arith.select %124, %122, %125 : vector<8x32xi1>, vector<8x32xf32>
      %127 = arith.addf %119, %126 : vector<8x32xf32>
      %128 = arith.negf %103 : vector<8x32xf32>
      %129 = math.exp %128 : vector<8x32xf32>
      %cst_50 = arith.constant 1.000000e+00 : f32
      %130 = vector.broadcast %cst_50 : f32 to vector<8x32xf32>
      %131 = arith.addf %130, %129 : vector<8x32xf32>
      %132 = arith.divf %130, %131 : vector<8x32xf32>
      %133 = tpu.reciprocal %127 {approx = true} : vector<8x32xf32> -> vector<8x32xf32>
      %134 = arith.mulf %132, %133 : vector<8x32xf32>
      %135 = arith.mulf %101, %102 : vector<8x32xf32>
      %136 = arith.truncf %135 : vector<8x32xf32> to vector<8x32xbf16>
      %c0_51 = arith.constant 0 : index
      %c0_52 = arith.constant 0 : index
      %137 = vector.load %arg9[%c0_51, %c0_52] : memref<8x4xf32, #tpu.memory_space<vmem>>, vector<8x4xf32>
      %c0_53 = arith.constant 0 : index
      %c0_54 = arith.constant 0 : index
      %138 = vector.load %arg10[%c0_53, %c0_54] : memref<4x8xf32, #tpu.memory_space<vmem>>, vector<4x8xf32>
      %c0_55 = arith.constant 0 : index
      %c0_56 = arith.constant 0 : index
      %139 = vector.load %arg11[%c0_55, %c0_56] : memref<8x4xf32, #tpu.memory_space<vmem>>, vector<8x4xf32>
      %140 = vector.extract_strided_slice %137 {offsets = [0, 0], sizes = [8, 1], strides = [1, 1]} : vector<8x4xf32> to vector<8x1xf32>
      %141 = vector.shape_cast %140 : vector<8x1xf32> to vector<8x1xf32>
      %142 = vector.broadcast %141 : vector<8x1xf32> to vector<8x8xf32>
      %c1_i32_57 = arith.constant 1 : i32
      %143 = tpu.dynamic_rotate %142 by %c1_i32_57 dim 0 : vector<8x8xf32>, i32 -> vector<8x8xf32>
      %c1_i32_58 = arith.constant 1 : i32
      %144 = vector.broadcast %c1_i32_58 : i32 to vector<1x8xi32>
      %145 = arith.andi %42, %144 : vector<1x8xi32>
      %c0_i32_59 = arith.constant 0 : i32
      %146 = vector.broadcast %c0_i32_59 : i32 to vector<1x8xi32>
      %147 = arith.cmpi ne, %145, %146 : vector<1x8xi32>
      %148 = vector.shape_cast %147 : vector<1x8xi1> to vector<1x8xi1>
      %149 = vector.broadcast %148 : vector<1x8xi1> to vector<8x8xi1>
      %150 = arith.select %149, %143, %142 : vector<8x8xi1>, vector<8x8xf32>
      %c2_i32_60 = arith.constant 2 : i32
      %151 = tpu.dynamic_rotate %150 by %c2_i32_60 dim 0 : vector<8x8xf32>, i32 -> vector<8x8xf32>
      %c2_i32_61 = arith.constant 2 : i32
      %152 = vector.broadcast %c2_i32_61 : i32 to vector<1x8xi32>
      %153 = arith.andi %42, %152 : vector<1x8xi32>
      %c0_i32_62 = arith.constant 0 : i32
      %154 = vector.broadcast %c0_i32_62 : i32 to vector<1x8xi32>
      %155 = arith.cmpi ne, %153, %154 : vector<1x8xi32>
      %156 = vector.shape_cast %155 : vector<1x8xi1> to vector<1x8xi1>
      %157 = vector.broadcast %156 : vector<1x8xi1> to vector<8x8xi1>
      %158 = arith.select %157, %151, %150 : vector<8x8xi1>, vector<8x8xf32>
      %c4_i32_63 = arith.constant 4 : i32
      %159 = tpu.dynamic_rotate %158 by %c4_i32_63 dim 0 : vector<8x8xf32>, i32 -> vector<8x8xf32>
      %c4_i32_64 = arith.constant 4 : i32
      %160 = vector.broadcast %c4_i32_64 : i32 to vector<1x8xi32>
      %161 = arith.andi %42, %160 : vector<1x8xi32>
      %c0_i32_65 = arith.constant 0 : i32
      %162 = vector.broadcast %c0_i32_65 : i32 to vector<1x8xi32>
      %163 = arith.cmpi ne, %161, %162 : vector<1x8xi32>
      %164 = vector.shape_cast %163 : vector<1x8xi1> to vector<1x8xi1>
      %165 = vector.broadcast %164 : vector<1x8xi1> to vector<8x8xi1>
      %166 = arith.select %165, %159, %158 : vector<8x8xi1>, vector<8x8xf32>
      %cst_66 = arith.constant 0.000000e+00 : f32
      %167 = vector.broadcast %cst_66 : f32 to vector<8x8xf32>
      %168 = arith.select %45, %166, %167 : vector<8x8xi1>, vector<8x8xf32>
      %169 = vector.extract_strided_slice %138 {offsets = [0, 0], sizes = [1, 8], strides = [1, 1]} : vector<4x8xf32> to vector<1x8xf32>
      %170 = vector.broadcast %169 : vector<1x8xf32> to vector<8x8xf32>
      %171 = arith.mulf %168, %170 : vector<8x8xf32>
      %172 = vector.extract_strided_slice %139 {offsets = [0, 0], sizes = [8, 1], strides = [1, 1]} : vector<8x4xf32> to vector<8x1xf32>
      %173 = vector.broadcast %172 : vector<8x1xf32> to vector<8x8xf32>
      %174 = arith.mulf %171, %173 : vector<8x8xf32>
      %175 = arith.truncf %174 : vector<8x8xf32> to vector<8x8xbf16>
      %176 = vector.extract_strided_slice %136 {offsets = [0, 0], sizes = [8, 8], strides = [1, 1]} : vector<8x32xbf16> to vector<8x8xbf16>
      %cst_67 = arith.constant dense<0.000000e+00> : vector<8x8xf32>
      %177 = tpu.matmul %175, %176, %cst_67 {dimension_numbers = #tpu.dot_dimension_numbers<[1], [0], [0], [1], [0, 0, 1, 1], [], []>} : vector<8x8xbf16>, vector<8x8xbf16>, vector<8x8xf32> -> vector<8x8xf32>
      %178 = vector.extract_strided_slice %134 {offsets = [0, 0], sizes = [8, 8], strides = [1, 1]} : vector<8x32xf32> to vector<8x8xf32>
      %179 = arith.mulf %178, %177 : vector<8x8xf32>
      %180 = vector.extract_strided_slice %137 {offsets = [0, 1], sizes = [8, 1], strides = [1, 1]} : vector<8x4xf32> to vector<8x1xf32>
      %181 = vector.shape_cast %180 : vector<8x1xf32> to vector<8x1xf32>
      %182 = vector.broadcast %181 : vector<8x1xf32> to vector<8x8xf32>
      %c1_i32_68 = arith.constant 1 : i32
      %183 = tpu.dynamic_rotate %182 by %c1_i32_68 dim 0 : vector<8x8xf32>, i32 -> vector<8x8xf32>
      %c1_i32_69 = arith.constant 1 : i32
      %184 = vector.broadcast %c1_i32_69 : i32 to vector<1x8xi32>
      %185 = arith.andi %42, %184 : vector<1x8xi32>
      %c0_i32_70 = arith.constant 0 : i32
      %186 = vector.broadcast %c0_i32_70 : i32 to vector<1x8xi32>
      %187 = arith.cmpi ne, %185, %186 : vector<1x8xi32>
      %188 = vector.shape_cast %187 : vector<1x8xi1> to vector<1x8xi1>
      %189 = vector.broadcast %188 : vector<1x8xi1> to vector<8x8xi1>
      %190 = arith.select %189, %183, %182 : vector<8x8xi1>, vector<8x8xf32>
      %c2_i32_71 = arith.constant 2 : i32
      %191 = tpu.dynamic_rotate %190 by %c2_i32_71 dim 0 : vector<8x8xf32>, i32 -> vector<8x8xf32>
      %c2_i32_72 = arith.constant 2 : i32
      %192 = vector.broadcast %c2_i32_72 : i32 to vector<1x8xi32>
      %193 = arith.andi %42, %192 : vector<1x8xi32>
      %c0_i32_73 = arith.constant 0 : i32
      %194 = vector.broadcast %c0_i32_73 : i32 to vector<1x8xi32>
      %195 = arith.cmpi ne, %193, %194 : vector<1x8xi32>
      %196 = vector.shape_cast %195 : vector<1x8xi1> to vector<1x8xi1>
      %197 = vector.broadcast %196 : vector<1x8xi1> to vector<8x8xi1>
      %198 = arith.select %197, %191, %190 : vector<8x8xi1>, vector<8x8xf32>
      %c4_i32_74 = arith.constant 4 : i32
      %199 = tpu.dynamic_rotate %198 by %c4_i32_74 dim 0 : vector<8x8xf32>, i32 -> vector<8x8xf32>
      %c4_i32_75 = arith.constant 4 : i32
      %200 = vector.broadcast %c4_i32_75 : i32 to vector<1x8xi32>
      %201 = arith.andi %42, %200 : vector<1x8xi32>
      %c0_i32_76 = arith.constant 0 : i32
      %202 = vector.broadcast %c0_i32_76 : i32 to vector<1x8xi32>
      %203 = arith.cmpi ne, %201, %202 : vector<1x8xi32>
      %204 = vector.shape_cast %203 : vector<1x8xi1> to vector<1x8xi1>
      %205 = vector.broadcast %204 : vector<1x8xi1> to vector<8x8xi1>
      %206 = arith.select %205, %199, %198 : vector<8x8xi1>, vector<8x8xf32>
      %cst_77 = arith.constant 0.000000e+00 : f32
      %207 = vector.broadcast %cst_77 : f32 to vector<8x8xf32>
      %208 = arith.select %45, %206, %207 : vector<8x8xi1>, vector<8x8xf32>
      %209 = vector.extract_strided_slice %138 {offsets = [1, 0], sizes = [1, 8], strides = [1, 1]} : vector<4x8xf32> to vector<1x8xf32>
      %210 = vector.broadcast %209 : vector<1x8xf32> to vector<8x8xf32>
      %211 = arith.mulf %208, %210 : vector<8x8xf32>
      %212 = vector.extract_strided_slice %139 {offsets = [0, 1], sizes = [8, 1], strides = [1, 1]} : vector<8x4xf32> to vector<8x1xf32>
      %213 = vector.broadcast %212 : vector<8x1xf32> to vector<8x8xf32>
      %214 = arith.mulf %211, %213 : vector<8x8xf32>
      %215 = arith.truncf %214 : vector<8x8xf32> to vector<8x8xbf16>
      %216 = vector.extract_strided_slice %136 {offsets = [0, 8], sizes = [8, 8], strides = [1, 1]} : vector<8x32xbf16> to vector<8x8xbf16>
      %cst_78 = arith.constant dense<0.000000e+00> : vector<8x8xf32>
      %217 = tpu.matmul %215, %216, %cst_78 {dimension_numbers = #tpu.dot_dimension_numbers<[1], [0], [0], [1], [0, 0, 1, 1], [], []>} : vector<8x8xbf16>, vector<8x8xbf16>, vector<8x8xf32> -> vector<8x8xf32>
      %218 = vector.extract_strided_slice %134 {offsets = [0, 8], sizes = [8, 8], strides = [1, 1]} : vector<8x32xf32> to vector<8x8xf32>
      %219 = arith.mulf %218, %217 : vector<8x8xf32>
      %220 = vector.extract_strided_slice %137 {offsets = [0, 2], sizes = [8, 1], strides = [1, 1]} : vector<8x4xf32> to vector<8x1xf32>
      %221 = vector.shape_cast %220 : vector<8x1xf32> to vector<8x1xf32>
      %222 = vector.broadcast %221 : vector<8x1xf32> to vector<8x8xf32>
      %c1_i32_79 = arith.constant 1 : i32
      %223 = tpu.dynamic_rotate %222 by %c1_i32_79 dim 0 : vector<8x8xf32>, i32 -> vector<8x8xf32>
      %c1_i32_80 = arith.constant 1 : i32
      %224 = vector.broadcast %c1_i32_80 : i32 to vector<1x8xi32>
      %225 = arith.andi %42, %224 : vector<1x8xi32>
      %c0_i32_81 = arith.constant 0 : i32
      %226 = vector.broadcast %c0_i32_81 : i32 to vector<1x8xi32>
      %227 = arith.cmpi ne, %225, %226 : vector<1x8xi32>
      %228 = vector.shape_cast %227 : vector<1x8xi1> to vector<1x8xi1>
      %229 = vector.broadcast %228 : vector<1x8xi1> to vector<8x8xi1>
      %230 = arith.select %229, %223, %222 : vector<8x8xi1>, vector<8x8xf32>
      %c2_i32_82 = arith.constant 2 : i32
      %231 = tpu.dynamic_rotate %230 by %c2_i32_82 dim 0 : vector<8x8xf32>, i32 -> vector<8x8xf32>
      %c2_i32_83 = arith.constant 2 : i32
      %232 = vector.broadcast %c2_i32_83 : i32 to vector<1x8xi32>
      %233 = arith.andi %42, %232 : vector<1x8xi32>
      %c0_i32_84 = arith.constant 0 : i32
      %234 = vector.broadcast %c0_i32_84 : i32 to vector<1x8xi32>
      %235 = arith.cmpi ne, %233, %234 : vector<1x8xi32>
      %236 = vector.shape_cast %235 : vector<1x8xi1> to vector<1x8xi1>
      %237 = vector.broadcast %236 : vector<1x8xi1> to vector<8x8xi1>
      %238 = arith.select %237, %231, %230 : vector<8x8xi1>, vector<8x8xf32>
      %c4_i32_85 = arith.constant 4 : i32
      %239 = tpu.dynamic_rotate %238 by %c4_i32_85 dim 0 : vector<8x8xf32>, i32 -> vector<8x8xf32>
      %c4_i32_86 = arith.constant 4 : i32
      %240 = vector.broadcast %c4_i32_86 : i32 to vector<1x8xi32>
      %241 = arith.andi %42, %240 : vector<1x8xi32>
      %c0_i32_87 = arith.constant 0 : i32
      %242 = vector.broadcast %c0_i32_87 : i32 to vector<1x8xi32>
      %243 = arith.cmpi ne, %241, %242 : vector<1x8xi32>
      %244 = vector.shape_cast %243 : vector<1x8xi1> to vector<1x8xi1>
      %245 = vector.broadcast %244 : vector<1x8xi1> to vector<8x8xi1>
      %246 = arith.select %245, %239, %238 : vector<8x8xi1>, vector<8x8xf32>
      %cst_88 = arith.constant 0.000000e+00 : f32
      %247 = vector.broadcast %cst_88 : f32 to vector<8x8xf32>
      %248 = arith.select %45, %246, %247 : vector<8x8xi1>, vector<8x8xf32>
      %249 = vector.extract_strided_slice %138 {offsets = [2, 0], sizes = [1, 8], strides = [1, 1]} : vector<4x8xf32> to vector<1x8xf32>
      %250 = vector.broadcast %249 : vector<1x8xf32> to vector<8x8xf32>
      %251 = arith.mulf %248, %250 : vector<8x8xf32>
      %252 = vector.extract_strided_slice %139 {offsets = [0, 2], sizes = [8, 1], strides = [1, 1]} : vector<8x4xf32> to vector<8x1xf32>
      %253 = vector.broadcast %252 : vector<8x1xf32> to vector<8x8xf32>
      %254 = arith.mulf %251, %253 : vector<8x8xf32>
      %255 = arith.truncf %254 : vector<8x8xf32> to vector<8x8xbf16>
      %256 = vector.extract_strided_slice %136 {offsets = [0, 16], sizes = [8, 8], strides = [1, 1]} : vector<8x32xbf16> to vector<8x8xbf16>
      %cst_89 = arith.constant dense<0.000000e+00> : vector<8x8xf32>
      %257 = tpu.matmul %255, %256, %cst_89 {dimension_numbers = #tpu.dot_dimension_numbers<[1], [0], [0], [1], [0, 0, 1, 1], [], []>} : vector<8x8xbf16>, vector<8x8xbf16>, vector<8x8xf32> -> vector<8x8xf32>
      %258 = vector.extract_strided_slice %134 {offsets = [0, 16], sizes = [8, 8], strides = [1, 1]} : vector<8x32xf32> to vector<8x8xf32>
      %259 = arith.mulf %258, %257 : vector<8x8xf32>
      %260 = vector.extract_strided_slice %137 {offsets = [0, 3], sizes = [8, 1], strides = [1, 1]} : vector<8x4xf32> to vector<8x1xf32>
      %261 = vector.shape_cast %260 : vector<8x1xf32> to vector<8x1xf32>
      %262 = vector.broadcast %261 : vector<8x1xf32> to vector<8x8xf32>
      %c1_i32_90 = arith.constant 1 : i32
      %263 = tpu.dynamic_rotate %262 by %c1_i32_90 dim 0 : vector<8x8xf32>, i32 -> vector<8x8xf32>
      %c1_i32_91 = arith.constant 1 : i32
      %264 = vector.broadcast %c1_i32_91 : i32 to vector<1x8xi32>
      %265 = arith.andi %42, %264 : vector<1x8xi32>
      %c0_i32_92 = arith.constant 0 : i32
      %266 = vector.broadcast %c0_i32_92 : i32 to vector<1x8xi32>
      %267 = arith.cmpi ne, %265, %266 : vector<1x8xi32>
      %268 = vector.shape_cast %267 : vector<1x8xi1> to vector<1x8xi1>
      %269 = vector.broadcast %268 : vector<1x8xi1> to vector<8x8xi1>
      %270 = arith.select %269, %263, %262 : vector<8x8xi1>, vector<8x8xf32>
      %c2_i32_93 = arith.constant 2 : i32
      %271 = tpu.dynamic_rotate %270 by %c2_i32_93 dim 0 : vector<8x8xf32>, i32 -> vector<8x8xf32>
      %c2_i32_94 = arith.constant 2 : i32
      %272 = vector.broadcast %c2_i32_94 : i32 to vector<1x8xi32>
      %273 = arith.andi %42, %272 : vector<1x8xi32>
      %c0_i32_95 = arith.constant 0 : i32
      %274 = vector.broadcast %c0_i32_95 : i32 to vector<1x8xi32>
      %275 = arith.cmpi ne, %273, %274 : vector<1x8xi32>
      %276 = vector.shape_cast %275 : vector<1x8xi1> to vector<1x8xi1>
      %277 = vector.broadcast %276 : vector<1x8xi1> to vector<8x8xi1>
      %278 = arith.select %277, %271, %270 : vector<8x8xi1>, vector<8x8xf32>
      %c4_i32_96 = arith.constant 4 : i32
      %279 = tpu.dynamic_rotate %278 by %c4_i32_96 dim 0 : vector<8x8xf32>, i32 -> vector<8x8xf32>
      %c4_i32_97 = arith.constant 4 : i32
      %280 = vector.broadcast %c4_i32_97 : i32 to vector<1x8xi32>
      %281 = arith.andi %42, %280 : vector<1x8xi32>
      %c0_i32_98 = arith.constant 0 : i32
      %282 = vector.broadcast %c0_i32_98 : i32 to vector<1x8xi32>
      %283 = arith.cmpi ne, %281, %282 : vector<1x8xi32>
      %284 = vector.shape_cast %283 : vector<1x8xi1> to vector<1x8xi1>
      %285 = vector.broadcast %284 : vector<1x8xi1> to vector<8x8xi1>
      %286 = arith.select %285, %279, %278 : vector<8x8xi1>, vector<8x8xf32>
      %cst_99 = arith.constant 0.000000e+00 : f32
      %287 = vector.broadcast %cst_99 : f32 to vector<8x8xf32>
      %288 = arith.select %45, %286, %287 : vector<8x8xi1>, vector<8x8xf32>
      %289 = vector.extract_strided_slice %138 {offsets = [3, 0], sizes = [1, 8], strides = [1, 1]} : vector<4x8xf32> to vector<1x8xf32>
      %290 = vector.broadcast %289 : vector<1x8xf32> to vector<8x8xf32>
      %291 = arith.mulf %288, %290 : vector<8x8xf32>
      %292 = vector.extract_strided_slice %139 {offsets = [0, 3], sizes = [8, 1], strides = [1, 1]} : vector<8x4xf32> to vector<8x1xf32>
      %293 = vector.broadcast %292 : vector<8x1xf32> to vector<8x8xf32>
      %294 = arith.mulf %291, %293 : vector<8x8xf32>
      %295 = arith.truncf %294 : vector<8x8xf32> to vector<8x8xbf16>
      %296 = vector.extract_strided_slice %136 {offsets = [0, 24], sizes = [8, 8], strides = [1, 1]} : vector<8x32xbf16> to vector<8x8xbf16>
      %cst_100 = arith.constant dense<0.000000e+00> : vector<8x8xf32>
      %297 = tpu.matmul %295, %296, %cst_100 {dimension_numbers = #tpu.dot_dimension_numbers<[1], [0], [0], [1], [0, 0, 1, 1], [], []>} : vector<8x8xbf16>, vector<8x8xbf16>, vector<8x8xf32> -> vector<8x8xf32>
      %298 = vector.extract_strided_slice %134 {offsets = [0, 24], sizes = [8, 8], strides = [1, 1]} : vector<8x32xf32> to vector<8x8xf32>
      %299 = arith.mulf %298, %297 : vector<8x8xf32>
      %300 = tpu.concatenate %179, %219, %259, %299 in 1 : vector<8x8xf32>, vector<8x8xf32>, vector<8x8xf32>, vector<8x8xf32> -> vector<8x32xf32>
      %301 = arith.truncf %300 : vector<8x32xf32> to vector<8x32xbf16>
      %c0_101 = arith.constant 0 : index
      %c0_102 = arith.constant 0 : index
      %302 = vector.load %arg12[%c0_101, %c0_102] : memref<32x32xbf16, #tpu.memory_space<vmem>>, vector<32x32xbf16>
      %cst_103 = arith.constant dense<0.000000e+00> : vector<8x32xf32>
      %303 = tpu.matmul %301, %302, %cst_103 {dimension_numbers = #tpu.dot_dimension_numbers<[1], [0], [0], [1], [0, 0, 1, 1], [], []>} : vector<8x32xbf16>, vector<32x32xbf16>, vector<8x32xf32> -> vector<8x32xf32>
      %c0_104 = arith.constant 0 : index
      %c0_105 = arith.constant 0 : index
      %304 = vector.load %arg13[%c0_104, %c0_105] : memref<1x32xf32, #tpu.memory_space<vmem>>, vector<1x32xf32>
      %305 = vector.broadcast %304 : vector<1x32xf32> to vector<8x32xf32>
      %306 = arith.addf %303, %305 : vector<8x32xf32>
      %c0_106 = arith.constant 0 : index
      %c0_107 = arith.constant 0 : index
      %307 = vector.load %arg14[%c0_106, %c0_107] : memref<8x1xf32, #tpu.memory_space<vmem>>, vector<8x1xf32>
      %308 = vector.broadcast %307 : vector<8x1xf32> to vector<8x32xf32>
      %309 = arith.mulf %306, %308 : vector<8x32xf32>
      %310 = arith.addf %47, %309 : vector<8x32xf32>
      %c0_108 = arith.constant 0 : index
      %c0_109 = arith.constant 0 : index
      %311 = vector.load %arg22[%c0_108, %c0_109] : memref<8x32xf32, #tpu.memory_space<vmem>>, vector<8x32xf32>
      tpu.vector_store %arg22[%c0_108, %c0_109], %310 {strides = array<i32>} : memref<8x32xf32, #tpu.memory_space<vmem>>, vector<8x32xf32>,
      %c0_110 = arith.constant 0 : index
      %c0_111 = arith.constant 0 : index
      %312 = vector.load %arg5[%c0_110, %c0_111] : memref<1x32xf32, #tpu.memory_space<vmem>>, vector<1x32xf32>
      %c0_112 = arith.constant 0 : index
      %c0_113 = arith.constant 0 : index
      %313 = vector.load %arg6[%c0_112, %c0_113] : memref<1x32xf32, #tpu.memory_space<vmem>>, vector<1x32xf32>
      %cst_114 = arith.constant dense<0.000000e+00> : vector<8xf32>
      %314 = vector.multi_reduction <add>, %310, %cst_114 [1] : vector<8x32xf32> to vector<8xf32>
      %315 = vector.shape_cast %314 : vector<8xf32> to vector<8x1xf32>
      %cst_115 = arith.constant 3.200000e+01 : f32
      %316 = vector.broadcast %cst_115 : f32 to vector<8x1xf32>
      %317 = arith.divf %315, %316 : vector<8x1xf32>
      %318 = vector.broadcast %317 : vector<8x1xf32> to vector<8x32xf32>
      %319 = arith.subf %310, %318 : vector<8x32xf32>
      %320 = arith.mulf %319, %319 : vector<8x32xf32>
      %cst_116 = arith.constant dense<0.000000e+00> : vector<8xf32>
      %321 = vector.multi_reduction <add>, %320, %cst_116 [1] : vector<8x32xf32> to vector<8xf32>
      %322 = vector.shape_cast %321 : vector<8xf32> to vector<8x1xf32>
      %cst_117 = arith.constant 3.200000e+01 : f32
      %323 = vector.broadcast %cst_117 : f32 to vector<8x1xf32>
      %324 = arith.divf %322, %323 : vector<8x1xf32>
      %325 = vector.broadcast %317 : vector<8x1xf32> to vector<8x32xf32>
      %326 = arith.subf %310, %325 : vector<8x32xf32>
      %cst_118 = arith.constant 9.99999974E-6 : f32
      %327 = vector.broadcast %cst_118 : f32 to vector<8x1xf32>
      %328 = arith.addf %324, %327 : vector<8x1xf32>
      %329 = math.rsqrt %328 : vector<8x1xf32>
      %330 = vector.broadcast %329 : vector<8x1xf32> to vector<8x32xf32>
      %331 = arith.mulf %326, %330 : vector<8x32xf32>
      %332 = vector.broadcast %312 : vector<1x32xf32> to vector<8x32xf32>
      %333 = arith.mulf %331, %332 : vector<8x32xf32>
      %334 = vector.broadcast %313 : vector<1x32xf32> to vector<8x32xf32>
      %335 = arith.addf %333, %334 : vector<8x32xf32>
      %c1_i32_119 = arith.constant 1 : i32
      %336 = tpu.dynamic_rotate %335 by %c1_i32_119 dim 0 : vector<8x32xf32>, i32 -> vector<8x32xf32>
      %c1_i32_120 = arith.constant 1 : i32
      %337 = vector.broadcast %c1_i32_120 : i32 to vector<8x1xi32>
      %338 = arith.cmpi sge, %40, %337 : vector<8x1xi32>
      %cst_121 = arith.constant 0.000000e+00 : f32
      %339 = vector.shape_cast %338 : vector<8x1xi1> to vector<8x1xi1>
      %340 = vector.broadcast %339 : vector<8x1xi1> to vector<8x32xi1>
      %341 = vector.broadcast %cst_121 : f32 to vector<8x32xf32>
      %342 = arith.select %340, %336, %341 : vector<8x32xi1>, vector<8x32xf32>
      %c16_i32_122 = arith.constant 16 : i32
      %343 = vector.broadcast %c16_i32_122 : i32 to vector<1x32xi32>
      %344 = arith.cmpi slt, %41, %343 : vector<1x32xi32>
      %345 = vector.shape_cast %344 : vector<1x32xi1> to vector<1x32xi1>
      %346 = vector.broadcast %345 : vector<1x32xi1> to vector<8x32xi1>
      %347 = arith.select %346, %342, %335 : vector<8x32xi1>, vector<8x32xf32>
      %348 = arith.truncf %347 : vector<8x32xf32> to vector<8x32xbf16>
      %c0_123 = arith.constant 0 : index
      %c0_124 = arith.constant 0 : index
      %349 = vector.load %arg23[%c0_123, %c0_124] : memref<8x32xbf16, #tpu.memory_space<vmem>>, vector<8x32xbf16>
      tpu.vector_store %arg23[%c0_123, %c0_124], %348 {strides = array<i32>} : memref<8x32xbf16, #tpu.memory_space<vmem>>, vector<8x32xbf16>,
      %350 = arith.truncf %347 : vector<8x32xf32> to vector<8x32xbf16>
      %c0_125 = arith.constant 0 : index
      %c0_126 = arith.constant 0 : index
      %351 = vector.load %arg19[%c0_125, %c0_126] : memref<32x32xbf16, #tpu.memory_space<vmem>>, vector<32x32xbf16>
      %cst_127 = arith.constant dense<0.000000e+00> : vector<8x32xf32>
      %352 = tpu.matmul %350, %351, %cst_127 {dimension_numbers = #tpu.dot_dimension_numbers<[1], [0], [0], [1], [0, 0, 1, 1], [], []>} : vector<8x32xbf16>, vector<32x32xbf16>, vector<8x32xf32> -> vector<8x32xf32>
      %c0_128 = arith.constant 0 : index
      %c0_129 = arith.constant 0 : index
      %353 = vector.load %arg20[%c0_128, %c0_129] : memref<1x32xf32, #tpu.memory_space<vmem>>, vector<1x32xf32>
      %354 = vector.broadcast %353 : vector<1x32xf32> to vector<8x32xf32>
      %355 = arith.addf %352, %354 : vector<8x32xf32>
      %356 = arith.negf %355 : vector<8x32xf32>
      %357 = math.exp %356 : vector<8x32xf32>
      %cst_130 = arith.constant 1.000000e+00 : f32
      %358 = vector.broadcast %cst_130 : f32 to vector<8x32xf32>
      %359 = arith.addf %358, %357 : vector<8x32xf32>
      %360 = arith.divf %358, %359 : vector<8x32xf32>
      %c0_131 = arith.constant 0 : index
      %c0_132 = arith.constant 0 : index
      %361 = vector.load %arg24[%c0_131, %c0_132] : memref<8x32xf32, #tpu.memory_space<vmem>>, vector<8x32xf32>
      tpu.vector_store %arg24[%c0_131, %c0_132], %360 {strides = array<i32>} : memref<8x32xf32, #tpu.memory_space<vmem>>, vector<8x32xf32>,
      %cst_133 = arith.constant 0.000000e+00 : f32
      %362 = vector.broadcast %cst_133 : f32 to vector<8x32xf32>
      %c0_134 = arith.constant 0 : index
      %c0_135 = arith.constant 0 : index
      %363 = vector.load %arg25[%c0_134, %c0_135] : memref<8x32xf32, #tpu.memory_space<vmem>>, vector<8x32xf32>
      tpu.vector_store %arg25[%c0_134, %c0_135], %362 {strides = array<i32>} : memref<8x32xf32, #tpu.memory_space<vmem>>, vector<8x32xf32>,
    } else {
    }
    %c0 = arith.constant 0 : index
    %c0_1 = arith.constant 0 : index
    %3 = vector.load %arg23[%c0, %c0_1] : memref<8x32xbf16, #tpu.memory_space<vmem>>, vector<8x32xbf16>
    %c0_2 = arith.constant 0 : index
    %c0_3 = arith.constant 0 : index
    %c0_4 = arith.constant 0 : index
    %4 = vector.load %arg15[%c0_2, %c0_3, %c0_4] : memref<1x32x160xbf16, #tpu.memory_space<vmem>>, vector<1x32x160xbf16>
    %5 = vector.shape_cast %4 : vector<1x32x160xbf16> to vector<32x160xbf16>
    %cst = arith.constant dense<0.000000e+00> : vector<8x160xf32>
    %6 = tpu.matmul %3, %5, %cst {dimension_numbers = #tpu.dot_dimension_numbers<[1], [0], [0], [1], [0, 0, 1, 1], [], []>} : vector<8x32xbf16>, vector<32x160xbf16>, vector<8x160xf32> -> vector<8x160xf32>
    %c0_5 = arith.constant 0 : index
    %c0_6 = arith.constant 0 : index
    %c0_7 = arith.constant 0 : index
    %7 = vector.load %arg16[%c0_5, %c0_6, %c0_7] : memref<1x1x160xf32, #tpu.memory_space<vmem>>, vector<1x1x160xf32>
    %8 = vector.shape_cast %7 : vector<1x1x160xf32> to vector<1x160xf32>
    %9 = vector.broadcast %8 : vector<1x160xf32> to vector<8x160xf32>
    %10 = arith.addf %6, %9 : vector<8x160xf32>
    %11 = vector.extract_strided_slice %10 {offsets = [0, 0], sizes = [8, 80], strides = [1, 1]} : vector<8x160xf32> to vector<8x80xf32>
    %12 = vector.extract_strided_slice %10 {offsets = [0, 80], sizes = [8, 80], strides = [1, 1]} : vector<8x160xf32> to vector<8x80xf32>
    %c0_8 = arith.constant 0 : index
    %c0_9 = arith.constant 0 : index
    %13 = vector.load %arg25[%c0_8, %c0_9] : memref<8x32xf32, #tpu.memory_space<vmem>>, vector<8x32xf32>
    %cst_10 = arith.constant 0.000000e+00 : f32
    %14 = vector.broadcast %cst_10 : f32 to vector<8x80xf32>
    %15 = arith.maximumf %11, %14 : vector<8x80xf32>
    %16 = vector.broadcast %cst_10 : f32 to vector<8x80xf32>
    %17 = arith.subf %11, %16 : vector<8x80xf32>
    %18 = arith.cmpf one, %17, %17 : vector<8x80xf32>
    %19 = vector.broadcast %cst_10 : f32 to vector<8x80xf32>
    %20 = arith.addf %11, %19 : vector<8x80xf32>
    %21 = math.absf %17 : vector<8x80xf32>
    %cst_11 = arith.constant 0.000000e+00 : f32
    %22 = vector.broadcast %cst_11 : f32 to vector<8x80xf32>
    %23 = arith.subf %22, %21 : vector<8x80xf32>
    %24 = math.exp %23 : vector<8x80xf32>
    %25 = math.log1p %24 : vector<8x80xf32>
    %26 = arith.addf %15, %25 : vector<8x80xf32>
    %27 = arith.select %18, %20, %26 : vector<8x80xi1>, vector<8x80xf32>
    %28 = math.tanh %27 : vector<8x80xf32>
    %29 = arith.mulf %11, %28 : vector<8x80xf32>
    %30 = arith.mulf %29, %12 : vector<8x80xf32>
    %31 = arith.truncf %30 : vector<8x80xf32> to vector<8x80xbf16>
    %c0_12 = arith.constant 0 : index
    %c0_13 = arith.constant 0 : index
    %c0_14 = arith.constant 0 : index
    %32 = vector.load %arg17[%c0_12, %c0_13, %c0_14] : memref<1x80x32xbf16, #tpu.memory_space<vmem>>, vector<1x80x32xbf16>
    %33 = vector.shape_cast %32 : vector<1x80x32xbf16> to vector<80x32xbf16>
    %cst_15 = arith.constant dense<0.000000e+00> : vector<8x32xf32>
    %34 = tpu.matmul %31, %33, %cst_15 {dimension_numbers = #tpu.dot_dimension_numbers<[1], [0], [0], [1], [0, 0, 1, 1], [], []>} : vector<8x80xbf16>, vector<80x32xbf16>, vector<8x32xf32> -> vector<8x32xf32>
    %35 = arith.addf %13, %34 : vector<8x32xf32>
    %c0_16 = arith.constant 0 : index
    %c0_17 = arith.constant 0 : index
    %36 = vector.load %arg25[%c0_16, %c0_17] : memref<8x32xf32, #tpu.memory_space<vmem>>, vector<8x32xf32>
    tpu.vector_store %arg25[%c0_16, %c0_17], %35 {strides = array<i32>} : memref<8x32xf32, #tpu.memory_space<vmem>>, vector<8x32xf32>,
    %c0_i32_18 = arith.constant 0 : i32
    %37 = arith.cmpi eq, %arg1, %c0_i32_18 : i32
    %38 = arith.extui %37 : i1 to i32
    %c0_i32_19 = arith.constant 0 : i32
    %39 = arith.cmpi ne, %38, %c0_i32_19 : i32
    scf.if %39 {
      %c0_20 = arith.constant 0 : index
      %c0_21 = arith.constant 0 : index
      %40 = vector.load %arg22[%c0_20, %c0_21] : memref<8x32xf32, #tpu.memory_space<vmem>>, vector<8x32xf32>
      %c0_22 = arith.constant 0 : index
      %c0_23 = arith.constant 0 : index
      %41 = vector.load %arg24[%c0_22, %c0_23] : memref<8x32xf32, #tpu.memory_space<vmem>>, vector<8x32xf32>
      %c0_24 = arith.constant 0 : index
      %c0_25 = arith.constant 0 : index
      %42 = vector.load %arg25[%c0_24, %c0_25] : memref<8x32xf32, #tpu.memory_space<vmem>>, vector<8x32xf32>
      %c0_26 = arith.constant 0 : index
      %c0_27 = arith.constant 0 : index
      %43 = vector.load %arg18[%c0_26, %c0_27] : memref<1x32xf32, #tpu.memory_space<vmem>>, vector<1x32xf32>
      %44 = vector.broadcast %43 : vector<1x32xf32> to vector<8x32xf32>
      %45 = arith.addf %42, %44 : vector<8x32xf32>
      %46 = arith.mulf %41, %45 : vector<8x32xf32>
      %47 = arith.addf %40, %46 : vector<8x32xf32>
      %c0_28 = arith.constant 0 : index
      %c0_29 = arith.constant 0 : index
      %c0_30 = arith.constant 0 : index
      %48 = vector.load %arg21[%c0_28, %c0_29, %c0_30] : memref<1x8x32xf32, #tpu.memory_space<vmem>>, vector<1x8x32xf32>
      %49 = vector.shape_cast %48 : vector<1x8x32xf32> to vector<8x32xf32>
      %50 = vector.shape_cast %47 : vector<8x32xf32> to vector<1x8x32xf32>
      tpu.vector_store %arg21[%c0_28, %c0_29, %c0_30], %50 {strides = array<i32>} : memref<1x8x32xf32, #tpu.memory_space<vmem>>, vector<1x8x32xf32>,
    } else {
    }
    return
  }
  func.func @transform_0(%arg0: i32, %arg1: i32) -> (i32, i32, i32) {
    %c0_i32 = arith.constant 0 : i32
    %c0_i32_0 = arith.constant 0 : i32
    %c0_i32_1 = arith.constant 0 : i32
    return %arg0, %c0_i32, %c0_i32_0 : i32, i32, i32
  }
  func.func @transform_1(%arg0: i32, %arg1: i32) -> (i32, i32) {
    %c0_i32 = arith.constant 0 : i32
    %c0_i32_0 = arith.constant 0 : i32
    %c0_i32_1 = arith.constant 0 : i32
    return %c0_i32, %c0_i32_0 : i32, i32
  }
  func.func @transform_2(%arg0: i32, %arg1: i32) -> (i32, i32) {
    %c0_i32 = arith.constant 0 : i32
    %c0_i32_0 = arith.constant 0 : i32
    %c0_i32_1 = arith.constant 0 : i32
    return %c0_i32, %c0_i32_0 : i32, i32
  }
  func.func @transform_3(%arg0: i32, %arg1: i32) -> (i32, i32) {
    %c0_i32 = arith.constant 0 : i32
    %c0_i32_0 = arith.constant 0 : i32
    %c0_i32_1 = arith.constant 0 : i32
    return %c0_i32, %c0_i32_0 : i32, i32
  }
  func.func @transform_4(%arg0: i32, %arg1: i32) -> (i32, i32) {
    %c0_i32 = arith.constant 0 : i32
    %c0_i32_0 = arith.constant 0 : i32
    %c0_i32_1 = arith.constant 0 : i32
    return %c0_i32, %c0_i32_0 : i32, i32
  }
  func.func @transform_5(%arg0: i32, %arg1: i32) -> (i32, i32) {
    %c0_i32 = arith.constant 0 : i32
    %c0_i32_0 = arith.constant 0 : i32
    %c0_i32_1 = arith.constant 0 : i32
    return %c0_i32, %c0_i32_0 : i32, i32
  }
  func.func @transform_6(%arg0: i32, %arg1: i32) -> (i32, i32) {
    %c0_i32 = arith.constant 0 : i32
    %c0_i32_0 = arith.constant 0 : i32
    %c0_i32_1 = arith.constant 0 : i32
    return %c0_i32, %c0_i32_0 : i32, i32
  }
  func.func @transform_7(%arg0: i32, %arg1: i32) -> (i32, i32) {
    %c0_i32 = arith.constant 0 : i32
    %c0_i32_0 = arith.constant 0 : i32
    %c0_i32_1 = arith.constant 0 : i32
    return %c0_i32, %c0_i32_0 : i32, i32
  }
  func.func @transform_8(%arg0: i32, %arg1: i32) -> (i32, i32) {
    %c0_i32 = arith.constant 0 : i32
    %c0_i32_0 = arith.constant 0 : i32
    %c0_i32_1 = arith.constant 0 : i32
    return %c0_i32, %c0_i32_0 : i32, i32
  }
  func.func @transform_9(%arg0: i32, %arg1: i32) -> (i32, i32) {
    %c0_i32 = arith.constant 0 : i32
    %c0_i32_0 = arith.constant 0 : i32
    %c0_i32_1 = arith.constant 0 : i32
    return %c0_i32, %c0_i32_0 : i32, i32
  }
  func.func @transform_10(%arg0: i32, %arg1: i32) -> (i32, i32) {
    %c0_i32 = arith.constant 0 : i32
    %c0_i32_0 = arith.constant 0 : i32
    %c0_i32_1 = arith.constant 0 : i32
    return %c0_i32, %c0_i32_0 : i32, i32
  }
  func.func @transform_11(%arg0: i32, %arg1: i32) -> (i32, i32) {
    %c0_i32 = arith.constant 0 : i32
    %c0_i32_0 = arith.constant 0 : i32
    %c0_i32_1 = arith.constant 0 : i32
    return %c0_i32, %c0_i32_0 : i32, i32
  }
  func.func @transform_12(%arg0: i32, %arg1: i32) -> (i32, i32) {
    %c0_i32 = arith.constant 0 : i32
    %c0_i32_0 = arith.constant 0 : i32
    %c0_i32_1 = arith.constant 0 : i32
    return %c0_i32, %c0_i32_0 : i32, i32
  }
  func.func @transform_13(%arg0: i32, %arg1: i32) -> (i32, i32, i32) {
    %c0_i32 = arith.constant 0 : i32
    %c0_i32_0 = arith.constant 0 : i32
    %c0_i32_1 = arith.constant 0 : i32
    return %arg1, %c0_i32, %c0_i32_0 : i32, i32, i32
  }
  func.func @transform_14(%arg0: i32, %arg1: i32) -> (i32, i32, i32) {
    %c0_i32 = arith.constant 0 : i32
    %c0_i32_0 = arith.constant 0 : i32
    %c0_i32_1 = arith.constant 0 : i32
    return %arg1, %c0_i32, %c0_i32_0 : i32, i32, i32
  }
  func.func @transform_15(%arg0: i32, %arg1: i32) -> (i32, i32, i32) {
    %c0_i32 = arith.constant 0 : i32
    %c0_i32_0 = arith.constant 0 : i32
    %c0_i32_1 = arith.constant 0 : i32
    return %arg1, %c0_i32, %c0_i32_0 : i32, i32, i32
  }
  func.func @transform_16(%arg0: i32, %arg1: i32) -> (i32, i32) {
    %c0_i32 = arith.constant 0 : i32
    %c0_i32_0 = arith.constant 0 : i32
    %c0_i32_1 = arith.constant 0 : i32
    return %c0_i32, %c0_i32_0 : i32, i32
  }
  func.func @transform_17(%arg0: i32, %arg1: i32) -> (i32, i32) {
    %c0_i32 = arith.constant 0 : i32
    %c0_i32_0 = arith.constant 0 : i32
    %c0_i32_1 = arith.constant 0 : i32
    return %c0_i32, %c0_i32_0 : i32, i32
  }
  func.func @transform_18(%arg0: i32, %arg1: i32) -> (i32, i32) {
    %c0_i32 = arith.constant 0 : i32
    %c0_i32_0 = arith.constant 0 : i32
    %c0_i32_1 = arith.constant 0 : i32
    return %c0_i32, %c0_i32_0 : i32, i32
  }
  func.func @transform_19(%arg0: i32, %arg1: i32) -> (i32, i32, i32) {
    %c0_i32 = arith.constant 0 : i32
    %c0_i32_0 = arith.constant 0 : i32
    %c0_i32_1 = arith.constant 0 : i32
    return %arg0, %c0_i32, %c0_i32_0 : i32, i32, i32
  }
}

</mosaic_0001>

<llo_original>
// kernel: encoder_forward.3
$region0: #{encoder_forward.3}
  #allocation0 [shape = 'u32[]', space=smem, size = 0x4, offset = 0x4, fixed_abs, tag = 'smem constant byte address 0x4 - core index']
  #allocation1 [shape = 'u32[144,128]{1,0:T(1,128)}', space=vmem, size = 0x12000, scoped, tag = 'internal scratch']
  #allocation2 [shape = 'f32[8,32]{1,0:T(8,128)}', space=vmem, size = 0x1000, scoped, tag = 'scratch operand']
  #allocation3 [shape = 'bf16[8,32]{1,0:T(8,128)(2,1)}', space=vmem, size = 0x800, scoped, tag = 'scratch operand']
  #allocation4 [shape = 'f32[8,32]{1,0:T(8,128)}', space=vmem, size = 0x1000, scoped, tag = 'scratch operand']
  #allocation5 [shape = 'f32[8,32]{1,0:T(8,128)}', space=vmem, size = 0x1000, scoped, tag = 'scratch operand']
  %s0 = inlined_call_operand.hbm [shape: f32[2,8,32], index: 0, kind: input, shape index: {}, may-alias: {0,19}]
  %s1 = inlined_call_operand.vmem [shape: f32[1,32], index: 1, kind: input, shape index: {}]
  %s2 = inlined_call_operand.vmem [shape: f32[1,32], index: 2, kind: input, shape index: {}]
  %s3 = inlined_call_operand.vmem [shape: f32[1,32], index: 3, kind: input, shape index: {}]
  %s4 = inlined_call_operand.vmem [shape: f32[1,32], index: 4, kind: input, shape index: {}]
  %s5 = inlined_call_operand.vmem [shape: bf16[32,96], index: 5, kind: input, shape index: {}]
  %s6 = inlined_call_operand.vmem [shape: f32[1,96], index: 6, kind: input, shape index: {}]
  %s7 = inlined_call_operand.vmem [shape: f32[8,4], index: 7, kind: input, shape index: {}]
  %s8 = inlined_call_operand.vmem [shape: f32[4,8], index: 8, kind: input, shape index: {}]
  %s9 = inlined_call_operand.vmem [shape: f32[8,4], index: 9, kind: input, shape index: {}]
  %s10 = inlined_call_operand.vmem [shape: bf16[32,32], index: 10, kind: input, shape index: {}]
  %s11 = inlined_call_operand.vmem [shape: f32[1,32], index: 11, kind: input, shape index: {}]
  %s12 = inlined_call_operand.vmem [shape: f32[8,1], index: 12, kind: input, shape index: {}]
  %s13 = inlined_call_operand.vmem [shape: bf16[1,32,160], index: 13, kind: input, shape index: {}]
  %s14 = inlined_call_operand.vmem [shape: f32[1,1,160], index: 14, kind: input, shape index: {}]
  %s15 = inlined_call_operand.vmem [shape: bf16[1,80,32], index: 15, kind: input, shape index: {}]
  %s16 = inlined_call_operand.vmem [shape: f32[1,32], index: 16, kind: input, shape index: {}]
  %s17 = inlined_call_operand.vmem [shape: bf16[32,32], index: 17, kind: input, shape index: {}]
  %s18 = inlined_call_operand.vmem [shape: f32[1,32], index: 18, kind: input, shape index: {}]
  %s19 = inlined_call_operand.hbm [shape: f32[2,8,32], index: 19, kind: output, shape index: {}, may-alias: {0,19}]
  %s20 = sld [smem:[#allocation0]]
  $region121: #{encoder_forward.3} parent=0
    _
  %s22 = ssub.s32 1, %s20
  %s23 = scalar_select 0, %s22, %s20
  $region1: #{encoder_forward.3} parent=0
    #allocation6 [shape = 'u8[8192]{0}', space=vmem, size = 0x2000, scoped, tag = 'input window, operand 0']
    #allocation7 [shape = 's32[2]{0}', space=sflag, size = 0x8, scoped, tag = 'scoped memory for encoder_forward.3']
    #allocation8 [shape = 's32[2]{0}', space=sflag, size = 0x8, scoped, tag = 'scoped memory for encoder_forward.3']
    #allocation9 [shape = 'u8[8192]{0}', space=vmem, size = 0x2000, scoped, tag = 'output window, operand 0']
    %24 = vsyncpa [#allocation7], 0
    %s25 = scalar_lea.sflag [#allocation7], 1
    %26 = vsyncpa %s25, 0
    %27 = vsyncpa [#allocation8], 0
    %s28 = scalar_lea.sflag [#allocation8], 1
    %29 = vsyncpa %s28, 0
    loop: start=0, step=1, limit=4
    $region2: #{encoder_forward.3} parent=1 // loop_pre_header
      _
    $region3: #{encoder_forward.3} parent=1 // loop_header
      %s31 = sphi 0, %s35
      %p32 = scmp.ge.s32.totalorder %s31, 4
      %s38 = sphi 0, %s50
      %s39 = sphi 0, %s46
      %s40 = sphi 0, %s38
      %s41 = sphi 0, %s39
      %s42 = sphi 0, %s40
      %s43 = sphi 0, %s41
      %s53 = sphi 0, %s55
      %s56 = sphi 0, %s53
      %s57 = sphi 0, %s56
      %s73 = sphi 0, %s57
      %s77 = sphi 0, %s77
      %s79 = sphi 0, %s77
      %s80 = sphi 0, %s79
      %s94 = sphi 0, %s80
      %s98 = sphi 0, %s98
      %s100 = sphi 0, %s98
      %s101 = sphi 0, %s100
      %s115 = sphi 0, %s101
      %s119 = sphi 0, %s119
      %s121 = sphi 0, %s119
      %s122 = sphi 0, %s121
      %s136 = sphi 0, %s122
      %s140 = sphi 0, %s140
      %s142 = sphi 0, %s140
      %s143 = sphi 0, %s142
      %s157 = sphi 0, %s143
      %s161 = sphi 0, %s161
      %s163 = sphi 0, %s161
      %s164 = sphi 0, %s163
      %s178 = sphi 0, %s164
      %s182 = sphi 0, %s182
      %s184 = sphi 0, %s182
      %s185 = sphi 0, %s184
      %s199 = sphi 0, %s185
      %s203 = sphi 0, %s203
      %s205 = sphi 0, %s203
      %s206 = sphi 0, %s205
      %s220 = sphi 0, %s206
      %s224 = sphi 0, %s224
      %s226 = sphi 0, %s224
      %s227 = sphi 0, %s226
      %s241 = sphi 0, %s227
      %s245 = sphi 0, %s245
      %s247 = sphi 0, %s245
      %s248 = sphi 0, %s247
      %s262 = sphi 0, %s248
      %s266 = sphi 0, %s266
      %s268 = sphi 0, %s266
      %s269 = sphi 0, %s268
      %s283 = sphi 0, %s269
      %s287 = sphi 0, %s287
      %s289 = sphi 0, %s287
      %s290 = sphi 0, %s289
      %s304 = sphi 0, %s290
      %s308 = sphi 0, %s308
      %s310 = sphi 0, %s308
      %s311 = sphi 0, %s310
      %s325 = sphi 0, %s311
      %s331 = sphi 0, %s333
      %s334 = sphi 0, %s331
      %s335 = sphi 0, %s334
      %s351 = sphi 0, %s335
      %s357 = sphi 0, %s359
      %s360 = sphi 0, %s357
      %s361 = sphi 0, %s360
      %s377 = sphi 0, %s361
      %s383 = sphi 0, %s385
      %s386 = sphi 0, %s383
      %s387 = sphi 0, %s386
      %s403 = sphi 0, %s387
      %s407 = sphi 0, %s407
      %s409 = sphi 0, %s407
      %s410 = sphi 0, %s409
      %s424 = sphi 0, %s410
      %s428 = sphi 0, %s428
      %s430 = sphi 0, %s428
      %s431 = sphi 0, %s430
      %s445 = sphi 0, %s431
      %s449 = sphi 0, %s449
      %s451 = sphi 0, %s449
      %s452 = sphi 0, %s451
      %s466 = sphi 0, %s452
      %s472 = sphi 0, %s474
      %s475 = sphi 0, %s472
      %s476 = sphi 0, %s475
      %s492 = sphi 0, %s476
    $region4: #{encoder_forward.3} parent=1 // loop_header_branch
      %34 = sbr.rel (%p32) target = $region8
    $region5: #{encoder_forward.3} parent=1 // loop_body
      %s36 = ssub.s32 %s31, 1
      %s37 = ssub.s32 %s31, 2
      %s44 = sadd.s32 1, %s39
      %p45 = scmp.ge.s32.totalorder %s44, 1
      %s46 = scalar_select %p45, 0, %s44
      %s47 = sadd.s32 1, %s38
      %s48 = scalar_select %p45, %s47, %s38
      %p49 = scmp.ge.s32.totalorder %s48, 2
      %s50 = scalar_select %p49, 0, %s48
      %s51 = ssub.s32 %s38, %s50
      %p52 = scmp.eq.s32.totalorder %s51, 0
      %s54 = sadd.s32 %s53, 1
      %s55 = scalar_select %p52, %s53, %s54
      %p58 = pneg %p52
      %p59 = scmp.eq.s32.totalorder %s31, 1
      %p60 = por %p58, %p59
      %p61 = scmp.ne.s32.totalorder %s53, %s56
      %p62 = scmp.eq.s32.totalorder %s31, 0
      %p63 = por %p61, %p62
      %p64 = scmp.ne.s32.totalorder %s53, %s56
      %p65 = scmp.eq.s32.totalorder %s36, 1
      %p66 = por %p64, %p65
      %p67 = scmp.ne.s32.totalorder %s56, %s57
      %p68 = scmp.eq.s32.totalorder %s36, 0
      %p69 = por %p67, %p68
      %p70 = scmp.ne.s32.totalorder %s56, %s57
      %p71 = scmp.eq.s32.totalorder %s37, 1
      %p72 = por %p70, %p71
      %p74 = scmp.ne.s32.totalorder %s57, %s73
      %p75 = scmp.eq.s32.totalorder %s37, 0
      %p76 = por %p74, %p75
      %s78 = sadd.s32 %s77, 1
      %p81 = scmp.eq.s32.totalorder %s31, 1
      %p82 = scmp.ne.s32.totalorder %s77, %s79
      %p83 = scmp.eq.s32.totalorder %s31, 0
      %p84 = por %p82, %p83
      %p85 = scmp.ne.s32.totalorder %s77, %s79
      %p86 = scmp.eq.s32.totalorder %s36, 1
      %p87 = por %p85, %p86
      %p88 = scmp.ne.s32.totalorder %s79, %s80
      %p89 = scmp.eq.s32.totalorder %s36, 0
      %p90 = por %p88, %p89
      %p91 = scmp.ne.s32.totalorder %s79, %s80
      %p92 = scmp.eq.s32.totalorder %s37, 1
      %p93 = por %p91, %p92
      %p95 = scmp.ne.s32.totalorder %s80, %s94
      %p96 = scmp.eq.s32.totalorder %s37, 0
      %p97 = por %p95, %p96
      %s99 = sadd.s32 %s98, 1
      %p102 = scmp.eq.s32.totalorder %s31, 1
      %p103 = scmp.ne.s32.totalorder %s98, %s100
      %p104 = scmp.eq.s32.totalorder %s31, 0
      %p105 = por %p103, %p104
      %p106 = scmp.ne.s32.totalorder %s98, %s100
      %p107 = scmp.eq.s32.totalorder %s36, 1
      %p108 = por %p106, %p107
      %p109 = scmp.ne.s32.totalorder %s100, %s101
      %p110 = scmp.eq.s32.totalorder %s36, 0
      %p111 = por %p109, %p110
      %p112 = scmp.ne.s32.totalorder %s100, %s101
      %p113 = scmp.eq.s32.totalorder %s37, 1
      %p114 = por %p112, %p113
      %p116 = scmp.ne.s32.totalorder %s101, %s115
      %p117 = scmp.eq.s32.totalorder %s37, 0
      %p118 = por %p116, %p117
      %s120 = sadd.s32 %s119, 1
      %p123 = scmp.eq.s32.totalorder %s31, 1
      %p124 = scmp.ne.s32.totalorder %s119, %s121
      %p125 = scmp.eq.s32.totalorder %s31, 0
      %p126 = por %p124, %p125
      %p127 = scmp.ne.s32.totalorder %s119, %s121
      %p128 = scmp.eq.s32.totalorder %s36, 1
      %p129 = por %p127, %p128
      %p130 = scmp.ne.s32.totalorder %s121, %s122
      %p131 = scmp.eq.s32.totalorder %s36, 0
      %p132 = por %p130, %p131
      %p133 = scmp.ne.s32.totalorder %s121, %s122
      %p134 = scmp.eq.s32.totalorder %s37, 1
      %p135 = por %p133, %p134
      %p137 = scmp.ne.s32.totalorder %s122, %s136
      %p138 = scmp.eq.s32.totalorder %s37, 0
      %p139 = por %p137, %p138
      %s141 = sadd.s32 %s140, 1
      %p144 = scmp.eq.s32.totalorder %s31, 1
      %p145 = scmp.ne.s32.totalorder %s140, %s142
      %p146 = scmp.eq.s32.totalorder %s31, 0
      %p147 = por %p145, %p146
      %p148 = scmp.ne.s32.totalorder %s140, %s142
      %p149 = scmp.eq.s32.totalorder %s36, 1
      %p150 = por %p148, %p149
      %p151 = scmp.ne.s32.totalorder %s142, %s143
      %p152 = scmp.eq.s32.totalorder %s36, 0
      %p153 = por %p151, %p152
      %p154 = scmp.ne.s32.totalorder %s142, %s143
      %p155 = scmp.eq.s32.totalorder %s37, 1
      %p156 = por %p154, %p155
      %p158 = scmp.ne.s32.totalorder %s143, %s157
      %p159 = scmp.eq.s32.totalorder %s37, 0
      %p160 = por %p158, %p159
      %s162 = sadd.s32 %s161, 1
      %p165 = scmp.eq.s32.totalorder %s31, 1
      %p166 = scmp.ne.s32.totalorder %s161, %s163
      %p167 = scmp.eq.s32.totalorder %s31, 0
      %p168 = por %p166, %p167
      %p169 = scmp.ne.s32.totalorder %s161, %s163
      %p170 = scmp.eq.s32.totalorder %s36, 1
      %p171 = por %p169, %p170
      %p172 = scmp.ne.s32.totalorder %s163, %s164
      %p173 = scmp.eq.s32.totalorder %s36, 0
      %p174 = por %p172, %p173
      %p175 = scmp.ne.s32.totalorder %s163, %s164
      %p176 = scmp.eq.s32.totalorder %s37, 1
      %p177 = por %p175, %p176
      %p179 = scmp.ne.s32.totalorder %s164, %s178
      %p180 = scmp.eq.s32.totalorder %s37, 0
      %p181 = por %p179, %p180
      %s183 = sadd.s32 %s182, 1
      %p186 = scmp.eq.s32.totalorder %s31, 1
      %p187 = scmp.ne.s32.totalorder %s182, %s184
      %p188 = scmp.eq.s32.totalorder %s31, 0
      %p189 = por %p187, %p188
      %p190 = scmp.ne.s32.totalorder %s182, %s184
      %p191 = scmp.eq.s32.totalorder %s36, 1
      %p192 = por %p190, %p191
      %p193 = scmp.ne.s32.totalorder %s184, %s185
      %p194 = scmp.eq.s32.totalorder %s36, 0
      %p195 = por %p193, %p194
      %p196 = scmp.ne.s32.totalorder %s184, %s185
      %p197 = scmp.eq.s32.totalorder %s37, 1
      %p198 = por %p196, %p197
      %p200 = scmp.ne.s32.totalorder %s185, %s199
      %p201 = scmp.eq.s32.totalorder %s37, 0
      %p202 = por %p200, %p201
      %s204 = sadd.s32 %s203, 1
      %p207 = scmp.eq.s32.totalorder %s31, 1
      %p208 = scmp.ne.s32.totalorder %s203, %s205
      %p209 = scmp.eq.s32.totalorder %s31, 0
      %p210 = por %p208, %p209
      %p211 = scmp.ne.s32.totalorder %s203, %s205
      %p212 = scmp.eq.s32.totalorder %s36, 1
      %p213 = por %p211, %p212
      %p214 = scmp.ne.s32.totalorder %s205, %s206
      %p215 = scmp.eq.s32.totalorder %s36, 0
      %p216 = por %p214, %p215
      %p217 = scmp.ne.s32.totalorder %s205, %s206
      %p218 = scmp.eq.s32.totalorder %s37, 1
      %p219 = por %p217, %p218
      %p221 = scmp.ne.s32.totalorder %s206, %s220
      %p222 = scmp.eq.s32.totalorder %s37, 0
      %p223 = por %p221, %p222
      %s225 = sadd.s32 %s224, 1
      %p228 = scmp.eq.s32.totalorder %s31, 1
      %p229 = scmp.ne.s32.totalorder %s224, %s226
      %p230 = scmp.eq.s32.totalorder %s31, 0
      %p231 = por %p229, %p230
      %p232 = scmp.ne.s32.totalorder %s224, %s226
      %p233 = scmp.eq.s32.totalorder %s36, 1
      %p234 = por %p232, %p233
      %p235 = scmp.ne.s32.totalorder %s226, %s227
      %p236 = scmp.eq.s32.totalorder %s36, 0
      %p237 = por %p235, %p236
      %p238 = scmp.ne.s32.totalorder %s226, %s227
      %p239 = scmp.eq.s32.totalorder %s37, 1
      %p240 = por %p238, %p239
      %p242 = scmp.ne.s32.totalorder %s227, %s241
      %p243 = scmp.eq.s32.totalorder %s37, 0
      %p244 = por %p242, %p243
      %s246 = sadd.s32 %s245, 1
      %p249 = scmp.eq.s32.totalorder %s31, 1
      %p250 = scmp.ne.s32.totalorder %s245, %s247
      %p251 = scmp.eq.s32.totalorder %s31, 0
      %p252 = por %p250, %p251
      %p253 = scmp.ne.s32.totalorder %s245, %s247
      %p254 = scmp.eq.s32.totalorder %s36, 1
      %p255 = por %p253, %p254
      %p256 = scmp.ne.s32.totalorder %s247, %s248
      %p257 = scmp.eq.s32.totalorder %s36, 0
      %p258 = por %p256, %p257
      %p259 = scmp.ne.s32.totalorder %s247, %s248
      %p260 = scmp.eq.s32.totalorder %s37, 1
      %p261 = por %p259, %p260
      %p263 = scmp.ne.s32.totalorder %s248, %s262
      %p264 = scmp.eq.s32.totalorder %s37, 0
      %p265 = por %p263, %p264
      %s267 = sadd.s32 %s266, 1
      %p270 = scmp.eq.s32.totalorder %s31, 1
      %p271 = scmp.ne.s32.totalorder %s266, %s268
      %p272 = scmp.eq.s32.totalorder %s31, 0
      %p273 = por %p271, %p272
      %p274 = scmp.ne.s32.totalorder %s266, %s268
      %p275 = scmp.eq.s32.totalorder %s36, 1
      %p276 = por %p274, %p275
      %p277 = scmp.ne.s32.totalorder %s268, %s269
      %p278 = scmp.eq.s32.totalorder %s36, 0
      %p279 = por %p277, %p278
      %p280 = scmp.ne.s32.totalorder %s268, %s269
      %p281 = scmp.eq.s32.totalorder %s37, 1
      %p282 = por %p280, %p281
      %p284 = scmp.ne.s32.totalorder %s269, %s283
      %p285 = scmp.eq.s32.totalorder %s37, 0
      %p286 = por %p284, %p285
      %s288 = sadd.s32 %s287, 1
      %p291 = scmp.eq.s32.totalorder %s31, 1
      %p292 = scmp.ne.s32.totalorder %s287, %s289
      %p293 = scmp.eq.s32.totalorder %s31, 0
      %p294 = por %p292, %p293
      %p295 = scmp.ne.s32.totalorder %s287, %s289
      %p296 = scmp.eq.s32.totalorder %s36, 1
      %p297 = por %p295, %p296
      %p298 = scmp.ne.s32.totalorder %s289, %s290
      %p299 = scmp.eq.s32.totalorder %s36, 0
      %p300 = por %p298, %p299
      %p301 = scmp.ne.s32.totalorder %s289, %s290
      %p302 = scmp.eq.s32.totalorder %s37, 1
      %p303 = por %p301, %p302
      %p305 = scmp.ne.s32.totalorder %s290, %s304
      %p306 = scmp.eq.s32.totalorder %s37, 0
      %p307 = por %p305, %p306
      %s309 = sadd.s32 %s308, 1
      %p312 = scmp.eq.s32.totalorder %s31, 1
      %p313 = scmp.ne.s32.totalorder %s308, %s310
      %p314 = scmp.eq.s32.totalorder %s31, 0
      %p315 = por %p313, %p314
      %p316 = scmp.ne.s32.totalorder %s308, %s310
      %p317 = scmp.eq.s32.totalorder %s36, 1
      %p318 = por %p316, %p317
      %p319 = scmp.ne.s32.totalorder %s310, %s311
      %p320 = scmp.eq.s32.totalorder %s36, 0
      %p321 = por %p319, %p320
      %p322 = scmp.ne.s32.totalorder %s310, %s311
      %p323 = scmp.eq.s32.totalorder %s37, 1
      %p324 = por %p322, %p323
      %p326 = scmp.ne.s32.totalorder %s311, %s325
      %p327 = scmp.eq.s32.totalorder %s37, 0
      %p328 = por %p326, %p327
      %s329 = ssub.s32 %s39, %s46
      %p330 = scmp.eq.s32.totalorder %s329, 0
      %s332 = sadd.s32 %s331, 1
      %s333 = scalar_select %p330, %s331, %s332
      %p336 = pneg %p330
      %p337 = scmp.eq.s32.totalorder %s31, 1
      %p338 = por %p336, %p337
      %p339 = scmp.ne.s32.totalorder %s331, %s334
      %p340 = scmp.eq.s32.totalorder %s31, 0
      %p341 = por %p339, %p340
      %p342 = scmp.ne.s32.totalorder %s331, %s334
      %p343 = scmp.eq.s32.totalorder %s36, 1
      %p344 = por %p342, %p343
      %p345 = scmp.ne.s32.totalorder %s334, %s335
      %p346 = scmp.eq.s32.totalorder %s36, 0
      %p347 = por %p345, %p346
      %p348 = scmp.ne.s32.totalorder %s334, %s335
      %p349 = scmp.eq.s32.totalorder %s37, 1
      %p350 = por %p348, %p349
      %p352 = scmp.ne.s32.totalorder %s335, %s351
      %p353 = scmp.eq.s32.totalorder %s37, 0
      %p354 = por %p352, %p353
      %s355 = ssub.s32 %s39, %s46
      %p356 = scmp.eq.s32.totalorder %s355, 0
      %s358 = sadd.s32 %s357, 1
      %s359 = scalar_select %p356, %s357, %s358
      %p362 = pneg %p356
      %p363 = scmp.eq.s32.totalorder %s31, 1
      %p364 = por %p362, %p363
      %p365 = scmp.ne.s32.totalorder %s357, %s360
      %p366 = scmp.eq.s32.totalorder %s31, 0
      %p367 = por %p365, %p366
      %p368 = scmp.ne.s32.totalorder %s357, %s360
      %p369 = scmp.eq.s32.totalorder %s36, 1
      %p370 = por %p368, %p369
      %p371 = scmp.ne.s32.totalorder %s360, %s361
      %p372 = scmp.eq.s32.totalorder %s36, 0
      %p373 = por %p371, %p372
      %p374 = scmp.ne.s32.totalorder %s360, %s361
      %p375 = scmp.eq.s32.totalorder %s37, 1
      %p376 = por %p374, %p375
      %p378 = scmp.ne.s32.totalorder %s361, %s377
      %p379 = scmp.eq.s32.totalorder %s37, 0
      %p380 = por %p378, %p379
      %s381 = ssub.s32 %s39, %s46
      %p382 = scmp.eq.s32.totalorder %s381, 0
      %s384 = sadd.s32 %s383, 1
      %s385 = scalar_select %p382, %s383, %s384
      %p388 = pneg %p382
      %p389 = scmp.eq.s32.totalorder %s31, 1
      %p390 = por %p388, %p389
      %p391 = scmp.ne.s32.totalorder %s383, %s386
      %p392 = scmp.eq.s32.totalorder %s31, 0
      %p393 = por %p391, %p392
      %p394 = scmp.ne.s32.totalorder %s383, %s386
      %p395 = scmp.eq.s32.totalorder %s36, 1
      %p396 = por %p394, %p395
      %p397 = scmp.ne.s32.totalorder %s386, %s387
      %p398 = scmp.eq.s32.totalorder %s36, 0
      %p399 = por %p397, %p398
      %p400 = scmp.ne.s32.totalorder %s386, %s387
      %p401 = scmp.eq.s32.totalorder %s37, 1
      %p402 = por %p400, %p401
      %p404 = scmp.ne.s32.totalorder %s387, %s403
      %p405 = scmp.eq.s32.totalorder %s37, 0
      %p406 = por %p404, %p405
      %s408 = sadd.s32 %s407, 1
      %p411 = scmp.eq.s32.totalorder %s31, 1
      %p412 = scmp.ne.s32.totalorder %s407, %s409
      %p413 = scmp.eq.s32.totalorder %s31, 0
      %p414 = por %p412, %p413
      %p415 = scmp.ne.s32.totalorder %s407, %s409
      %p416 = scmp.eq.s32.totalorder %s36, 1
      %p417 = por %p415, %p416
      %p418 = scmp.ne.s32.totalorder %s409, %s410
      %p419 = scmp.eq.s32.totalorder %s36, 0
      %p420 = por %p418, %p419
      %p421 = scmp.ne.s32.totalorder %s409, %s410
      %p422 = scmp.eq.s32.totalorder %s37, 1
      %p423 = por %p421, %p422
      %p425 = scmp.ne.s32.totalorder %s410, %s424
      %p426 = scmp.eq.s32.totalorder %s37, 0
      %p427 = por %p425, %p426
      %s429 = sadd.s32 %s428, 1
      %p432 = scmp.eq.s32.totalorder %s31, 1
      %p433 = scmp.ne.s32.totalorder %s428, %s430
      %p434 = scmp.eq.s32.totalorder %s31, 0
      %p435 = por %p433, %p434
      %p436 = scmp.ne.s32.totalorder %s428, %s430
      %p437 = scmp.eq.s32.totalorder %s36, 1
      %p438 = por %p436, %p437
      %p439 = scmp.ne.s32.totalorder %s430, %s431
      %p440 = scmp.eq.s32.totalorder %s36, 0
      %p441 = por %p439, %p440
      %p442 = scmp.ne.s32.totalorder %s430, %s431
      %p443 = scmp.eq.s32.totalorder %s37, 1
      %p444 = por %p442, %p443
      %p446 = scmp.ne.s32.totalorder %s431, %s445
      %p447 = scmp.eq.s32.totalorder %s37, 0
      %p448 = por %p446, %p447
      %s450 = sadd.s32 %s449, 1
      %p453 = scmp.eq.s32.totalorder %s31, 1
      %p454 = scmp.ne.s32.totalorder %s449, %s451
      %p455 = scmp.eq.s32.totalorder %s31, 0
      %p456 = por %p454, %p455
      %p457 = scmp.ne.s32.totalorder %s449, %s451
      %p458 = scmp.eq.s32.totalorder %s36, 1
      %p459 = por %p457, %p458
      %p460 = scmp.ne.s32.totalorder %s451, %s452
      %p461 = scmp.eq.s32.totalorder %s36, 0
      %p462 = por %p460, %p461
      %p463 = scmp.ne.s32.totalorder %s451, %s452
      %p464 = scmp.eq.s32.totalorder %s37, 1
      %p465 = por %p463, %p464
      %p467 = scmp.ne.s32.totalorder %s452, %s466
      %p468 = scmp.eq.s32.totalorder %s37, 0
      %p469 = por %p467, %p468
      %s470 = ssub.s32 %s38, %s50
      %p471 = scmp.eq.s32.totalorder %s470, 0
      %s473 = sadd.s32 %s472, 1
      %s474 = scalar_select %p471, %s472, %s473
      %p477 = pneg %p471
      %p478 = scmp.eq.s32.totalorder %s31, 1
      %p479 = por %p477, %p478
      %p480 = scmp.ne.s32.totalorder %s472, %s475
      %p481 = scmp.eq.s32.totalorder %s31, 0
      %p482 = por %p480, %p481
      %p483 = scmp.ne.s32.totalorder %s472, %s475
      %p484 = scmp.eq.s32.totalorder %s36, 1
      %p485 = por %p483, %p484
      %p486 = scmp.ne.s32.totalorder %s475, %s476
      %p487 = scmp.eq.s32.totalorder %s36, 0
      %p488 = por %p486, %p487
      %p489 = scmp.ne.s32.totalorder %s475, %s476
      %p490 = scmp.eq.s32.totalorder %s37, 1
      %p491 = por %p489, %p490
      %p493 = scmp.ne.s32.totalorder %s476, %s492
      %p494 = scmp.eq.s32.totalorder %s37, 0
      %p495 = por %p493, %p494
      %p496 = scmp.le.s32.totalorder 1, %s31
      %p497 = scmp.lt.s32.totalorder %s31, 3
      %p498 = pnand %p496, %p497
      %p499 = pneg %p498
      // Predicated region
      $region9: #{encoder_forward.3} parent=5 // pred_check
        _
      $region10: #{encoder_forward.3} parent=5 // pred_check_branch
        %501 = sbr.rel (%p498) target = $region12
      $region11: #{encoder_forward.3} parent=5 // pred_region
        %s502 = ssub.s32 %s31, 1
        // Predicated region
        $region13: #{encoder_forward.3} parent=11 // pred_check
          %p503 = pneg %p90
        $region14: #{encoder_forward.3} parent=11 // pred_check_branch
          %505 = sbr.rel (%p503) target = $region16
        $region15: #{encoder_forward.3} parent=11 // pred_region
          _
        $region16: #{encoder_forward.3} parent=11 // pred_fallthru
          _
        // Predicated region
        $region17: #{encoder_forward.3} parent=11 // pred_check
          %p506 = pneg %p111
        $region18: #{encoder_forward.3} parent=11 // pred_check_branch
          %508 = sbr.rel (%p506) target = $region20
        $region19: #{encoder_forward.3} parent=11 // pred_region
          _
        $region20: #{encoder_forward.3} parent=11 // pred_fallthru
          _
        // Predicated region
        $region21: #{encoder_forward.3} parent=11 // pred_check
          %p509 = pneg %p132
        $region22: #{encoder_forward.3} parent=11 // pred_check_branch
          %511 = sbr.rel (%p509) target = $region24
        $region23: #{encoder_forward.3} parent=11 // pred_region
          _
        $region24: #{encoder_forward.3} parent=11 // pred_fallthru
          _
        // Predicated region
        $region25: #{encoder_forward.3} parent=11 // pred_check
          %p512 = pneg %p153
        $region26: #{encoder_forward.3} parent=11 // pred_check_branch
          %514 = sbr.rel (%p512) target = $region28
        $region27: #{encoder_forward.3} parent=11 // pred_region
          _
        $region28: #{encoder_forward.3} parent=11 // pred_fallthru
          _
        // Predicated region
        $region29: #{encoder_forward.3} parent=11 // pred_check
          %p515 = pneg %p174
        $region30: #{encoder_forward.3} parent=11 // pred_check_branch
          %517 = sbr.rel (%p515) target = $region32
        $region31: #{encoder_forward.3} parent=11 // pred_region
          _
        $region32: #{encoder_forward.3} parent=11 // pred_fallthru
          _
        // Predicated region
        $region33: #{encoder_forward.3} parent=11 // pred_check
          %p518 = pneg %p195
        $region34: #{encoder_forward.3} parent=11 // pred_check_branch
          %520 = sbr.rel (%p518) target = $region36
        $region35: #{encoder_forward.3} parent=11 // pred_region
          _
        $region36: #{encoder_forward.3} parent=11 // pred_fallthru
          _
        // Predicated region
        $region37: #{encoder_forward.3} parent=11 // pred_check
          %p521 = pneg %p216
        $region38: #{encoder_forward.3} parent=11 // pred_check_branch
          %523 = sbr.rel (%p521) target = $region40
        $region39: #{encoder_forward.3} parent=11 // pred_region
          _
        $region40: #{encoder_forward.3} parent=11 // pred_fallthru
          _
        // Predicated region
        $region41: #{encoder_forward.3} parent=11 // pred_check
          %p524 = pneg %p237
        $region42: #{encoder_forward.3} parent=11 // pred_check_branch
          %526 = sbr.rel (%p524) target = $region44
        $region43: #{encoder_forward.3} parent=11 // pred_region
          _
        $region44: #{encoder_forward.3} parent=11 // pred_fallthru
          _
        // Predicated region
        $region45: #{encoder_forward.3} parent=11 // pred_check
          %p527 = pneg %p258
        $region46: #{encoder_forward.3} parent=11 // pred_check_branch
          %529 = sbr.rel (%p527) target = $region48
        $region47: #{encoder_forward.3} parent=11 // pred_region
          _
        $region48: #{encoder_forward.3} parent=11 // pred_fallthru
          _
        // Predicated region
        $region49: #{encoder_forward.3} parent=11 // pred_check
          %p530 = pneg %p279
        $region50: #{encoder_forward.3} parent=11 // pred_check_branch
          %532 = sbr.rel (%p530) target = $region52
        $region51: #{encoder_forward.3} parent=11 // pred_region
          _
        $region52: #{encoder_forward.3} parent=11 // pred_fallthru
          _
        // Predicated region
        $region53: #{encoder_forward.3} parent=11 // pred_check
          %p533 = pneg %p300
        $region54: #{encoder_forward.3} parent=11 // pred_check_branch
          %535 = sbr.rel (%p533) target = $region56
        $region55: #{encoder_forward.3} parent=11 // pred_region
          _
        $region56: #{encoder_forward.3} parent=11 // pred_fallthru
          _
        // Predicated region
        $region57: #{encoder_forward.3} parent=11 // pred_check
          %p536 = pneg %p321
        $region58: #{encoder_forward.3} parent=11 // pred_check_branch
          %538 = sbr.rel (%p536) target = $region60
        $region59: #{encoder_forward.3} parent=11 // pred_region
          _
        $region60: #{encoder_forward.3} parent=11 // pred_fallthru
          _
        // Predicated region
        $region61: #{encoder_forward.3} parent=11 // pred_check
          %p539 = pneg %p347
        $region62: #{encoder_forward.3} parent=11 // pred_check_branch
          %541 = sbr.rel (%p539) target = $region64
        $region63: #{encoder_forward.3} parent=11 // pred_region
          %p542 = scmp.lt.s32.totalorder %s41, 0
          %s543 = scalar_select %p542, %s41, 0
          %s544 = smul.addr %s543, 8
          %s545 = smul.addr %s544, 4
          %s546 = scalar_lea.vmem %s13, %s545
        $region64: #{encoder_forward.3} parent=11 // pred_fallthru
          _
        // Predicated region
        $region65: #{encoder_forward.3} parent=11 // pred_check
          %p547 = pneg %p373
        $region66: #{encoder_forward.3} parent=11 // pred_check_branch
          %549 = sbr.rel (%p547) target = $region68
        $region67: #{encoder_forward.3} parent=11 // pred_region
          %p550 = scmp.lt.s32.totalorder %s41, 0
          %s551 = scalar_select %p550, %s41, 0
          %s552 = smul.addr %s551, 2
          %s553 = scalar_lea.vmem %s14, %s552
        $region68: #{encoder_forward.3} parent=11 // pred_fallthru
          _
        // Predicated region
        $region69: #{encoder_forward.3} parent=11 // pred_check
          %p554 = pneg %p399
        $region70: #{encoder_forward.3} parent=11 // pred_check_branch
          %556 = sbr.rel (%p554) target = $region72
        $region71: #{encoder_forward.3} parent=11 // pred_region
          %p557 = scmp.lt.s32.totalorder %s41, 0
          %s558 = scalar_select %p557, %s41, 0
          %s559 = smul.addr %s558, 10
          %s560 = smul.addr %s559, 4
          %s561 = scalar_lea.vmem %s15, %s560
        $region72: #{encoder_forward.3} parent=11 // pred_fallthru
          _
        // Predicated region
        $region73: #{encoder_forward.3} parent=11 // pred_check
          %p562 = pneg %p420
        $region74: #{encoder_forward.3} parent=11 // pred_check_branch
          %564 = sbr.rel (%p562) target = $region76
        $region75: #{encoder_forward.3} parent=11 // pred_region
          _
        $region76: #{encoder_forward.3} parent=11 // pred_fallthru
          _
        // Predicated region
        $region77: #{encoder_forward.3} parent=11 // pred_check
          %p565 = pneg %p441
        $region78: #{encoder_forward.3} parent=11 // pred_check_branch
          %567 = sbr.rel (%p565) target = $region80
        $region79: #{encoder_forward.3} parent=11 // pred_region
          _
        $region80: #{encoder_forward.3} parent=11 // pred_fallthru
          _
        // Predicated region
        $region81: #{encoder_forward.3} parent=11 // pred_check
          %p568 = pneg %p462
        $region82: #{encoder_forward.3} parent=11 // pred_check_branch
          %570 = sbr.rel (%p568) target = $region84
        $region83: #{encoder_forward.3} parent=11 // pred_region
          _
        $region84: #{encoder_forward.3} parent=11 // pred_fallthru
          _
      $region12: #{encoder_forward.3} parent=5 // pred_fallthru
        _
      %p571 = scmp.lt.s32.totalorder %s31, 2
      // Predicated region
      $region85: #{encoder_forward.3} parent=5 // pred_check
        %p572 = pneg %p571
      $region86: #{encoder_forward.3} parent=5 // pred_check_branch
        %574 = sbr.rel (%p572) target = $region88
      $region87: #{encoder_forward.3} parent=5 // pred_region
        // Predicated region
        $region89: #{encoder_forward.3} parent=87 // pred_check
          %p575 = pneg %p63
        $region90: #{encoder_forward.3} parent=87 // pred_check_branch
          %577 = sbr.rel (%p575) target = $region92
        $region91: #{encoder_forward.3} parent=87 // pred_region
          %s578 = sand.u32 %s53, 1
          %s579 = scalar_lea.sflag [#allocation7], %s578
          %s580 = sand.u32 %s53, 1
          %s581 = smul.addr %s580, 8
          %s582 = scalar_lea.vmem [#allocation6], %s581
          %s584 = ssub.s32 128, 128
          %585 = vsyncadd %s579, %s584
          %s586 = smul.addr %s38, 128
          %s587 = scalar_lea.hbm %s0, %s586
          %s589 = sshll.u32 %s582, 4
          %s590 = int_to_ptr.vmem [resolvable:$true] %s589
          %592 = dma.hbm_to_vmem [thread:$0]  %s587, 128, %s590, %s579
        $region92: #{encoder_forward.3} parent=87 // pred_fallthru
          _
      $region88: #{encoder_forward.3} parent=5 // pred_fallthru
        _
      %p593 = scmp.le.s32.totalorder 1, %s31
      %p594 = scmp.lt.s32.totalorder %s31, 3
      %p595 = pnand %p593, %p594
      %p596 = pneg %p595
      // Predicated region
      $region93: #{encoder_forward.3} parent=5 // pred_check
        _
      $region94: #{encoder_forward.3} parent=5 // pred_check_branch
        %598 = sbr.rel (%p595) target = $region96
      $region95: #{encoder_forward.3} parent=5 // pred_region
        %s599 = ssub.s32 %s31, 1
        %s600 = sand.u32 %s56, 1
        %s601 = scalar_lea.sflag [#allocation7], %s600
        %s602 = sand.u32 %s56, 1
        %s603 = smul.addr %s602, 8
        %s604 = scalar_lea.vmem [#allocation6], %s603
        // Predicated region
        $region97: #{encoder_forward.3} parent=95 // pred_check
          %p605 = pneg %p69
        $region98: #{encoder_forward.3} parent=95 // pred_check_branch
          %607 = sbr.rel (%p605) target = $region100
        $region99: #{encoder_forward.3} parent=95 // pred_region
          %608 = dma.done %s601, 128
        $region100: #{encoder_forward.3} parent=95 // pred_fallthru
          _
        %s609 = sand.u32 %s56, 1
        %s610 = scalar_lea.sflag [#allocation7], %s609
        %s611 = sand.u32 %s56, 1
        %s612 = smul.addr %s611, 8
        %s613 = scalar_lea.vmem [#allocation6], %s612
        %p614 = pneg %p69
        %p615 = pneg %p66
        %p616 = pneg %p90
        %p617 = pneg %p87
        %p618 = pneg %p111
        %p619 = pneg %p108
        %p620 = pneg %p132
        %p621 = pneg %p129
        %p622 = pneg %p153
        %p623 = pneg %p150
        %p624 = pneg %p174
        %p625 = pneg %p171
        %p626 = pneg %p195
        %p627 = pneg %p192
        %p628 = pneg %p216
        %p629 = pneg %p213
        %p630 = pneg %p237
        %p631 = pneg %p234
        %p632 = pneg %p258
        %p633 = pneg %p255
        %p634 = pneg %p279
        %p635 = pneg %p276
        %p636 = pneg %p300
        %p637 = pneg %p297
        %p638 = pneg %p321
        %p639 = pneg %p318
        %p640 = scmp.lt.s32.totalorder %s41, 0
        %s641 = scalar_select %p640, %s41, 0
        %s642 = smul.addr %s641, 8
        %s643 = smul.addr %s642, 4
        %s644 = scalar_lea.vmem %s13, %s643
        %p645 = pneg %p347
        %p646 = pneg %p344
        %p647 = scmp.lt.s32.totalorder %s41, 0
        %s648 = scalar_select %p647, %s41, 0
        %s649 = smul.addr %s648, 2
        %s650 = scalar_lea.vmem %s14, %s649
        %p651 = pneg %p373
        %p652 = pneg %p370
        %p653 = scmp.lt.s32.totalorder %s41, 0
        %s654 = scalar_select %p653, %s41, 0
        %s655 = smul.addr %s654, 10
        %s656 = smul.addr %s655, 4
        %s657 = scalar_lea.vmem %s15, %s656
        %p658 = pneg %p399
        %p659 = pneg %p396
        %p660 = pneg %p420
        %p661 = pneg %p417
        %p662 = pneg %p441
        %p663 = pneg %p438
        %p664 = pneg %p462
        %p665 = pneg %p459
        %p666 = pneg %p488
        %p667 = pneg %p485
        %s668 = sand.u32 %s475, 1
        %s669 = scalar_lea.sflag [#allocation8], %s668
        %s670 = sand.u32 %s475, 1
        %s671 = smul.addr %s670, 8
        %s672 = scalar_lea.vmem [#allocation9], %s671
        %p673 = scmp.lt.s32.totalorder %s41, 0
        %s674 = scalar_select %p673, %s41, 0
        %s675 = smul.addr %s674, 8
        %s676 = smul.addr %s675, 4
        %s677 = scalar_lea.vmem %s13, %s676
        %p678 = scmp.lt.s32.totalorder %s41, 0
        %s679 = scalar_select %p678, %s41, 0
        %s680 = smul.addr %s679, 2
        %s681 = scalar_lea.vmem %s14, %s680
        %p682 = scmp.lt.s32.totalorder %s41, 0
        %s683 = scalar_select %p682, %s41, 0
        %s684 = smul.addr %s683, 10
        %s685 = smul.addr %s684, 4
        %s686 = scalar_lea.vmem %s15, %s685
        %p688 = scmp.eq.s32.totalorder %s41, 0
        // Predicated region
        $region101: #{encoder_forward.3} parent=95 // pred_check
          %p689 = pneg %p688
        $region102: #{encoder_forward.3} parent=95 // pred_check_branch
          %691 = sbr.rel (%p689) target = $region104
        $region103: #{encoder_forward.3} parent=95 // pred_region
          %v692 = vlaneseq
          %v693 = vshrl.u32 %v692, 7
          %v694 = vlaneseq
          %v695 = vand.u32 %v694, 127
          %vm696 = vcmp.ge.s32.totalorder %v693, %v695
          %v697 = vld [vmem:[%s604] sm:$0xff]
          %v698 = vld [vmem:[%s1] sm:$0x1]
          %v699 = vld [vmem:[%s2] sm:$0x1]
          %vm700 = vcmask 261120
          %v701 = vsel %vm700, %v697, 0.0
          %702 = vadd.xlane.f32.xlu0 %v701
          %v703 = vpop.xlane.xlu0 %702
          %v704 = vrcp.pop 32.0
          %v705 = vmul.f32 %v703, %v704
          %v706 = vsub.f32 %v697, %v705
          %v707 = vmul.f32 %v706, %v706
          %v708 = vsel %vm700, %v707, 0.0
          %709 = vadd.xlane.f32.xlu0 %v708
          %v710 = vpop.xlane.xlu0 %709
          %v711 = vmul.f32 %v710, %v704
          %v712 = vadd.f32 %v711, 1e-05
          %v713 = vrsqrt.pop %v712
          %v714 = vmul.f32 %v706, %v713
          %v716 = vlaneseq
          %v717 = vshrl.u32 %v716, 7
          %v718 = vsub.s32 0, %v717
          %v719 = vrot.slane %v698, %v718
          %v721 = vmul.f32 %v714, %v719
          %v723 = vlaneseq
          %v724 = vshrl.u32 %v723, 7
          %v725 = vsub.s32 0, %v724
          %v726 = vrot.slane %v699, %v725
          %v728 = vadd.f32 %v721, %v726
          %v729 = vrot.slane %v728, 7
          %vm730 = vcmp.ge.s32.totalorder %v693, 1
          %v731 = vsel %vm730, 1, 0
          %vm732 = vcmp.eq.s32.totalorder %v731, 1
          %v733 = vsel %vm732, %v729, 0.0
          %vm734 = vcmp.lt.s32.totalorder %v695, 16
          %v735 = vsel %vm734, 1, 0
          %vm736 = vcmp.eq.s32.totalorder %v735, 1
          %v737 = vsel %vm736, %v733, %v728
          %v738 = vpack.c.bf16 %v737, %v737
          %v739 = vld [vmem:[%s5] sm:$0xf]
          %v740 = vld [vmem:[%s5 + $0x4] sm:$0xf]
          %v741 = vld [vmem:[%s5 + $0x8] sm:$0xf]
          %v742 = vld [vmem:[%s5 + $0xc] sm:$0xf]
          %v743 = vld [vmem:[%s6] sm:$0x1]
          %v745 = vlaneseq
          %v746 = vshrl.u32 %v745, 7
          %v747 = vsub.s32 0, %v746
          %v748 = vrot.slane %v743, %v747
          %v754 = vunpack.c.l.b16 %v739
          %v755 = vunpack.c.l.b16 %v740
          %v756 = vunpack.c.l.b16 %v741
          %v757 = vunpack.c.l.b16 %v742
          %v758 = vpack.c.b16 %v755, %v754
          %v759 = vpack.c.b16 %v757, %v756
          %v763 = vsel %vm700, %v738, 0
          %765 = vmatprep.subr.bf16.mxu0 0
          %766 = vmatpush1.bf16.msra.mxu0 %v758
          %767 = vmatprep.subr.bf16.mxu0 0
          %768 = vmatpush1.bf16.msra.mxu0 %v759
          %769 = vmatprep.subr.bf16.mxu0 0
          %770 = vmatpush1.bf16.msra.mxu0 0
          %771 = vmatprep.subr.bf16.mxu0 0
          %772 = vmatpush1.bf16.msra.mxu0 0
          %773 = vmatprep.subr.bf16.mxu0 0
          %774 = vmatpush1.bf16.msra.mxu0 0
          %775 = vmatprep.subr.bf16.mxu0 0
          %776 = vmatpush1.bf16.msra.mxu0 0
          %777 = vmatprep.subr.bf16.mxu0 0
          %778 = vmatpush1.bf16.msra.mxu0 0
          %779 = vmatprep.subr.bf16.mxu0 0
          %780 = vmatpush1.bf16.msra.mxu0 0
          %781 = vmatprep.subr.bf16.mxu0 0
          %782 = vmatpush1.bf16.msra.mxu0 0
          %783 = vmatprep.subr.bf16.mxu0 0
          %784 = vmatpush1.bf16.msra.mxu0 0
          %785 = vmatprep.subr.bf16.mxu0 0
          %786 = vmatpush1.bf16.msra.mxu0 0
          %787 = vmatprep.subr.bf16.mxu0 0
          %788 = vmatpush1.bf16.msra.mxu0 0
          %789 = vmatprep.subr.bf16.mxu0 0
          %790 = vmatpush1.bf16.msra.mxu0 0
          %791 = vmatprep.subr.bf16.mxu0 0
          %792 = vmatpush1.bf16.msra.mxu0 0
          %793 = vmatprep.subr.bf16.mxu0 0
          %794 = vmatpush1.bf16.msra.mxu0 0
          %795 = vmatprep.subr.bf16.mxu0 0
          %796 = vmatpush1.bf16.msra.mxu0 0
          %797 = vmatprep.mubr.bf16.mxu0 0
          %798 = vmatmul.mubr.bf16.gmra.mrb[0].mxu0 %v763
          %v799 = vpop.f32.mrb[0].mxu0
          %v800 = vadd.f32 %v748, %v799
          %v801 = vpop.f32.mrb[0].mxu0
          %v802 = vpop.f32.mrb[0].mxu0
          %v803 = vpop.f32.mrb[0].mxu0
          %804 = vdwg.mxu0
          %v805 = vmax.f32 %v800, -60.0
          %v806 = vmin.f32 %v805, 30.0
          %v807 = vsel %vm700, %v806, -inf
          %v808 = vrot.slane %v807, 4
          %v809 = vmax.f32 %v807, %v808
          %v810 = vrot.slane %v809, 2
          %v811 = vmax.f32 %v809, %v810
          %v812 = vrot.slane %v811, 1
          %v813 = vmax.f32 %v811, %v812
          %v814 = vmin.f32 %v813, 20.0
          %v815 = vsub.f32 %v806, %v814
          %v816 = vmul.f32 %v815, 1.442695
          %v817 = vpow.pop %v816
          %v818 = vrot.slane %v817, 7
          %v819 = vsel %vm732, %v818, 0.0
          %v820 = vadd.f32 %v817, %v819
          %vm821 = vcmp.ge.s32.totalorder %v693, 2
          %v822 = vrot.slane %v820, 6
          %v823 = vsel %vm821, 1, 0
          %vm824 = vcmp.eq.s32.totalorder %v823, 1
          %v825 = vsel %vm824, %v822, 0.0
          %v826 = vadd.f32 %v820, %v825
          %vm827 = vcmp.ge.s32.totalorder %v693, 4
          %v828 = vrot.slane %v826, 4
          %v829 = vsel %vm827, 1, 0
          %vm830 = vcmp.eq.s32.totalorder %v829, 1
          %v831 = vsel %vm830, %v828, 0.0
          %v832 = vadd.f32 %v826, %v831
          %v833 = vxor.u32 %v800, 2147483648
          %v834 = vmul.f32 %v833, 1.442695
          %v835 = vpow.pop %v834
          %v836 = vadd.f32 %v835, 1.0
          %v837 = vrcp.pop %v836
          %v838 = vmul.f32 1.0, %v837
          %v839 = vrcp.pop %v832
          %841 = vrot.lane.b32.xlu0 %v839, 64
          %v842 = vpop.permute.xlu0 %841
          %v844 = vmul.f32 %v838, %v842
          %846 = vrot.lane.b32.xlu0 %v800, 96
          %v847 = vpop.permute.xlu0 %846
          %v849 = vmul.f32 %v817, %v847
          %v850 = vpack.c.bf16 %v849, %v849
          %v851 = vld [vmem:[%s7] sm:$0xff]
          %v852 = vld [vmem:[%s8] sm:$0xf]
          %v853 = vld [vmem:[%s9] sm:$0xff]
          %855 = vset.pattern.permute.xlu0 0
          %856 = vperm.xlu0 %855, %v851
          %v857 = vpop.permute.xlu0 %856
          %v859 = vrot.slane %v857, 7
          %v860 = vand.u32 %v695, 1
          %vm861 = vcmp.ne.s32.totalorder %v860, 0
          %v862 = vsel %vm861, 1, 0
          %vm863 = vcmp.eq.s32.totalorder %v862, 1
          %v864 = vsel %vm863, %v859, %v857
          %v865 = vrot.slane %v864, 6
          %v866 = vand.u32 %v695, 2
          %vm867 = vcmp.ne.s32.totalorder %v866, 0
          %v868 = vsel %vm867, 1, 0
          %vm869 = vcmp.eq.s32.totalorder %v868, 1
          %v870 = vsel %vm869, %v865, %v864
          %v871 = vrot.slane %v870, 4
          %v872 = vand.u32 %v695, 4
          %vm873 = vcmp.ne.s32.totalorder %v872, 0
          %v874 = vsel %vm873, 1, 0
          %vm875 = vcmp.eq.s32.totalorder %v874, 1
          %v876 = vsel %vm875, %v871, %v870
          %v877 = vsel %vm696, %v876, 0.0
          %v878 = vlaneseq
          %v879 = vshrl.u32 %v878, 7
          %v880 = vsub.s32 0, %v879
          %v881 = vrot.slane %v852, %v880
          %v882 = vmul.f32 %v877, %v881
          %884 = vset.pattern.permute.xlu0 0
          %885 = vperm.xlu0 %884, %v853
          %v886 = vpop.permute.xlu0 %885
          %v888 = vmul.f32 %v882, %v886
          %v889 = vpack.c.bf16 %v888, %v888
          %vm890 = vcmask 64512
          %v892 = vsel %vm890, %v889, 0
          %vm894 = vcmask 1043456
          %v896 = vsel %vm894, %v850, 0
          %898 = vmatprep.subr.bf16.mxu0 0
          %899 = vmatpush1.bf16.msra.mxu0 %v896
          %900 = vmatprep.subr.bf16.mxu0 0
          %901 = vmatpush1.bf16.msra.mxu0 0
          %902 = vmatprep.subr.bf16.mxu0 0
          %903 = vmatpush1.bf16.msra.mxu0 0
          %904 = vmatprep.subr.bf16.mxu0 0
          %905 = vmatpush1.bf16.msra.mxu0 0
          %906 = vmatprep.subr.bf16.mxu0 0
          %907 = vmatpush1.bf16.msra.mxu0 0
          %908 = vmatprep.subr.bf16.mxu0 0
          %909 = vmatpush1.bf16.msra.mxu0 0
          %910 = vmatprep.subr.bf16.mxu0 0
          %911 = vmatpush1.bf16.msra.mxu0 0
          %912 = vmatprep.subr.bf16.mxu0 0
          %913 = vmatpush1.bf16.msra.mxu0 0
          %914 = vmatprep.subr.bf16.mxu0 0
          %915 = vmatpush1.bf16.msra.mxu0 0
          %916 = vmatprep.subr.bf16.mxu0 0
          %917 = vmatpush1.bf16.msra.mxu0 0
          %918 = vmatprep.subr.bf16.mxu0 0
          %919 = vmatpush1.bf16.msra.mxu0 0
          %920 = vmatprep.subr.bf16.mxu0 0
          %921 = vmatpush1.bf16.msra.mxu0 0
          %922 = vmatprep.subr.bf16.mxu0 0
          %923 = vmatpush1.bf16.msra.mxu0 0
          %924 = vmatprep.subr.bf16.mxu0 0
          %925 = vmatpush1.bf16.msra.mxu0 0
          %926 = vmatprep.subr.bf16.mxu0 0
          %927 = vmatpush1.bf16.msra.mxu0 0
          %928 = vmatprep.subr.bf16.mxu0 0
          %929 = vmatpush1.bf16.msra.mxu0 0
          %930 = vmatprep.mubr.bf16.mxu0 0
          %931 = vmatmul.mubr.bf16.gmra.mrb[0].mxu0 %v892
          %v932 = vpop.f32.mrb[0].mxu0
          %v933 = vadd.f32 0.0, %v932
          %v934 = vpop.f32.mrb[0].mxu0
          %v935 = vpop.f32.mrb[0].mxu0
          %v936 = vpop.f32.mrb[0].mxu0
          %937 = vdwg.mxu0
          %939 = vrot.lane.b32.xlu0 %v933, 64
          %v940 = vpop.permute.xlu0 %939
          %v942 = vmul.f32 %v844, %v940
          %943 = vset.pattern.permute.xlu0 1
          %944 = vperm.xlu0 %943, %v851
          %v945 = vpop.permute.xlu0 %944
          %v947 = vrot.slane %v945, 7
          %v948 = vsel %vm863, %v947, %v945
          %v949 = vrot.slane %v948, 6
          %v950 = vsel %vm869, %v949, %v948
          %v951 = vrot.slane %v950, 4
          %v952 = vsel %vm875, %v951, %v950
          %v953 = vsel %vm696, %v952, 0.0
          %v954 = vlaneseq
          %v955 = vshrl.u32 %v954, 7
          %v956 = vsub.s32 1, %v955
          %v957 = vrot.slane %v852, %v956
          %v958 = vmul.f32 %v953, %v957
          %959 = vset.pattern.permute.xlu0 1
          %960 = vperm.xlu0 %959, %v853
          %v961 = vpop.permute.xlu0 %960
          %v963 = vmul.f32 %v958, %v961
          %v964 = vpack.c.bf16 %v963, %v963
          %966 = vrot.lane.b32.xlu0 %v850, 120
          %v967 = vpop.permute.xlu0 %966
          %v969 = vsel %vm890, %v964, 0
          %v972 = vsel %vm894, %v967, 0
          %974 = vmatprep.subr.bf16.mxu0 0
          %975 = vmatpush1.bf16.msra.mxu0 %v972
          %976 = vmatprep.subr.bf16.mxu0 0
          %977 = vmatpush1.bf16.msra.mxu0 0
          %978 = vmatprep.subr.bf16.mxu0 0
          %979 = vmatpush1.bf16.msra.mxu0 0
          %980 = vmatprep.subr.bf16.mxu0 0
          %981 = vmatpush1.bf16.msra.mxu0 0
          %982 = vmatprep.subr.bf16.mxu0 0
          %983 = vmatpush1.bf16.msra.mxu0 0
          %984 = vmatprep.subr.bf16.mxu0 0
          %985 = vmatpush1.bf16.msra.mxu0 0
          %986 = vmatprep.subr.bf16.mxu0 0
          %987 = vmatpush1.bf16.msra.mxu0 0
          %988 = vmatprep.subr.bf16.mxu0 0
          %989 = vmatpush1.bf16.msra.mxu0 0
          %990 = vmatprep.subr.bf16.mxu0 0
          %991 = vmatpush1.bf16.msra.mxu0 0
          %992 = vmatprep.subr.bf16.mxu0 0
          %993 = vmatpush1.bf16.msra.mxu0 0
          %994 = vmatprep.subr.bf16.mxu0 0
          %995 = vmatpush1.bf16.msra.mxu0 0
          %996 = vmatprep.subr.bf16.mxu0 0
          %997 = vmatpush1.bf16.msra.mxu0 0
          %998 = vmatprep.subr.bf16.mxu0 0
          %999 = vmatpush1.bf16.msra.mxu0 0
          %1000 = vmatprep.subr.bf16.mxu0 0
          %1001 = vmatpush1.bf16.msra.mxu0 0
          %1002 = vmatprep.subr.bf16.mxu0 0
          %1003 = vmatpush1.bf16.msra.mxu0 0
          %1004 = vmatprep.subr.bf16.mxu0 0
          %1005 = vmatpush1.bf16.msra.mxu0 0
          %1006 = vmatprep.mubr.bf16.mxu0 0
          %1007 = vmatmul.mubr.bf16.gmra.mrb[0].mxu0 %v969
          %v1008 = vpop.f32.mrb[0].mxu0
          %v1009 = vadd.f32 0.0, %v1008
          %v1010 = vpop.f32.mrb[0].mxu0
          %v1011 = vpop.f32.mrb[0].mxu0
          %v1012 = vpop.f32.mrb[0].mxu0
          %1013 = vdwg.mxu0
          %1015 = vrot.lane.b32.xlu0 %v1009, 72
          %v1016 = vpop.permute.xlu0 %1015
          %v1018 = vmul.f32 %v844, %v1016
          %1019 = vset.pattern.permute.xlu0 2
          %1020 = vperm.xlu0 %1019, %v851
          %v1021 = vpop.permute.xlu0 %1020
          %v1023 = vrot.slane %v1021, 7
          %v1024 = vsel %vm863, %v1023, %v1021
          %v1025 = vrot.slane %v1024, 6
          %v1026 = vsel %vm869, %v1025, %v1024
          %v1027 = vrot.slane %v1026, 4
          %v1028 = vsel %vm875, %v1027, %v1026
          %v1029 = vsel %vm696, %v1028, 0.0
          %v1030 = vlaneseq
          %v1031 = vshrl.u32 %v1030, 7
          %v1032 = vsub.s32 2, %v1031
          %v1033 = vrot.slane %v852, %v1032
          %v1034 = vmul.f32 %v1029, %v1033
          %1035 = vset.pattern.permute.xlu0 2
          %1036 = vperm.xlu0 %1035, %v853
          %v1037 = vpop.permute.xlu0 %1036
          %v1039 = vmul.f32 %v1034, %v1037
          %v1040 = vpack.c.bf16 %v1039, %v1039
          %1041 = vrot.lane.b32.xlu0 %v850, 112
          %v1042 = vpop.permute.xlu0 %1041
          %v1044 = vsel %vm890, %v1040, 0
          %v1047 = vsel %vm894, %v1042, 0
          %1049 = vmatprep.subr.bf16.mxu0 0
          %1050 = vmatpush1.bf16.msra.mxu0 %v1047
          %1051 = vmatprep.subr.bf16.mxu0 0
          %1052 = vmatpush1.bf16.msra.mxu0 0
          %1053 = vmatprep.subr.bf16.mxu0 0
          %1054 = vmatpush1.bf16.msra.mxu0 0
          %1055 = vmatprep.subr.bf16.mxu0 0
          %1056 = vmatpush1.bf16.msra.mxu0 0
          %1057 = vmatprep.subr.bf16.mxu0 0
          %1058 = vmatpush1.bf16.msra.mxu0 0
          %1059 = vmatprep.subr.bf16.mxu0 0
          %1060 = vmatpush1.bf16.msra.mxu0 0
          %1061 = vmatprep.subr.bf16.mxu0 0
          %1062 = vmatpush1.bf16.msra.mxu0 0
          %1063 = vmatprep.subr.bf16.mxu0 0
          %1064 = vmatpush1.bf16.msra.mxu0 0
          %1065 = vmatprep.subr.bf16.mxu0 0
          %1066 = vmatpush1.bf16.msra.mxu0 0
          %1067 = vmatprep.subr.bf16.mxu0 0
          %1068 = vmatpush1.bf16.msra.mxu0 0
          %1069 = vmatprep.subr.bf16.mxu0 0
          %1070 = vmatpush1.bf16.msra.mxu0 0
          %1071 = vmatprep.subr.bf16.mxu0 0
          %1072 = vmatpush1.bf16.msra.mxu0 0
          %1073 = vmatprep.subr.bf16.mxu0 0
          %1074 = vmatpush1.bf16.msra.mxu0 0
          %1075 = vmatprep.subr.bf16.mxu0 0
          %1076 = vmatpush1.bf16.msra.mxu0 0
          %1077 = vmatprep.subr.bf16.mxu0 0
          %1078 = vmatpush1.bf16.msra.mxu0 0
          %1079 = vmatprep.subr.bf16.mxu0 0
          %1080 = vmatpush1.bf16.msra.mxu0 0
          %1081 = vmatprep.mubr.bf16.mxu0 0
          %1082 = vmatmul.mubr.bf16.gmra.mrb[0].mxu0 %v1044
          %v1083 = vpop.f32.mrb[0].mxu0
          %v1084 = vadd.f32 0.0, %v1083
          %v1085 = vpop.f32.mrb[0].mxu0
          %v1086 = vpop.f32.mrb[0].mxu0
          %v1087 = vpop.f32.mrb[0].mxu0
          %1088 = vdwg.mxu0
          %1090 = vrot.lane.b32.xlu0 %v1084, 80
          %v1091 = vpop.permute.xlu0 %1090
          %v1093 = vmul.f32 %v844, %v1091
          %1094 = vset.pattern.permute.xlu0 3
          %1095 = vperm.xlu0 %1094, %v851
          %v1096 = vpop.permute.xlu0 %1095
          %v1098 = vrot.slane %v1096, 7
          %v1099 = vsel %vm863, %v1098, %v1096
          %v1100 = vrot.slane %v1099, 6
          %v1101 = vsel %vm869, %v1100, %v1099
          %v1102 = vrot.slane %v1101, 4
          %v1103 = vsel %vm875, %v1102, %v1101
          %v1104 = vsel %vm696, %v1103, 0.0
          %v1105 = vlaneseq
          %v1106 = vshrl.u32 %v1105, 7
          %v1107 = vsub.s32 3, %v1106
          %v1108 = vrot.slane %v852, %v1107
          %v1109 = vmul.f32 %v1104, %v1108
          %1110 = vset.pattern.permute.xlu0 3
          %1111 = vperm.xlu0 %1110, %v853
          %v1112 = vpop.permute.xlu0 %1111
          %v1114 = vmul.f32 %v1109, %v1112
          %v1115 = vpack.c.bf16 %v1114, %v1114
          %1116 = vrot.lane.b32.xlu0 %v850, 104
          %v1117 = vpop.permute.xlu0 %1116
          %v1119 = vsel %vm890, %v1115, 0
          %v1122 = vsel %vm894, %v1117, 0
          %1124 = vmatprep.subr.bf16.mxu0 0
          %1125 = vmatpush1.bf16.msra.mxu0 %v1122
          %1126 = vmatprep.subr.bf16.mxu0 0
          %1127 = vmatpush1.bf16.msra.mxu0 0
          %1128 = vmatprep.subr.bf16.mxu0 0
          %1129 = vmatpush1.bf16.msra.mxu0 0
          %1130 = vmatprep.subr.bf16.mxu0 0
          %1131 = vmatpush1.bf16.msra.mxu0 0
          %1132 = vmatprep.subr.bf16.mxu0 0
          %1133 = vmatpush1.bf16.msra.mxu0 0
          %1134 = vmatprep.subr.bf16.mxu0 0
          %1135 = vmatpush1.bf16.msra.mxu0 0
          %1136 = vmatprep.subr.bf16.mxu0 0
          %1137 = vmatpush1.bf16.msra.mxu0 0
          %1138 = vmatprep.subr.bf16.mxu0 0
          %1139 = vmatpush1.bf16.msra.mxu0 0
          %1140 = vmatprep.subr.bf16.mxu0 0
          %1141 = vmatpush1.bf16.msra.mxu0 0
          %1142 = vmatprep.subr.bf16.mxu0 0
          %1143 = vmatpush1.bf16.msra.mxu0 0
          %1144 = vmatprep.subr.bf16.mxu0 0
          %1145 = vmatpush1.bf16.msra.mxu0 0
          %1146 = vmatprep.subr.bf16.mxu0 0
          %1147 = vmatpush1.bf16.msra.mxu0 0
          %1148 = vmatprep.subr.bf16.mxu0 0
          %1149 = vmatpush1.bf16.msra.mxu0 0
          %1150 = vmatprep.subr.bf16.mxu0 0
          %1151 = vmatpush1.bf16.msra.mxu0 0
          %1152 = vmatprep.subr.bf16.mxu0 0
          %1153 = vmatpush1.bf16.msra.mxu0 0
          %1154 = vmatprep.subr.bf16.mxu0 0
          %1155 = vmatpush1.bf16.msra.mxu0 0
          %1156 = vmatprep.mubr.bf16.mxu0 0
          %1157 = vmatmul.mubr.bf16.gmra.mrb[0].mxu0 %v1119
          %v1158 = vpop.f32.mrb[0].mxu0
          %v1159 = vadd.f32 0.0, %v1158
          %v1160 = vpop.f32.mrb[0].mxu0
          %v1161 = vpop.f32.mrb[0].mxu0
          %v1162 = vpop.f32.mrb[0].mxu0
          %1163 = vdwg.mxu0
          %1165 = vrot.lane.b32.xlu0 %v1159, 88
          %v1166 = vpop.permute.xlu0 %1165
          %v1168 = vmul.f32 %v844, %v1166
          %1170 = vrot.lane.b32.xlu0 %v942, 64
          %v1171 = vpop.permute.xlu0 %1170
          %1174 = vrot.lane.b32.xlu0 %v1018, 64
          %v1175 = vpop.permute.xlu0 %1174
          %1178 = vrot.lane.b32.xlu0 %v1093, 64
          %v1179 = vpop.permute.xlu0 %1178
          %1182 = vrot.lane.b32.xlu0 %v1168, 64
          %v1183 = vpop.permute.xlu0 %1182
          %v1185 = vsel %vm890, %v1171, %v1175
          %vm1186 = vcmask 130048
          %v1187 = vsel %vm1186, %v1185, %v1179
          %vm1188 = vcmask 195584
          %v1189 = vsel %vm1188, %v1187, %v1183
          %v1190 = vpack.c.bf16 %v1189, %v1189
          %v1191 = vld [vmem:[%s10] sm:$0xf]
          %v1192 = vld [vmem:[%s10 + $0x4] sm:$0xf]
          %v1193 = vld [vmem:[%s10 + $0x8] sm:$0xf]
          %v1194 = vld [vmem:[%s10 + $0xc] sm:$0xf]
          %v1195 = vld [vmem:[%s11] sm:$0x1]
          %v1197 = vlaneseq
          %v1198 = vshrl.u32 %v1197, 7
          %v1199 = vsub.s32 0, %v1198
          %v1200 = vrot.slane %v1195, %v1199
          %v1206 = vunpack.c.l.b16 %v1191
          %v1207 = vunpack.c.l.b16 %v1192
          %v1208 = vunpack.c.l.b16 %v1193
          %v1209 = vunpack.c.l.b16 %v1194
          %v1210 = vpack.c.b16 %v1207, %v1206
          %v1211 = vpack.c.b16 %v1209, %v1208
          %v1215 = vsel %vm700, %v1190, 0
          %1217 = vmatprep.subr.bf16.mxu0 0
          %1218 = vmatpush1.bf16.msra.mxu0 %v1210
          %1219 = vmatprep.subr.bf16.mxu0 0
          %1220 = vmatpush1.bf16.msra.mxu0 %v1211
          %1221 = vmatprep.subr.bf16.mxu0 0
          %1222 = vmatpush1.bf16.msra.mxu0 0
          %1223 = vmatprep.subr.bf16.mxu0 0
          %1224 = vmatpush1.bf16.msra.mxu0 0
          %1225 = vmatprep.subr.bf16.mxu0 0
          %1226 = vmatpush1.bf16.msra.mxu0 0
          %1227 = vmatprep.subr.bf16.mxu0 0
          %1228 = vmatpush1.bf16.msra.mxu0 0
          %1229 = vmatprep.subr.bf16.mxu0 0
          %1230 = vmatpush1.bf16.msra.mxu0 0
          %1231 = vmatprep.subr.bf16.mxu0 0
          %1232 = vmatpush1.bf16.msra.mxu0 0
          %1233 = vmatprep.subr.bf16.mxu0 0
          %1234 = vmatpush1.bf16.msra.mxu0 0
          %1235 = vmatprep.subr.bf16.mxu0 0
          %1236 = vmatpush1.bf16.msra.mxu0 0
          %1237 = vmatprep.subr.bf16.mxu0 0
          %1238 = vmatpush1.bf16.msra.mxu0 0
          %1239 = vmatprep.subr.bf16.mxu0 0
          %1240 = vmatpush1.bf16.msra.mxu0 0
          %1241 = vmatprep.subr.bf16.mxu0 0
          %1242 = vmatpush1.bf16.msra.mxu0 0
          %1243 = vmatprep.subr.bf16.mxu0 0
          %1244 = vmatpush1.bf16.msra.mxu0 0
          %1245 = vmatprep.subr.bf16.mxu0 0
          %1246 = vmatpush1.bf16.msra.mxu0 0
          %1247 = vmatprep.subr.bf16.mxu0 0
          %1248 = vmatpush1.bf16.msra.mxu0 0
          %1249 = vmatprep.mubr.bf16.mxu0 0
          %1250 = vmatmul.mubr.bf16.gmra.mrb[0].mxu0 %v1215
          %v1251 = vpop.f32.mrb[0].mxu0
          %v1252 = vadd.f32 %v1200, %v1251
          %v1253 = vpop.f32.mrb[0].mxu0
          %v1254 = vpop.f32.mrb[0].mxu0
          %v1255 = vpop.f32.mrb[0].mxu0
          %1256 = vdwg.mxu0
          %v1257 = vld [vmem:[%s12] sm:$0xff]
          %1259 = vset.pattern.permute.xlu0 0
          %1260 = vperm.xlu0 %1259, %v1257
          %v1261 = vpop.permute.xlu0 %1260
          %v1263 = vmul.f32 %v1252, %v1261
          %v1264 = vadd.f32 %v697, %v1263
          %1265 = vst.msk [vmem:[#allocation2] sm:$0xff] %vm700, %v1264
          %v1266 = vld [vmem:[%s3] sm:$0x1]
          %v1267 = vld [vmem:[%s4] sm:$0x1]
          %v1268 = vsel %vm700, %v1264, 0.0
          %1269 = vadd.xlane.f32.xlu0 %v1268
          %v1270 = vpop.xlane.xlu0 %1269
          %v1271 = vmul.f32 %v1270, %v704
          %v1272 = vsub.f32 %v1264, %v1271
          %v1273 = vmul.f32 %v1272, %v1272
          %v1274 = vsel %vm700, %v1273, 0.0
          %1275 = vadd.xlane.f32.xlu0 %v1274
          %v1276 = vpop.xlane.xlu0 %1275
          %v1277 = vmul.f32 %v1276, %v704
          %v1278 = vadd.f32 %v1277, 1e-05
          %v1279 = vrsqrt.pop %v1278
          %v1280 = vmul.f32 %v1272, %v1279
          %v1282 = vlaneseq
          %v1283 = vshrl.u32 %v1282, 7
          %v1284 = vsub.s32 0, %v1283
          %v1285 = vrot.slane %v1266, %v1284
          %v1287 = vmul.f32 %v1280, %v1285
          %v1289 = vlaneseq
          %v1290 = vshrl.u32 %v1289, 7
          %v1291 = vsub.s32 0, %v1290
          %v1292 = vrot.slane %v1267, %v1291
          %v1294 = vadd.f32 %v1287, %v1292
          %v1295 = vrot.slane %v1294, 7
          %v1296 = vsel %vm732, %v1295, 0.0
          %v1297 = vsel %vm736, %v1296, %v1294
          %v1298 = vpack.c.bf16 %v1297, %v1297
          %vm1299 = vcmask 257024
          %1300 = vst.msk [vmem:[#allocation3] sm:$0xf] %vm1299, %v1298
          %v1301 = vld [vmem:[%s17] sm:$0xf]
          %v1302 = vld [vmem:[%s17 + $0x4] sm:$0xf]
          %v1303 = vld [vmem:[%s17 + $0x8] sm:$0xf]
          %v1304 = vld [vmem:[%s17 + $0xc] sm:$0xf]
          %v1305 = vld [vmem:[%s18] sm:$0x1]
          %v1307 = vlaneseq
          %v1308 = vshrl.u32 %v1307, 7
          %v1309 = vsub.s32 0, %v1308
          %v1310 = vrot.slane %v1305, %v1309
          %v1316 = vunpack.c.l.b16 %v1301
          %v1317 = vunpack.c.l.b16 %v1302
          %v1318 = vunpack.c.l.b16 %v1303
          %v1319 = vunpack.c.l.b16 %v1304
          %v1320 = vpack.c.b16 %v1317, %v1316
          %v1321 = vpack.c.b16 %v1319, %v1318
          %v1325 = vsel %vm700, %v1298, 0
          %1327 = vmatprep.subr.bf16.mxu0 0
          %1328 = vmatpush1.bf16.msra.mxu0 %v1320
          %1329 = vmatprep.subr.bf16.mxu0 0
          %1330 = vmatpush1.bf16.msra.mxu0 %v1321
          %1331 = vmatprep.subr.bf16.mxu0 0
          %1332 = vmatpush1.bf16.msra.mxu0 0
          %1333 = vmatprep.subr.bf16.mxu0 0
          %1334 = vmatpush1.bf16.msra.mxu0 0
          %1335 = vmatprep.subr.bf16.mxu0 0
          %1336 = vmatpush1.bf16.msra.mxu0 0
          %1337 = vmatprep.subr.bf16.mxu0 0
          %1338 = vmatpush1.bf16.msra.mxu0 0
          %1339 = vmatprep.subr.bf16.mxu0 0
          %1340 = vmatpush1.bf16.msra.mxu0 0
          %1341 = vmatprep.subr.bf16.mxu0 0
          %1342 = vmatpush1.bf16.msra.mxu0 0
          %1343 = vmatprep.subr.bf16.mxu0 0
          %1344 = vmatpush1.bf16.msra.mxu0 0
          %1345 = vmatprep.subr.bf16.mxu0 0
          %1346 = vmatpush1.bf16.msra.mxu0 0
          %1347 = vmatprep.subr.bf16.mxu0 0
          %1348 = vmatpush1.bf16.msra.mxu0 0
          %1349 = vmatprep.subr.bf16.mxu0 0
          %1350 = vmatpush1.bf16.msra.mxu0 0
          %1351 = vmatprep.subr.bf16.mxu0 0
          %1352 = vmatpush1.bf16.msra.mxu0 0
          %1353 = vmatprep.subr.bf16.mxu0 0
          %1354 = vmatpush1.bf16.msra.mxu0 0
          %1355 = vmatprep.subr.bf16.mxu0 0
          %1356 = vmatpush1.bf16.msra.mxu0 0
          %1357 = vmatprep.subr.bf16.mxu0 0
          %1358 = vmatpush1.bf16.msra.mxu0 0
          %1359 = vmatprep.mubr.bf16.mxu0 0
          %1360 = vmatmul.mubr.bf16.gmra.mrb[0].mxu0 %v1325
          %v1361 = vpop.f32.mrb[0].mxu0
          %v1362 = vadd.f32 %v1310, %v1361
          %v1363 = vpop.f32.mrb[0].mxu0
          %v1364 = vpop.f32.mrb[0].mxu0
          %v1365 = vpop.f32.mrb[0].mxu0
          %1366 = vdwg.mxu0
          %v1367 = vxor.u32 %v1362, 2147483648
          %v1368 = vmul.f32 %v1367, 1.442695
          %v1369 = vpow.pop %v1368
          %v1370 = vadd.f32 %v1369, 1.0
          %v1371 = vrcp.pop %v1370
          %v1372 = vmul.f32 1.0, %v1371
          %1373 = vst.msk [vmem:[#allocation4] sm:$0xff] %vm700, %v1372
          %1374 = vst.msk [vmem:[#allocation5] sm:$0xff] %vm700, 0.0
        $region104: #{encoder_forward.3} parent=95 // pred_fallthru
          _
        %v1375 = vld [vmem:[#allocation3] sm:$0xf]
        %v1376 = vld [vmem:[%s677] sm:$0xff]
        %v1377 = vld [vmem:[%s677 + $0x8] sm:$0xff]
        %v1378 = vld [vmem:[%s677 + $0x10] sm:$0xff]
        %v1379 = vld [vmem:[%s677 + $0x18] sm:$0xff]
        %v1380 = vld [vmem:[%s681] sm:$0x3]
        %v1382 = vlaneseq
        %v1383 = vshrl.u32 %v1382, 7
        %v1384 = vsub.s32 0, %v1383
        %v1385 = vrot.slane %v1380, %v1384
        %v1386 = vlaneseq
        %v1387 = vshrl.u32 %v1386, 7
        %v1388 = vsub.s32 1, %v1387
        %v1389 = vrot.slane %v1380, %v1388
        %v1396 = vunpack.c.l.b16 %v1376
        %v1397 = vunpack.c.h.b16 %v1376
        %v1398 = vunpack.c.l.b16 %v1377
        %v1399 = vunpack.c.h.b16 %v1377
        %v1400 = vunpack.c.l.b16 %v1378
        %v1401 = vunpack.c.h.b16 %v1378
        %v1402 = vunpack.c.l.b16 %v1379
        %v1403 = vunpack.c.h.b16 %v1379
        %v1404 = vpack.c.b16 %v1398, %v1396
        %v1405 = vpack.c.b16 %v1399, %v1397
        %v1406 = vpack.c.b16 %v1402, %v1400
        %v1407 = vpack.c.b16 %v1403, %v1401
        %vm1412 = vcmask 261120
        %v1414 = vsel %vm1412, %v1375, 0
        %1416 = vmatprep.subr.bf16.mxu0 %v1405
        %1417 = vmatpush1.bf16.msra.mxu0 %v1404
        %1418 = vmatprep.subr.bf16.mxu0 %v1407
        %1419 = vmatpush1.bf16.msra.mxu0 %v1406
        %1420 = vmatprep.subr.bf16.mxu0 0
        %1421 = vmatpush1.bf16.msra.mxu0 0
        %1422 = vmatprep.subr.bf16.mxu0 0
        %1423 = vmatpush1.bf16.msra.mxu0 0
        %1424 = vmatprep.subr.bf16.mxu0 0
        %1425 = vmatpush1.bf16.msra.mxu0 0
        %1426 = vmatprep.subr.bf16.mxu0 0
        %1427 = vmatpush1.bf16.msra.mxu0 0
        %1428 = vmatprep.subr.bf16.mxu0 0
        %1429 = vmatpush1.bf16.msra.mxu0 0
        %1430 = vmatprep.subr.bf16.mxu0 0
        %1431 = vmatpush1.bf16.msra.mxu0 0
        %1432 = vmatprep.subr.bf16.mxu0 0
        %1433 = vmatpush1.bf16.msra.mxu0 0
        %1434 = vmatprep.subr.bf16.mxu0 0
        %1435 = vmatpush1.bf16.msra.mxu0 0
        %1436 = vmatprep.subr.bf16.mxu0 0
        %1437 = vmatpush1.bf16.msra.mxu0 0
        %1438 = vmatprep.subr.bf16.mxu0 0
        %1439 = vmatpush1.bf16.msra.mxu0 0
        %1440 = vmatprep.subr.bf16.mxu0 0
        %1441 = vmatpush1.bf16.msra.mxu0 0
        %1442 = vmatprep.subr.bf16.mxu0 0
        %1443 = vmatpush1.bf16.msra.mxu0 0
        %1444 = vmatprep.subr.bf16.mxu0 0
        %1445 = vmatpush1.bf16.msra.mxu0 0
        %1446 = vmatprep.subr.bf16.mxu0 0
        %1447 = vmatpush1.bf16.msra.mxu0 0
        %1448 = vmatprep.mubr.bf16.mxu0 0
        %1449 = vmatmul.mubr.bf16.gmra.mrb[0].mxu0 %v1414
        %v1450 = vpop.f32.mrb[0].mxu0
        %v1451 = vadd.f32 %v1385, %v1450
        %v1452 = vpop.f32.mrb[0].mxu0
        %v1453 = vadd.f32 %v1389, %v1452
        %v1454 = vpop.f32.mrb[0].mxu0
        %v1455 = vpop.f32.mrb[0].mxu0
        %1456 = vdwg.mxu0
        %v1457 = vld [vmem:[#allocation5] sm:$0xff]
        %v1458 = vmax.f32 %v1451, 0.0
        %vm1459 = vcmp.ne.f32.partialorder %v1451, %v1451
        %v1460 = vadd.f32 %v1451, 0.0
        %v1461 = vand.u32 2147483647, %v1451
        %v1462 = vsub.f32 0.0, %v1461
        %v1463 = vmul.f32 %v1462, 1.442695
        %v1464 = vpow.pop %v1463
        %v1465 = vadd.f32 %v1464, 1.0
        %v1466 = vlog2.pop %v1465
        %v1467 = vmul.f32 %v1466, 0.6931472
        %v1468 = vmul.f32 -0.5, %v1464
        %v1469 = vadd.f32 %v1468, 1.0
        %v1470 = vmul.f32 %v1469, %v1464
        %v1471 = vand.u32 2147483647, %v1464
        %vm1472 = vcmp.lt.f32.partialorder %v1471, 0.0004427343
        %v1473 = vsel %vm1472, %v1470, %v1467
        %v1474 = vadd.f32 %v1458, %v1473
        %v1475 = vsel %vm1459, %v1460, %v1474
        %v1476 = vtanh.pop %v1475
        %v1477 = vmul.f32 %v1451, %v1476
        %1480 = vrot.lane.b32.xlu0 %v1451, 48
        %v1481 = vpop.permute.xlu0 %1480
        %1482 = vrot.lane.b32.xlu0 %v1453, 48
        %v1483 = vpop.permute.xlu0 %1482
        %vm1484 = vcmask 392192
        %v1485 = vsel %vm1484, %v1481, %v1483
        %v1487 = vmul.f32 %v1477, %v1485
        %v1488 = vpack.c.bf16 %v1487, %v1487
        %v1489 = vld [vmem:[%s686] sm:$0xf]
        %v1490 = vld [vmem:[%s686 + $0x4] sm:$0xf]
        %v1491 = vld [vmem:[%s686 + $0x8] sm:$0xf]
        %v1492 = vld [vmem:[%s686 + $0xc] sm:$0xf]
        %v1493 = vld [vmem:[%s686 + $0x10] sm:$0xf]
        %v1494 = vld [vmem:[%s686 + $0x14] sm:$0xf]
        %v1495 = vld [vmem:[%s686 + $0x18] sm:$0xf]
        %v1496 = vld [vmem:[%s686 + $0x1c] sm:$0xf]
        %v1497 = vld [vmem:[%s686 + $0x20] sm:$0xf]
        %v1498 = vld [vmem:[%s686 + $0x24] sm:$0xf]
        %v1509 = vunpack.c.l.b16 %v1489
        %v1510 = vunpack.c.l.b16 %v1490
        %v1511 = vunpack.c.l.b16 %v1491
        %v1512 = vunpack.c.l.b16 %v1492
        %v1513 = vunpack.c.l.b16 %v1493
        %v1514 = vunpack.c.l.b16 %v1494
        %v1515 = vunpack.c.l.b16 %v1495
        %v1516 = vunpack.c.l.b16 %v1496
        %v1517 = vunpack.c.l.b16 %v1497
        %v1518 = vunpack.c.l.b16 %v1498
        %v1519 = vpack.c.b16 %v1510, %v1509
        %v1520 = vpack.c.b16 %v1512, %v1511
        %v1521 = vpack.c.b16 %v1514, %v1513
        %v1522 = vpack.c.b16 %v1516, %v1515
        %v1523 = vpack.c.b16 %v1518, %v1517
        %vm1529 = vcmask 654336
        %v1531 = vsel %vm1529, %v1488, 0
        %1533 = vmatprep.subr.bf16.mxu0 0
        %1534 = vmatpush1.bf16.msra.mxu0 %v1519
        %1535 = vmatprep.subr.bf16.mxu0 0
        %1536 = vmatpush1.bf16.msra.mxu0 %v1520
        %1537 = vmatprep.subr.bf16.mxu0 0
        %1538 = vmatpush1.bf16.msra.mxu0 %v1521
        %1539 = vmatprep.subr.bf16.mxu0 0
        %1540 = vmatpush1.bf16.msra.mxu0 %v1522
        %1541 = vmatprep.subr.bf16.mxu0 0
        %1542 = vmatpush1.bf16.msra.mxu0 %v1523
        %1543 = vmatprep.subr.bf16.mxu0 0
        %1544 = vmatpush1.bf16.msra.mxu0 0
        %1545 = vmatprep.subr.bf16.mxu0 0
        %1546 = vmatpush1.bf16.msra.mxu0 0
        %1547 = vmatprep.subr.bf16.mxu0 0
        %1548 = vmatpush1.bf16.msra.mxu0 0
        %1549 = vmatprep.subr.bf16.mxu0 0
        %1550 = vmatpush1.bf16.msra.mxu0 0
        %1551 = vmatprep.subr.bf16.mxu0 0
        %1552 = vmatpush1.bf16.msra.mxu0 0
        %1553 = vmatprep.subr.bf16.mxu0 0
        %1554 = vmatpush1.bf16.msra.mxu0 0
        %1555 = vmatprep.subr.bf16.mxu0 0
        %1556 = vmatpush1.bf16.msra.mxu0 0
        %1557 = vmatprep.subr.bf16.mxu0 0
        %1558 = vmatpush1.bf16.msra.mxu0 0
        %1559 = vmatprep.subr.bf16.mxu0 0
        %1560 = vmatpush1.bf16.msra.mxu0 0
        %1561 = vmatprep.subr.bf16.mxu0 0
        %1562 = vmatpush1.bf16.msra.mxu0 0
        %1563 = vmatprep.subr.bf16.mxu0 0
        %1564 = vmatpush1.bf16.msra.mxu0 0
        %1565 = vmatprep.mubr.bf16.mxu0 0
        %1566 = vmatmul.mubr.bf16.gmra.mrb[0].mxu0 %v1531
        %v1567 = vpop.f32.mrb[0].mxu0
        %v1568 = vadd.f32 0.0, %v1567
        %v1569 = vpop.f32.mrb[0].mxu0
        %v1570 = vpop.f32.mrb[0].mxu0
        %v1571 = vpop.f32.mrb[0].mxu0
        %1572 = vdwg.mxu0
        %v1573 = vadd.f32 %v1457, %v1568
        %1574 = vst.msk [vmem:[#allocation5] sm:$0xff] %vm1412, %v1573
        // Predicated region
        $region105: #{encoder_forward.3} parent=95 // pred_check
          %p1575 = pneg %p688
        $region106: #{encoder_forward.3} parent=95 // pred_check_branch
          %1577 = sbr.rel (%p1575) target = $region108
        $region107: #{encoder_forward.3} parent=95 // pred_region
          %v1578 = vld [vmem:[#allocation2] sm:$0xff]
          %v1579 = vld [vmem:[#allocation4] sm:$0xff]
          %v1580 = vld [vmem:[#allocation5] sm:$0xff]
          %v1581 = vld [vmem:[%s16] sm:$0x1]
          %v1583 = vlaneseq
          %v1584 = vshrl.u32 %v1583, 7
          %v1585 = vsub.s32 0, %v1584
          %v1586 = vrot.slane %v1581, %v1585
          %v1588 = vadd.f32 %v1580, %v1586
          %v1589 = vmul.f32 %v1579, %v1588
          %v1590 = vadd.f32 %v1578, %v1589
          %1591 = vst.msk [vmem:[%s672] sm:$0xff] %vm1412, %v1590
        $region108: #{encoder_forward.3} parent=95 // pred_fallthru
          _
        %s1592 = sand.u32 %s475, 1
        %s1593 = scalar_lea.sflag [#allocation8], %s1592
        %s1594 = sand.u32 %s475, 1
        %s1595 = smul.addr %s1594, 8
        %s1596 = scalar_lea.vmem [#allocation9], %s1595
        // Predicated region
        $region109: #{encoder_forward.3} parent=95 // pred_check
          %p1597 = pneg %p485
        $region110: #{encoder_forward.3} parent=95 // pred_check_branch
          %1599 = sbr.rel (%p1597) target = $region112
        $region111: #{encoder_forward.3} parent=95 // pred_region
          %s1601 = ssub.s32 128, 128
          %1602 = vsyncadd %s1593, %s1601
          %s1603 = smul.addr %s40, 128
          %s1604 = scalar_lea.hbm %s19, %s1603
          %s1606 = sshll.u32 %s1596, 4
          %s1607 = int_to_ptr.vmem [resolvable:$true] %s1606
          %1609 = dma.vmem_to_hbm [thread:$0]  %s1607, 128, %s1604, %s1593
        $region112: #{encoder_forward.3} parent=95 // pred_fallthru
          _
      $region96: #{encoder_forward.3} parent=5 // pred_fallthru
        _
      %p1610 = scmp.le.s32.totalorder 2, %s31
      // Predicated region
      $region113: #{encoder_forward.3} parent=5 // pred_check
        %p1611 = pneg %p1610
      $region114: #{encoder_forward.3} parent=5 // pred_check_branch
        %1613 = sbr.rel (%p1611) target = $region116
      $region115: #{encoder_forward.3} parent=5 // pred_region
        %s1614 = ssub.s32 %s31, 2
        // Predicated region
        $region117: #{encoder_forward.3} parent=115 // pred_check
          %p1615 = pneg %p491
        $region118: #{encoder_forward.3} parent=115 // pred_check_branch
          %1617 = sbr.rel (%p1615) target = $region120
        $region119: #{encoder_forward.3} parent=115 // pred_region
          %s1618 = sand.u32 %s476, 1
          %s1619 = scalar_lea.sflag [#allocation8], %s1618
          %s1620 = sand.u32 %s476, 1
          %s1621 = smul.addr %s1620, 8
          %s1622 = scalar_lea.vmem [#allocation9], %s1621
          %1623 = dma.done %s1619, 128
        $region120: #{encoder_forward.3} parent=115 // pred_fallthru
          _
      $region116: #{encoder_forward.3} parent=5 // pred_fallthru
        _
    $region6: #{encoder_forward.3} parent=1 // loop_footer
      %s35 = sadd.s32 1, %s31
    $region7: #{encoder_forward.3} parent=1 // loop_footer_branch
      %30 = sbr.rel target = $region3
    $region8: #{encoder_forward.3} parent=1 // loop_exit
      _
    %1624 = vsyncpa [#allocation7], 1
    %s1625 = scalar_lea.sflag [#allocation7], 1
    %1626 = vsyncpa %s1625, 1
    %1627 = vsyncpa [#allocation8], 1
    %s1628 = scalar_lea.sflag [#allocation8], 1
    %1629 = vsyncpa %s1628, 1

// kernel: encoder_forward.2
$region0: #{encoder_forward.2}
  #allocation0 [shape = 'u32[]', space=smem, size = 0x4, offset = 0x4, fixed_abs, tag = 'smem constant byte address 0x4 - core index']
  #allocation1 [shape = 'u32[144,128]{1,0:T(1,128)}', space=vmem, size = 0x12000, scoped, tag = 'internal scratch']
  #allocation2 [shape = 'f32[8,32]{1,0:T(8,128)}', space=vmem, size = 0x1000, scoped, tag = 'scratch operand']
  #allocation3 [shape = 'bf16[8,32]{1,0:T(8,128)(2,1)}', space=vmem, size = 0x800, scoped, tag = 'scratch operand']
  #allocation4 [shape = 'f32[8,32]{1,0:T(8,128)}', space=vmem, size = 0x1000, scoped, tag = 'scratch operand']
  #allocation5 [shape = 'f32[8,32]{1,0:T(8,128)}', space=vmem, size = 0x1000, scoped, tag = 'scratch operand']
  %s0 = inlined_call_operand.vmem [shape: f32[2,8,32], index: 0, kind: input, shape index: {}, may-alias: {0,19}]
  %s1 = inlined_call_operand.vmem [shape: f32[1,32], index: 1, kind: input, shape index: {}]
  %s2 = inlined_call_operand.vmem [shape: f32[1,32], index: 2, kind: input, shape index: {}]
  %s3 = inlined_call_operand.vmem [shape: f32[1,32], index: 3, kind: input, shape index: {}]
  %s4 = inlined_call_operand.vmem [shape: f32[1,32], index: 4, kind: input, shape index: {}]
  %s5 = inlined_call_operand.vmem [shape: bf16[32,96], index: 5, kind: input, shape index: {}]
  %s6 = inlined_call_operand.vmem [shape: f32[1,96], index: 6, kind: input, shape index: {}]
  %s7 = inlined_call_operand.vmem [shape: f32[8,4], index: 7, kind: input, shape index: {}]
  %s8 = inlined_call_operand.vmem [shape: f32[4,8], index: 8, kind: input, shape index: {}]
  %s9 = inlined_call_operand.vmem [shape: f32[8,4], index: 9, kind: input, shape index: {}]
  %s10 = inlined_call_operand.vmem [shape: bf16[32,32], index: 10, kind: input, shape index: {}]
  %s11 = inlined_call_operand.vmem [shape: f32[1,32], index: 11, kind: input, shape index: {}]
  %s12 = inlined_call_operand.vmem [shape: f32[8,1], index: 12, kind: input, shape index: {}]
  %s13 = inlined_call_operand.vmem [shape: bf16[1,32,160], index: 13, kind: input, shape index: {}]
  %s14 = inlined_call_operand.vmem [shape: f32[1,1,160], index: 14, kind: input, shape index: {}]
  %s15 = inlined_call_operand.vmem [shape: bf16[1,80,32], index: 15, kind: input, shape index: {}]
  %s16 = inlined_call_operand.vmem [shape: f32[1,32], index: 16, kind: input, shape index: {}]
  %s17 = inlined_call_operand.vmem [shape: bf16[32,32], index: 17, kind: input, shape index: {}]
  %s18 = inlined_call_operand.vmem [shape: f32[1,32], index: 18, kind: input, shape index: {}]
  %s19 = inlined_call_operand.vmem [shape: f32[2,8,32], index: 19, kind: output, shape index: {}, may-alias: {0,19}]
  %s20 = sld [smem:[#allocation0]]
  $region117: #{encoder_forward.2} parent=0
    _
  %s22 = ssub.s32 1, %s20
  %s23 = scalar_select 0, %s22, %s20
  loop: start=0, step=1, limit=4
  $region2: #{encoder_forward.2} parent=0 // loop_pre_header
    _
  $region3: #{encoder_forward.2} parent=0 // loop_header
    %s25 = sphi 0, %s29
    %p26 = scmp.ge.s32.totalorder %s25, 4
    %s32 = sphi 0, %s44
    %s33 = sphi 0, %s40
    %s34 = sphi 0, %s32
    %s35 = sphi 0, %s33
    %s36 = sphi 0, %s34
    %s37 = sphi 0, %s35
    %s47 = sphi 0, %s49
    %s50 = sphi 0, %s47
    %s51 = sphi 0, %s50
    %s67 = sphi 0, %s51
    %s71 = sphi 0, %s71
    %s73 = sphi 0, %s71
    %s74 = sphi 0, %s73
    %s88 = sphi 0, %s74
    %s92 = sphi 0, %s92
    %s94 = sphi 0, %s92
    %s95 = sphi 0, %s94
    %s109 = sphi 0, %s95
    %s113 = sphi 0, %s113
    %s115 = sphi 0, %s113
    %s116 = sphi 0, %s115
    %s130 = sphi 0, %s116
    %s134 = sphi 0, %s134
    %s136 = sphi 0, %s134
    %s137 = sphi 0, %s136
    %s151 = sphi 0, %s137
    %s155 = sphi 0, %s155
    %s157 = sphi 0, %s155
    %s158 = sphi 0, %s157
    %s172 = sphi 0, %s158
    %s176 = sphi 0, %s176
    %s178 = sphi 0, %s176
    %s179 = sphi 0, %s178
    %s193 = sphi 0, %s179
    %s197 = sphi 0, %s197
    %s199 = sphi 0, %s197
    %s200 = sphi 0, %s199
    %s214 = sphi 0, %s200
    %s218 = sphi 0, %s218
    %s220 = sphi 0, %s218
    %s221 = sphi 0, %s220
    %s235 = sphi 0, %s221
    %s239 = sphi 0, %s239
    %s241 = sphi 0, %s239
    %s242 = sphi 0, %s241
    %s256 = sphi 0, %s242
    %s260 = sphi 0, %s260
    %s262 = sphi 0, %s260
    %s263 = sphi 0, %s262
    %s277 = sphi 0, %s263
    %s281 = sphi 0, %s281
    %s283 = sphi 0, %s281
    %s284 = sphi 0, %s283
    %s298 = sphi 0, %s284
    %s302 = sphi 0, %s302
    %s304 = sphi 0, %s302
    %s305 = sphi 0, %s304
    %s319 = sphi 0, %s305
    %s325 = sphi 0, %s327
    %s328 = sphi 0, %s325
    %s329 = sphi 0, %s328
    %s345 = sphi 0, %s329
    %s351 = sphi 0, %s353
    %s354 = sphi 0, %s351
    %s355 = sphi 0, %s354
    %s371 = sphi 0, %s355
    %s377 = sphi 0, %s379
    %s380 = sphi 0, %s377
    %s381 = sphi 0, %s380
    %s397 = sphi 0, %s381
    %s401 = sphi 0, %s401
    %s403 = sphi 0, %s401
    %s404 = sphi 0, %s403
    %s418 = sphi 0, %s404
    %s422 = sphi 0, %s422
    %s424 = sphi 0, %s422
    %s425 = sphi 0, %s424
    %s439 = sphi 0, %s425
    %s443 = sphi 0, %s443
    %s445 = sphi 0, %s443
    %s446 = sphi 0, %s445
    %s460 = sphi 0, %s446
    %s466 = sphi 0, %s468
    %s469 = sphi 0, %s466
    %s470 = sphi 0, %s469
    %s486 = sphi 0, %s470
  $region4: #{encoder_forward.2} parent=0 // loop_header_branch
    %28 = sbr.rel (%p26) target = $region8
  $region5: #{encoder_forward.2} parent=0 // loop_body
    %s30 = ssub.s32 %s25, 1
    %s31 = ssub.s32 %s25, 2
    %s38 = sadd.s32 1, %s33
    %p39 = scmp.ge.s32.totalorder %s38, 1
    %s40 = scalar_select %p39, 0, %s38
    %s41 = sadd.s32 1, %s32
    %s42 = scalar_select %p39, %s41, %s32
    %p43 = scmp.ge.s32.totalorder %s42, 2
    %s44 = scalar_select %p43, 0, %s42
    %s45 = ssub.s32 %s32, %s44
    %p46 = scmp.eq.s32.totalorder %s45, 0
    %s48 = sadd.s32 %s47, 1
    %s49 = scalar_select %p46, %s47, %s48
    %p52 = pneg %p46
    %p53 = scmp.eq.s32.totalorder %s25, 1
    %p54 = por %p52, %p53
    %p55 = scmp.ne.s32.totalorder %s47, %s50
    %p56 = scmp.eq.s32.totalorder %s25, 0
    %p57 = por %p55, %p56
    %p58 = scmp.ne.s32.totalorder %s47, %s50
    %p59 = scmp.eq.s32.totalorder %s30, 1
    %p60 = por %p58, %p59
    %p61 = scmp.ne.s32.totalorder %s50, %s51
    %p62 = scmp.eq.s32.totalorder %s30, 0
    %p63 = por %p61, %p62
    %p64 = scmp.ne.s32.totalorder %s50, %s51
    %p65 = scmp.eq.s32.totalorder %s31, 1
    %p66 = por %p64, %p65
    %p68 = scmp.ne.s32.totalorder %s51, %s67
    %p69 = scmp.eq.s32.totalorder %s31, 0
    %p70 = por %p68, %p69
    %s72 = sadd.s32 %s71, 1
    %p75 = scmp.eq.s32.totalorder %s25, 1
    %p76 = scmp.ne.s32.totalorder %s71, %s73
    %p77 = scmp.eq.s32.totalorder %s25, 0
    %p78 = por %p76, %p77
    %p79 = scmp.ne.s32.totalorder %s71, %s73
    %p80 = scmp.eq.s32.totalorder %s30, 1
    %p81 = por %p79, %p80
    %p82 = scmp.ne.s32.totalorder %s73, %s74
    %p83 = scmp.eq.s32.totalorder %s30, 0
    %p84 = por %p82, %p83
    %p85 = scmp.ne.s32.totalorder %s73, %s74
    %p86 = scmp.eq.s32.totalorder %s31, 1
    %p87 = por %p85, %p86
    %p89 = scmp.ne.s32.totalorder %s74, %s88
    %p90 = scmp.eq.s32.totalorder %s31, 0
    %p91 = por %p89, %p90
    %s93 = sadd.s32 %s92, 1
    %p96 = scmp.eq.s32.totalorder %s25, 1
    %p97 = scmp.ne.s32.totalorder %s92, %s94
    %p98 = scmp.eq.s32.totalorder %s25, 0
    %p99 = por %p97, %p98
    %p100 = scmp.ne.s32.totalorder %s92, %s94
    %p101 = scmp.eq.s32.totalorder %s30, 1
    %p102 = por %p100, %p101
    %p103 = scmp.ne.s32.totalorder %s94, %s95
    %p104 = scmp.eq.s32.totalorder %s30, 0
    %p105 = por %p103, %p104
    %p106 = scmp.ne.s32.totalorder %s94, %s95
    %p107 = scmp.eq.s32.totalorder %s31, 1
    %p108 = por %p106, %p107
    %p110 = scmp.ne.s32.totalorder %s95, %s109
    %p111 = scmp.eq.s32.totalorder %s31, 0
    %p112 = por %p110, %p111
    %s114 = sadd.s32 %s113, 1
    %p117 = scmp.eq.s32.totalorder %s25, 1
    %p118 = scmp.ne.s32.totalorder %s113, %s115
    %p119 = scmp.eq.s32.totalorder %s25, 0
    %p120 = por %p118, %p119
    %p121 = scmp.ne.s32.totalorder %s113, %s115
    %p122 = scmp.eq.s32.totalorder %s30, 1
    %p123 = por %p121, %p122
    %p124 = scmp.ne.s32.totalorder %s115, %s116
    %p125 = scmp.eq.s32.totalorder %s30, 0
    %p126 = por %p124, %p125
    %p127 = scmp.ne.s32.totalorder %s115, %s116
    %p128 = scmp.eq.s32.totalorder %s31, 1
    %p129 = por %p127, %p128
    %p131 = scmp.ne.s32.totalorder %s116, %s130
    %p132 = scmp.eq.s32.totalorder %s31, 0
    %p133 = por %p131, %p132
    %s135 = sadd.s32 %s134, 1
    %p138 = scmp.eq.s32.totalorder %s25, 1
    %p139 = scmp.ne.s32.totalorder %s134, %s136
    %p140 = scmp.eq.s32.totalorder %s25, 0
    %p141 = por %p139, %p140
    %p142 = scmp.ne.s32.totalorder %s134, %s136
    %p143 = scmp.eq.s32.totalorder %s30, 1
    %p144 = por %p142, %p143
    %p145 = scmp.ne.s32.totalorder %s136, %s137
    %p146 = scmp.eq.s32.totalorder %s30, 0
    %p147 = por %p145, %p146
    %p148 = scmp.ne.s32.totalorder %s136, %s137
    %p149 = scmp.eq.s32.totalorder %s31, 1
    %p150 = por %p148, %p149
    %p152 = scmp.ne.s32.totalorder %s137, %s151
    %p153 = scmp.eq.s32.totalorder %s31, 0
    %p154 = por %p152, %p153
    %s156 = sadd.s32 %s155, 1
    %p159 = scmp.eq.s32.totalorder %s25, 1
    %p160 = scmp.ne.s32.totalorder %s155, %s157
    %p161 = scmp.eq.s32.totalorder %s25, 0
    %p162 = por %p160, %p161
    %p163 = scmp.ne.s32.totalorder %s155, %s157
    %p164 = scmp.eq.s32.totalorder %s30, 1
    %p165 = por %p163, %p164
    %p166 = scmp.ne.s32.totalorder %s157, %s158
    %p167 = scmp.eq.s32.totalorder %s30, 0
    %p168 = por %p166, %p167
    %p169 = scmp.ne.s32.totalorder %s157, %s158
    %p170 = scmp.eq.s32.totalorder %s31, 1
    %p171 = por %p169, %p170
    %p173 = scmp.ne.s32.totalorder %s158, %s172
    %p174 = scmp.eq.s32.totalorder %s31, 0
    %p175 = por %p173, %p174
    %s177 = sadd.s32 %s176, 1
    %p180 = scmp.eq.s32.totalorder %s25, 1
    %p181 = scmp.ne.s32.totalorder %s176, %s178
    %p182 = scmp.eq.s32.totalorder %s25, 0
    %p183 = por %p181, %p182
    %p184 = scmp.ne.s32.totalorder %s176, %s178
    %p185 = scmp.eq.s32.totalorder %s30, 1
    %p186 = por %p184, %p185
    %p187 = scmp.ne.s32.totalorder %s178, %s179
    %p188 = scmp.eq.s32.totalorder %s30, 0
    %p189 = por %p187, %p188
    %p190 = scmp.ne.s32.totalorder %s178, %s179
    %p191 = scmp.eq.s32.totalorder %s31, 1
    %p192 = por %p190, %p191
    %p194 = scmp.ne.s32.totalorder %s179, %s193
    %p195 = scmp.eq.s32.totalorder %s31, 0
    %p196 = por %p194, %p195
    %s198 = sadd.s32 %s197, 1
    %p201 = scmp.eq.s32.totalorder %s25, 1
    %p202 = scmp.ne.s32.totalorder %s197, %s199
    %p203 = scmp.eq.s32.totalorder %s25, 0
    %p204 = por %p202, %p203
    %p205 = scmp.ne.s32.totalorder %s197, %s199
    %p206 = scmp.eq.s32.totalorder %s30, 1
    %p207 = por %p205, %p206
    %p208 = scmp.ne.s32.totalorder %s199, %s200
    %p209 = scmp.eq.s32.totalorder %s30, 0
    %p210 = por %p208, %p209
    %p211 = scmp.ne.s32.totalorder %s199, %s200
    %p212 = scmp.eq.s32.totalorder %s31, 1
    %p213 = por %p211, %p212
    %p215 = scmp.ne.s32.totalorder %s200, %s214
    %p216 = scmp.eq.s32.totalorder %s31, 0
    %p217 = por %p215, %p216
    %s219 = sadd.s32 %s218, 1
    %p222 = scmp.eq.s32.totalorder %s25, 1
    %p223 = scmp.ne.s32.totalorder %s218, %s220
    %p224 = scmp.eq.s32.totalorder %s25, 0
    %p225 = por %p223, %p224
    %p226 = scmp.ne.s32.totalorder %s218, %s220
    %p227 = scmp.eq.s32.totalorder %s30, 1
    %p228 = por %p226, %p227
    %p229 = scmp.ne.s32.totalorder %s220, %s221
    %p230 = scmp.eq.s32.totalorder %s30, 0
    %p231 = por %p229, %p230
    %p232 = scmp.ne.s32.totalorder %s220, %s221
    %p233 = scmp.eq.s32.totalorder %s31, 1
    %p234 = por %p232, %p233
    %p236 = scmp.ne.s32.totalorder %s221, %s235
    %p237 = scmp.eq.s32.totalorder %s31, 0
    %p238 = por %p236, %p237
    %s240 = sadd.s32 %s239, 1
    %p243 = scmp.eq.s32.totalorder %s25, 1
    %p244 = scmp.ne.s32.totalorder %s239, %s241
    %p245 = scmp.eq.s32.totalorder %s25, 0
    %p246 = por %p244, %p245
    %p247 = scmp.ne.s32.totalorder %s239, %s241
    %p248 = scmp.eq.s32.totalorder %s30, 1
    %p249 = por %p247, %p248
    %p250 = scmp.ne.s32.totalorder %s241, %s242
    %p251 = scmp.eq.s32.totalorder %s30, 0
    %p252 = por %p250, %p251
    %p253 = scmp.ne.s32.totalorder %s241, %s242
    %p254 = scmp.eq.s32.totalorder %s31, 1
    %p255 = por %p253, %p254
    %p257 = scmp.ne.s32.totalorder %s242, %s256
    %p258 = scmp.eq.s32.totalorder %s31, 0
    %p259 = por %p257, %p258
    %s261 = sadd.s32 %s260, 1
    %p264 = scmp.eq.s32.totalorder %s25, 1
    %p265 = scmp.ne.s32.totalorder %s260, %s262
    %p266 = scmp.eq.s32.totalorder %s25, 0
    %p267 = por %p265, %p266
    %p268 = scmp.ne.s32.totalorder %s260, %s262
    %p269 = scmp.eq.s32.totalorder %s30, 1
    %p270 = por %p268, %p269
    %p271 = scmp.ne.s32.totalorder %s262, %s263
    %p272 = scmp.eq.s32.totalorder %s30, 0
    %p273 = por %p271, %p272
    %p274 = scmp.ne.s32.totalorder %s262, %s263
    %p275 = scmp.eq.s32.totalorder %s31, 1
    %p276 = por %p274, %p275
    %p278 = scmp.ne.s32.totalorder %s263, %s277
    %p279 = scmp.eq.s32.totalorder %s31, 0
    %p280 = por %p278, %p279
    %s282 = sadd.s32 %s281, 1
    %p285 = scmp.eq.s32.totalorder %s25, 1
    %p286 = scmp.ne.s32.totalorder %s281, %s283
    %p287 = scmp.eq.s32.totalorder %s25, 0
    %p288 = por %p286, %p287
    %p289 = scmp.ne.s32.totalorder %s281, %s283
    %p290 = scmp.eq.s32.totalorder %s30, 1
    %p291 = por %p289, %p290
    %p292 = scmp.ne.s32.totalorder %s283, %s284
    %p293 = scmp.eq.s32.totalorder %s30, 0
    %p294 = por %p292, %p293
    %p295 = scmp.ne.s32.totalorder %s283, %s284
    %p296 = scmp.eq.s32.totalorder %s31, 1
    %p297 = por %p295, %p296
    %p299 = scmp.ne.s32.totalorder %s284, %s298
    %p300 = scmp.eq.s32.totalorder %s31, 0
    %p301 = por %p299, %p300
    %s303 = sadd.s32 %s302, 1
    %p306 = scmp.eq.s32.totalorder %s25, 1
    %p307 = scmp.ne.s32.totalorder %s302, %s304
    %p308 = scmp.eq.s32.totalorder %s25, 0
    %p309 = por %p307, %p308
    %p310 = scmp.ne.s32.totalorder %s302, %s304
    %p311 = scmp.eq.s32.totalorder %s30, 1
    %p312 = por %p310, %p311
    %p313 = scmp.ne.s32.totalorder %s304, %s305
    %p314 = scmp.eq.s32.totalorder %s30, 0
    %p315 = por %p313, %p314
    %p316 = scmp.ne.s32.totalorder %s304, %s305
    %p317 = scmp.eq.s32.totalorder %s31, 1
    %p318 = por %p316, %p317
    %p320 = scmp.ne.s32.totalorder %s305, %s319
    %p321 = scmp.eq.s32.totalorder %s31, 0
    %p322 = por %p320, %p321
    %s323 = ssub.s32 %s33, %s40
    %p324 = scmp.eq.s32.totalorder %s323, 0
    %s326 = sadd.s32 %s325, 1
    %s327 = scalar_select %p324, %s325, %s326
    %p330 = pneg %p324
    %p331 = scmp.eq.s32.totalorder %s25, 1
    %p332 = por %p330, %p331
    %p333 = scmp.ne.s32.totalorder %s325, %s328
    %p334 = scmp.eq.s32.totalorder %s25, 0
    %p335 = por %p333, %p334
    %p336 = scmp.ne.s32.totalorder %s325, %s328
    %p337 = scmp.eq.s32.totalorder %s30, 1
    %p338 = por %p336, %p337
    %p339 = scmp.ne.s32.totalorder %s328, %s329
    %p340 = scmp.eq.s32.totalorder %s30, 0
    %p341 = por %p339, %p340
    %p342 = scmp.ne.s32.totalorder %s328, %s329
    %p343 = scmp.eq.s32.totalorder %s31, 1
    %p344 = por %p342, %p343
    %p346 = scmp.ne.s32.totalorder %s329, %s345
    %p347 = scmp.eq.s32.totalorder %s31, 0
    %p348 = por %p346, %p347
    %s349 = ssub.s32 %s33, %s40
    %p350 = scmp.eq.s32.totalorder %s349, 0
    %s352 = sadd.s32 %s351, 1
    %s353 = scalar_select %p350, %s351, %s352
    %p356 = pneg %p350
    %p357 = scmp.eq.s32.totalorder %s25, 1
    %p358 = por %p356, %p357
    %p359 = scmp.ne.s32.totalorder %s351, %s354
    %p360 = scmp.eq.s32.totalorder %s25, 0
    %p361 = por %p359, %p360
    %p362 = scmp.ne.s32.totalorder %s351, %s354
    %p363 = scmp.eq.s32.totalorder %s30, 1
    %p364 = por %p362, %p363
    %p365 = scmp.ne.s32.totalorder %s354, %s355
    %p366 = scmp.eq.s32.totalorder %s30, 0
    %p367 = por %p365, %p366
    %p368 = scmp.ne.s32.totalorder %s354, %s355
    %p369 = scmp.eq.s32.totalorder %s31, 1
    %p370 = por %p368, %p369
    %p372 = scmp.ne.s32.totalorder %s355, %s371
    %p373 = scmp.eq.s32.totalorder %s31, 0
    %p374 = por %p372, %p373
    %s375 = ssub.s32 %s33, %s40
    %p376 = scmp.eq.s32.totalorder %s375, 0
    %s378 = sadd.s32 %s377, 1
    %s379 = scalar_select %p376, %s377, %s378
    %p382 = pneg %p376
    %p383 = scmp.eq.s32.totalorder %s25, 1
    %p384 = por %p382, %p383
    %p385 = scmp.ne.s32.totalorder %s377, %s380
    %p386 = scmp.eq.s32.totalorder %s25, 0
    %p387 = por %p385, %p386
    %p388 = scmp.ne.s32.totalorder %s377, %s380
    %p389 = scmp.eq.s32.totalorder %s30, 1
    %p390 = por %p388, %p389
    %p391 = scmp.ne.s32.totalorder %s380, %s381
    %p392 = scmp.eq.s32.totalorder %s30, 0
    %p393 = por %p391, %p392
    %p394 = scmp.ne.s32.totalorder %s380, %s381
    %p395 = scmp.eq.s32.totalorder %s31, 1
    %p396 = por %p394, %p395
    %p398 = scmp.ne.s32.totalorder %s381, %s397
    %p399 = scmp.eq.s32.totalorder %s31, 0
    %p400 = por %p398, %p399
    %s402 = sadd.s32 %s401, 1
    %p405 = scmp.eq.s32.totalorder %s25, 1
    %p406 = scmp.ne.s32.totalorder %s401, %s403
    %p407 = scmp.eq.s32.totalorder %s25, 0
    %p408 = por %p406, %p407
    %p409 = scmp.ne.s32.totalorder %s401, %s403
    %p410 = scmp.eq.s32.totalorder %s30, 1
    %p411 = por %p409, %p410
    %p412 = scmp.ne.s32.totalorder %s403, %s404
    %p413 = scmp.eq.s32.totalorder %s30, 0
    %p414 = por %p412, %p413
    %p415 = scmp.ne.s32.totalorder %s403, %s404
    %p416 = scmp.eq.s32.totalorder %s31, 1
    %p417 = por %p415, %p416
    %p419 = scmp.ne.s32.totalorder %s404, %s418
    %p420 = scmp.eq.s32.totalorder %s31, 0
    %p421 = por %p419, %p420
    %s423 = sadd.s32 %s422, 1
    %p426 = scmp.eq.s32.totalorder %s25, 1
    %p427 = scmp.ne.s32.totalorder %s422, %s424
    %p428 = scmp.eq.s32.totalorder %s25, 0
    %p429 = por %p427, %p428
    %p430 = scmp.ne.s32.totalorder %s422, %s424
    %p431 = scmp.eq.s32.totalorder %s30, 1
    %p432 = por %p430, %p431
    %p433 = scmp.ne.s32.totalorder %s424, %s425
    %p434 = scmp.eq.s32.totalorder %s30, 0
    %p435 = por %p433, %p434
    %p436 = scmp.ne.s32.totalorder %s424, %s425
    %p437 = scmp.eq.s32.totalorder %s31, 1
    %p438 = por %p436, %p437
    %p440 = scmp.ne.s32.totalorder %s425, %s439
    %p441 = scmp.eq.s32.totalorder %s31, 0
    %p442 = por %p440, %p441
    %s444 = sadd.s32 %s443, 1
    %p447 = scmp.eq.s32.totalorder %s25, 1
    %p448 = scmp.ne.s32.totalorder %s443, %s445
    %p449 = scmp.eq.s32.totalorder %s25, 0
    %p450 = por %p448, %p449
    %p451 = scmp.ne.s32.totalorder %s443, %s445
    %p452 = scmp.eq.s32.totalorder %s30, 1
    %p453 = por %p451, %p452
    %p454 = scmp.ne.s32.totalorder %s445, %s446
    %p455 = scmp.eq.s32.totalorder %s30, 0
    %p456 = por %p454, %p455
    %p457 = scmp.ne.s32.totalorder %s445, %s446
    %p458 = scmp.eq.s32.totalorder %s31, 1
    %p459 = por %p457, %p458
    %p461 = scmp.ne.s32.totalorder %s446, %s460
    %p462 = scmp.eq.s32.totalorder %s31, 0
    %p463 = por %p461, %p462
    %s464 = ssub.s32 %s32, %s44
    %p465 = scmp.eq.s32.totalorder %s464, 0
    %s467 = sadd.s32 %s466, 1
    %s468 = scalar_select %p465, %s466, %s467
    %p471 = pneg %p465
    %p472 = scmp.eq.s32.totalorder %s25, 1
    %p473 = por %p471, %p472
    %p474 = scmp.ne.s32.totalorder %s466, %s469
    %p475 = scmp.eq.s32.totalorder %s25, 0
    %p476 = por %p474, %p475
    %p477 = scmp.ne.s32.totalorder %s466, %s469
    %p478 = scmp.eq.s32.totalorder %s30, 1
    %p479 = por %p477, %p478
    %p480 = scmp.ne.s32.totalorder %s469, %s470
    %p481 = scmp.eq.s32.totalorder %s30, 0
    %p482 = por %p480, %p481
    %p483 = scmp.ne.s32.totalorder %s469, %s470
    %p484 = scmp.eq.s32.totalorder %s31, 1
    %p485 = por %p483, %p484
    %p487 = scmp.ne.s32.totalorder %s470, %s486
    %p488 = scmp.eq.s32.totalorder %s31, 0
    %p489 = por %p487, %p488
    %p490 = scmp.le.s32.totalorder 1, %s25
    %p491 = scmp.lt.s32.totalorder %s25, 3
    %p492 = pnand %p490, %p491
    %p493 = pneg %p492
    // Predicated region
    $region9: #{encoder_forward.2} parent=5 // pred_check
      _
    $region10: #{encoder_forward.2} parent=5 // pred_check_branch
      %495 = sbr.rel (%p492) target = $region12
    $region11: #{encoder_forward.2} parent=5 // pred_region
      %s496 = ssub.s32 %s25, 1
      // Predicated region
      $region13: #{encoder_forward.2} parent=11 // pred_check
        %p497 = pneg %p84
      $region14: #{encoder_forward.2} parent=11 // pred_check_branch
        %499 = sbr.rel (%p497) target = $region16
      $region15: #{encoder_forward.2} parent=11 // pred_region
        _
      $region16: #{encoder_forward.2} parent=11 // pred_fallthru
        _
      // Predicated region
      $region17: #{encoder_forward.2} parent=11 // pred_check
        %p500 = pneg %p105
      $region18: #{encoder_forward.2} parent=11 // pred_check_branch
        %502 = sbr.rel (%p500) target = $region20
      $region19: #{encoder_forward.2} parent=11 // pred_region
        _
      $region20: #{encoder_forward.2} parent=11 // pred_fallthru
        _
      // Predicated region
      $region21: #{encoder_forward.2} parent=11 // pred_check
        %p503 = pneg %p126
      $region22: #{encoder_forward.2} parent=11 // pred_check_branch
        %505 = sbr.rel (%p503) target = $region24
      $region23: #{encoder_forward.2} parent=11 // pred_region
        _
      $region24: #{encoder_forward.2} parent=11 // pred_fallthru
        _
      // Predicated region
      $region25: #{encoder_forward.2} parent=11 // pred_check
        %p506 = pneg %p147
      $region26: #{encoder_forward.2} parent=11 // pred_check_branch
        %508 = sbr.rel (%p506) target = $region28
      $region27: #{encoder_forward.2} parent=11 // pred_region
        _
      $region28: #{encoder_forward.2} parent=11 // pred_fallthru
        _
      // Predicated region
      $region29: #{encoder_forward.2} parent=11 // pred_check
        %p509 = pneg %p168
      $region30: #{encoder_forward.2} parent=11 // pred_check_branch
        %511 = sbr.rel (%p509) target = $region32
      $region31: #{encoder_forward.2} parent=11 // pred_region
        _
      $region32: #{encoder_forward.2} parent=11 // pred_fallthru
        _
      // Predicated region
      $region33: #{encoder_forward.2} parent=11 // pred_check
        %p512 = pneg %p189
      $region34: #{encoder_forward.2} parent=11 // pred_check_branch
        %514 = sbr.rel (%p512) target = $region36
      $region35: #{encoder_forward.2} parent=11 // pred_region
        _
      $region36: #{encoder_forward.2} parent=11 // pred_fallthru
        _
      // Predicated region
      $region37: #{encoder_forward.2} parent=11 // pred_check
        %p515 = pneg %p210
      $region38: #{encoder_forward.2} parent=11 // pred_check_branch
        %517 = sbr.rel (%p515) target = $region40
      $region39: #{encoder_forward.2} parent=11 // pred_region
        _
      $region40: #{encoder_forward.2} parent=11 // pred_fallthru
        _
      // Predicated region
      $region41: #{encoder_forward.2} parent=11 // pred_check
        %p518 = pneg %p231
      $region42: #{encoder_forward.2} parent=11 // pred_check_branch
        %520 = sbr.rel (%p518) target = $region44
      $region43: #{encoder_forward.2} parent=11 // pred_region
        _
      $region44: #{encoder_forward.2} parent=11 // pred_fallthru
        _
      // Predicated region
      $region45: #{encoder_forward.2} parent=11 // pred_check
        %p521 = pneg %p252
      $region46: #{encoder_forward.2} parent=11 // pred_check_branch
        %523 = sbr.rel (%p521) target = $region48
      $region47: #{encoder_forward.2} parent=11 // pred_region
        _
      $region48: #{encoder_forward.2} parent=11 // pred_fallthru
        _
      // Predicated region
      $region49: #{encoder_forward.2} parent=11 // pred_check
        %p524 = pneg %p273
      $region50: #{encoder_forward.2} parent=11 // pred_check_branch
        %526 = sbr.rel (%p524) target = $region52
      $region51: #{encoder_forward.2} parent=11 // pred_region
        _
      $region52: #{encoder_forward.2} parent=11 // pred_fallthru
        _
      // Predicated region
      $region53: #{encoder_forward.2} parent=11 // pred_check
        %p527 = pneg %p294
      $region54: #{encoder_forward.2} parent=11 // pred_check_branch
        %529 = sbr.rel (%p527) target = $region56
      $region55: #{encoder_forward.2} parent=11 // pred_region
        _
      $region56: #{encoder_forward.2} parent=11 // pred_fallthru
        _
      // Predicated region
      $region57: #{encoder_forward.2} parent=11 // pred_check
        %p530 = pneg %p315
      $region58: #{encoder_forward.2} parent=11 // pred_check_branch
        %532 = sbr.rel (%p530) target = $region60
      $region59: #{encoder_forward.2} parent=11 // pred_region
        _
      $region60: #{encoder_forward.2} parent=11 // pred_fallthru
        _
      // Predicated region
      $region61: #{encoder_forward.2} parent=11 // pred_check
        %p533 = pneg %p341
      $region62: #{encoder_forward.2} parent=11 // pred_check_branch
        %535 = sbr.rel (%p533) target = $region64
      $region63: #{encoder_forward.2} parent=11 // pred_region
        %p536 = scmp.lt.s32.totalorder %s35, 0
        %s537 = scalar_select %p536, %s35, 0
        %s538 = smul.addr %s537, 8
        %s539 = smul.addr %s538, 4
        %s540 = scalar_lea.vmem %s13, %s539
      $region64: #{encoder_forward.2} parent=11 // pred_fallthru
        _
      // Predicated region
      $region65: #{encoder_forward.2} parent=11 // pred_check
        %p541 = pneg %p367
      $region66: #{encoder_forward.2} parent=11 // pred_check_branch
        %543 = sbr.rel (%p541) target = $region68
      $region67: #{encoder_forward.2} parent=11 // pred_region
        %p544 = scmp.lt.s32.totalorder %s35, 0
        %s545 = scalar_select %p544, %s35, 0
        %s546 = smul.addr %s545, 2
        %s547 = scalar_lea.vmem %s14, %s546
      $region68: #{encoder_forward.2} parent=11 // pred_fallthru
        _
      // Predicated region
      $region69: #{encoder_forward.2} parent=11 // pred_check
        %p548 = pneg %p393
      $region70: #{encoder_forward.2} parent=11 // pred_check_branch
        %550 = sbr.rel (%p548) target = $region72
      $region71: #{encoder_forward.2} parent=11 // pred_region
        %p551 = scmp.lt.s32.totalorder %s35, 0
        %s552 = scalar_select %p551, %s35, 0
        %s553 = smul.addr %s552, 10
        %s554 = smul.addr %s553, 4
        %s555 = scalar_lea.vmem %s15, %s554
      $region72: #{encoder_forward.2} parent=11 // pred_fallthru
        _
      // Predicated region
      $region73: #{encoder_forward.2} parent=11 // pred_check
        %p556 = pneg %p414
      $region74: #{encoder_forward.2} parent=11 // pred_check_branch
        %558 = sbr.rel (%p556) target = $region76
      $region75: #{encoder_forward.2} parent=11 // pred_region
        _
      $region76: #{encoder_forward.2} parent=11 // pred_fallthru
        _
      // Predicated region
      $region77: #{encoder_forward.2} parent=11 // pred_check
        %p559 = pneg %p435
      $region78: #{encoder_forward.2} parent=11 // pred_check_branch
        %561 = sbr.rel (%p559) target = $region80
      $region79: #{encoder_forward.2} parent=11 // pred_region
        _
      $region80: #{encoder_forward.2} parent=11 // pred_fallthru
        _
      // Predicated region
      $region81: #{encoder_forward.2} parent=11 // pred_check
        %p562 = pneg %p456
      $region82: #{encoder_forward.2} parent=11 // pred_check_branch
        %564 = sbr.rel (%p562) target = $region84
      $region83: #{encoder_forward.2} parent=11 // pred_region
        _
      $region84: #{encoder_forward.2} parent=11 // pred_fallthru
        _
    $region12: #{encoder_forward.2} parent=5 // pred_fallthru
      _
    %p565 = scmp.lt.s32.totalorder %s25, 2
    // Predicated region
    $region85: #{encoder_forward.2} parent=5 // pred_check
      %p566 = pneg %p565
    $region86: #{encoder_forward.2} parent=5 // pred_check_branch
      %568 = sbr.rel (%p566) target = $region88
    $region87: #{encoder_forward.2} parent=5 // pred_region
      // Predicated region
      $region89: #{encoder_forward.2} parent=87 // pred_check
        %p569 = pneg %p57
      $region90: #{encoder_forward.2} parent=87 // pred_check_branch
        %571 = sbr.rel (%p569) target = $region92
      $region91: #{encoder_forward.2} parent=87 // pred_region
        %p572 = scmp.lt.s32.totalorder %s32, 1
        %s573 = scalar_select %p572, %s32, 1
        %s574 = smul.addr %s573, 8
        %s575 = scalar_lea.vmem %s0, %s574
      $region92: #{encoder_forward.2} parent=87 // pred_fallthru
        _
    $region88: #{encoder_forward.2} parent=5 // pred_fallthru
      _
    %p576 = scmp.le.s32.totalorder 1, %s25
    %p577 = scmp.lt.s32.totalorder %s25, 3
    %p578 = pnand %p576, %p577
    %p579 = pneg %p578
    // Predicated region
    $region93: #{encoder_forward.2} parent=5 // pred_check
      _
    $region94: #{encoder_forward.2} parent=5 // pred_check_branch
      %581 = sbr.rel (%p578) target = $region96
    $region95: #{encoder_forward.2} parent=5 // pred_region
      %s582 = ssub.s32 %s25, 1
      %p583 = scmp.lt.s32.totalorder %s34, 1
      %s584 = scalar_select %p583, %s34, 1
      %s585 = smul.addr %s584, 8
      %s586 = scalar_lea.vmem %s0, %s585
      %p587 = pneg %p63
      %p588 = pneg %p60
      %p589 = pneg %p84
      %p590 = pneg %p81
      %p591 = pneg %p105
      %p592 = pneg %p102
      %p593 = pneg %p126
      %p594 = pneg %p123
      %p595 = pneg %p147
      %p596 = pneg %p144
      %p597 = pneg %p168
      %p598 = pneg %p165
      %p599 = pneg %p189
      %p600 = pneg %p186
      %p601 = pneg %p210
      %p602 = pneg %p207
      %p603 = pneg %p231
      %p604 = pneg %p228
      %p605 = pneg %p252
      %p606 = pneg %p249
      %p607 = pneg %p273
      %p608 = pneg %p270
      %p609 = pneg %p294
      %p610 = pneg %p291
      %p611 = pneg %p315
      %p612 = pneg %p312
      %p613 = scmp.lt.s32.totalorder %s35, 0
      %s614 = scalar_select %p613, %s35, 0
      %s615 = smul.addr %s614, 8
      %s616 = smul.addr %s615, 4
      %s617 = scalar_lea.vmem %s13, %s616
      %p618 = pneg %p341
      %p619 = pneg %p338
      %p620 = scmp.lt.s32.totalorder %s35, 0
      %s621 = scalar_select %p620, %s35, 0
      %s622 = smul.addr %s621, 2
      %s623 = scalar_lea.vmem %s14, %s622
      %p624 = pneg %p367
      %p625 = pneg %p364
      %p626 = scmp.lt.s32.totalorder %s35, 0
      %s627 = scalar_select %p626, %s35, 0
      %s628 = smul.addr %s627, 10
      %s629 = smul.addr %s628, 4
      %s630 = scalar_lea.vmem %s15, %s629
      %p631 = pneg %p393
      %p632 = pneg %p390
      %p633 = pneg %p414
      %p634 = pneg %p411
      %p635 = pneg %p435
      %p636 = pneg %p432
      %p637 = pneg %p456
      %p638 = pneg %p453
      %p639 = pneg %p482
      %p640 = pneg %p479
      %p641 = scmp.lt.s32.totalorder %s34, 1
      %s642 = scalar_select %p641, %s34, 1
      %s643 = smul.addr %s642, 8
      %s644 = scalar_lea.vmem %s19, %s643
      %p645 = scmp.lt.s32.totalorder %s34, 1
      %s646 = scalar_select %p645, %s34, 1
      %s647 = smul.addr %s646, 8
      %s648 = scalar_lea.vmem %s0, %s647
      %p649 = scmp.lt.s32.totalorder %s35, 0
      %s650 = scalar_select %p649, %s35, 0
      %s651 = smul.addr %s650, 8
      %s652 = smul.addr %s651, 4
      %s653 = scalar_lea.vmem %s13, %s652
      %p654 = scmp.lt.s32.totalorder %s35, 0
      %s655 = scalar_select %p654, %s35, 0
      %s656 = smul.addr %s655, 2
      %s657 = scalar_lea.vmem %s14, %s656
      %p658 = scmp.lt.s32.totalorder %s35, 0
      %s659 = scalar_select %p658, %s35, 0
      %s660 = smul.addr %s659, 10
      %s661 = smul.addr %s660, 4
      %s662 = scalar_lea.vmem %s15, %s661
      %p663 = scmp.lt.s32.totalorder %s34, 1
      %s664 = scalar_select %p663, %s34, 1
      %s665 = smul.addr %s664, 8
      %s666 = scalar_lea.vmem %s19, %s665
      %p668 = scmp.eq.s32.totalorder %s35, 0
      // Predicated region
      $region97: #{encoder_forward.2} parent=95 // pred_check
        %p669 = pneg %p668
      $region98: #{encoder_forward.2} parent=95 // pred_check_branch
        %671 = sbr.rel (%p669) target = $region100
      $region99: #{encoder_forward.2} parent=95 // pred_region
        %v672 = vlaneseq
        %v673 = vshrl.u32 %v672, 7
        %v674 = vlaneseq
        %v675 = vand.u32 %v674, 127
        %vm676 = vcmp.ge.s32.totalorder %v673, %v675
        %v677 = vld [vmem:[%s648] sm:$0xff]
        %v678 = vld [vmem:[%s1] sm:$0x1]
        %v679 = vld [vmem:[%s2] sm:$0x1]
        %vm680 = vcmask 261120
        %v681 = vsel %vm680, %v677, 0.0
        %682 = vadd.xlane.f32.xlu0 %v681
        %v683 = vpop.xlane.xlu0 %682
        %v684 = vrcp.pop 32.0
        %v685 = vmul.f32 %v683, %v684
        %v686 = vsub.f32 %v677, %v685
        %v687 = vmul.f32 %v686, %v686
        %v688 = vsel %vm680, %v687, 0.0
        %689 = vadd.xlane.f32.xlu0 %v688
        %v690 = vpop.xlane.xlu0 %689
        %v691 = vmul.f32 %v690, %v684
        %v692 = vadd.f32 %v691, 1e-05
        %v693 = vrsqrt.pop %v692
        %v694 = vmul.f32 %v686, %v693
        %v696 = vlaneseq
        %v697 = vshrl.u32 %v696, 7
        %v698 = vsub.s32 0, %v697
        %v699 = vrot.slane %v678, %v698
        %v701 = vmul.f32 %v694, %v699
        %v703 = vlaneseq
        %v704 = vshrl.u32 %v703, 7
        %v705 = vsub.s32 0, %v704
        %v706 = vrot.slane %v679, %v705
        %v708 = vadd.f32 %v701, %v706
        %v709 = vrot.slane %v708, 7
        %vm710 = vcmp.ge.s32.totalorder %v673, 1
        %v711 = vsel %vm710, 1, 0
        %vm712 = vcmp.eq.s32.totalorder %v711, 1
        %v713 = vsel %vm712, %v709, 0.0
        %vm714 = vcmp.lt.s32.totalorder %v675, 16
        %v715 = vsel %vm714, 1, 0
        %vm716 = vcmp.eq.s32.totalorder %v715, 1
        %v717 = vsel %vm716, %v713, %v708
        %v718 = vpack.c.bf16 %v717, %v717
        %v719 = vld [vmem:[%s5] sm:$0xf]
        %v720 = vld [vmem:[%s5 + $0x4] sm:$0xf]
        %v721 = vld [vmem:[%s5 + $0x8] sm:$0xf]
        %v722 = vld [vmem:[%s5 + $0xc] sm:$0xf]
        %v723 = vld [vmem:[%s6] sm:$0x1]
        %v725 = vlaneseq
        %v726 = vshrl.u32 %v725, 7
        %v727 = vsub.s32 0, %v726
        %v728 = vrot.slane %v723, %v727
        %v734 = vunpack.c.l.b16 %v719
        %v735 = vunpack.c.l.b16 %v720
        %v736 = vunpack.c.l.b16 %v721
        %v737 = vunpack.c.l.b16 %v722
        %v738 = vpack.c.b16 %v735, %v734
        %v739 = vpack.c.b16 %v737, %v736
        %v743 = vsel %vm680, %v718, 0
        %745 = vmatprep.subr.bf16.mxu0 0
        %746 = vmatpush1.bf16.msra.mxu0 %v738
        %747 = vmatprep.subr.bf16.mxu0 0
        %748 = vmatpush1.bf16.msra.mxu0 %v739
        %749 = vmatprep.subr.bf16.mxu0 0
        %750 = vmatpush1.bf16.msra.mxu0 0
        %751 = vmatprep.subr.bf16.mxu0 0
        %752 = vmatpush1.bf16.msra.mxu0 0
        %753 = vmatprep.subr.bf16.mxu0 0
        %754 = vmatpush1.bf16.msra.mxu0 0
        %755 = vmatprep.subr.bf16.mxu0 0
        %756 = vmatpush1.bf16.msra.mxu0 0
        %757 = vmatprep.subr.bf16.mxu0 0
        %758 = vmatpush1.bf16.msra.mxu0 0
        %759 = vmatprep.subr.bf16.mxu0 0
        %760 = vmatpush1.bf16.msra.mxu0 0
        %761 = vmatprep.subr.bf16.mxu0 0
        %762 = vmatpush1.bf16.msra.mxu0 0
        %763 = vmatprep.subr.bf16.mxu0 0
        %764 = vmatpush1.bf16.msra.mxu0 0
        %765 = vmatprep.subr.bf16.mxu0 0
        %766 = vmatpush1.bf16.msra.mxu0 0
        %767 = vmatprep.subr.bf16.mxu0 0
        %768 = vmatpush1.bf16.msra.mxu0 0
        %769 = vmatprep.subr.bf16.mxu0 0
        %770 = vmatpush1.bf16.msra.mxu0 0
        %771 = vmatprep.subr.bf16.mxu0 0
        %772 = vmatpush1.bf16.msra.mxu0 0
        %773 = vmatprep.subr.bf16.mxu0 0
        %774 = vmatpush1.bf16.msra.mxu0 0
        %775 = vmatprep.subr.bf16.mxu0 0
        %776 = vmatpush1.bf16.msra.mxu0 0
        %777 = vmatprep.mubr.bf16.mxu0 0
        %778 = vmatmul.mubr.bf16.gmra.mrb[0].mxu0 %v743
        %v779 = vpop.f32.mrb[0].mxu0
        %v780 = vadd.f32 %v728, %v779
        %v781 = vpop.f32.mrb[0].mxu0
        %v782 = vpop.f32.mrb[0].mxu0
        %v783 = vpop.f32.mrb[0].mxu0
        %784 = vdwg.mxu0
        %v785 = vmax.f32 %v780, -60.0
        %v786 = vmin.f32 %v785, 30.0
        %v787 = vsel %vm680, %v786, -inf
        %v788 = vrot.slane %v787, 4
        %v789 = vmax.f32 %v787, %v788
        %v790 = vrot.slane %v789, 2
        %v791 = vmax.f32 %v789, %v790
        %v792 = vrot.slane %v791, 1
        %v793 = vmax.f32 %v791, %v792
        %v794 = vmin.f32 %v793, 20.0
        %v795 = vsub.f32 %v786, %v794
        %v796 = vmul.f32 %v795, 1.442695
        %v797 = vpow.pop %v796
        %v798 = vrot.slane %v797, 7
        %v799 = vsel %vm712, %v798, 0.0
        %v800 = vadd.f32 %v797, %v799
        %vm801 = vcmp.ge.s32.totalorder %v673, 2
        %v802 = vrot.slane %v800, 6
        %v803 = vsel %vm801, 1, 0
        %vm804 = vcmp.eq.s32.totalorder %v803, 1
        %v805 = vsel %vm804, %v802, 0.0
        %v806 = vadd.f32 %v800, %v805
        %vm807 = vcmp.ge.s32.totalorder %v673, 4
        %v808 = vrot.slane %v806, 4
        %v809 = vsel %vm807, 1, 0
        %vm810 = vcmp.eq.s32.totalorder %v809, 1
        %v811 = vsel %vm810, %v808, 0.0
        %v812 = vadd.f32 %v806, %v811
        %v813 = vxor.u32 %v780, 2147483648
        %v814 = vmul.f32 %v813, 1.442695
        %v815 = vpow.pop %v814
        %v816 = vadd.f32 %v815, 1.0
        %v817 = vrcp.pop %v816
        %v818 = vmul.f32 1.0, %v817
        %v819 = vrcp.pop %v812
        %821 = vrot.lane.b32.xlu0 %v819, 64
        %v822 = vpop.permute.xlu0 %821
        %v824 = vmul.f32 %v818, %v822
        %826 = vrot.lane.b32.xlu0 %v780, 96
        %v827 = vpop.permute.xlu0 %826
        %v829 = vmul.f32 %v797, %v827
        %v830 = vpack.c.bf16 %v829, %v829
        %v831 = vld [vmem:[%s7] sm:$0xff]
        %v832 = vld [vmem:[%s8] sm:$0xf]
        %v833 = vld [vmem:[%s9] sm:$0xff]
        %835 = vset.pattern.permute.xlu0 0
        %836 = vperm.xlu0 %835, %v831
        %v837 = vpop.permute.xlu0 %836
        %v839 = vrot.slane %v837, 7
        %v840 = vand.u32 %v675, 1
        %vm841 = vcmp.ne.s32.totalorder %v840, 0
        %v842 = vsel %vm841, 1, 0
        %vm843 = vcmp.eq.s32.totalorder %v842, 1
        %v844 = vsel %vm843, %v839, %v837
        %v845 = vrot.slane %v844, 6
        %v846 = vand.u32 %v675, 2
        %vm847 = vcmp.ne.s32.totalorder %v846, 0
        %v848 = vsel %vm847, 1, 0
        %vm849 = vcmp.eq.s32.totalorder %v848, 1
        %v850 = vsel %vm849, %v845, %v844
        %v851 = vrot.slane %v850, 4
        %v852 = vand.u32 %v675, 4
        %vm853 = vcmp.ne.s32.totalorder %v852, 0
        %v854 = vsel %vm853, 1, 0
        %vm855 = vcmp.eq.s32.totalorder %v854, 1
        %v856 = vsel %vm855, %v851, %v850
        %v857 = vsel %vm676, %v856, 0.0
        %v858 = vlaneseq
        %v859 = vshrl.u32 %v858, 7
        %v860 = vsub.s32 0, %v859
        %v861 = vrot.slane %v832, %v860
        %v862 = vmul.f32 %v857, %v861
        %864 = vset.pattern.permute.xlu0 0
        %865 = vperm.xlu0 %864, %v833
        %v866 = vpop.permute.xlu0 %865
        %v868 = vmul.f32 %v862, %v866
        %v869 = vpack.c.bf16 %v868, %v868
        %vm870 = vcmask 64512
        %v872 = vsel %vm870, %v869, 0
        %vm874 = vcmask 1043456
        %v876 = vsel %vm874, %v830, 0
        %878 = vmatprep.subr.bf16.mxu0 0
        %879 = vmatpush1.bf16.msra.mxu0 %v876
        %880 = vmatprep.subr.bf16.mxu0 0
        %881 = vmatpush1.bf16.msra.mxu0 0
        %882 = vmatprep.subr.bf16.mxu0 0
        %883 = vmatpush1.bf16.msra.mxu0 0
        %884 = vmatprep.subr.bf16.mxu0 0
        %885 = vmatpush1.bf16.msra.mxu0 0
        %886 = vmatprep.subr.bf16.mxu0 0
        %887 = vmatpush1.bf16.msra.mxu0 0
        %888 = vmatprep.subr.bf16.mxu0 0
        %889 = vmatpush1.bf16.msra.mxu0 0
        %890 = vmatprep.subr.bf16.mxu0 0
        %891 = vmatpush1.bf16.msra.mxu0 0
        %892 = vmatprep.subr.bf16.mxu0 0
        %893 = vmatpush1.bf16.msra.mxu0 0
        %894 = vmatprep.subr.bf16.mxu0 0
        %895 = vmatpush1.bf16.msra.mxu0 0
        %896 = vmatprep.subr.bf16.mxu0 0
        %897 = vmatpush1.bf16.msra.mxu0 0
        %898 = vmatprep.subr.bf16.mxu0 0
        %899 = vmatpush1.bf16.msra.mxu0 0
        %900 = vmatprep.subr.bf16.mxu0 0
        %901 = vmatpush1.bf16.msra.mxu0 0
        %902 = vmatprep.subr.bf16.mxu0 0
        %903 = vmatpush1.bf16.msra.mxu0 0
        %904 = vmatprep.subr.bf16.mxu0 0
        %905 = vmatpush1.bf16.msra.mxu0 0
        %906 = vmatprep.subr.bf16.mxu0 0
        %907 = vmatpush1.bf16.msra.mxu0 0
        %908 = vmatprep.subr.bf16.mxu0 0
        %909 = vmatpush1.bf16.msra.mxu0 0
        %910 = vmatprep.mubr.bf16.mxu0 0
        %911 = vmatmul.mubr.bf16.gmra.mrb[0].mxu0 %v872
        %v912 = vpop.f32.mrb[0].mxu0
        %v913 = vadd.f32 0.0, %v912
        %v914 = vpop.f32.mrb[0].mxu0
        %v915 = vpop.f32.mrb[0].mxu0
        %v916 = vpop.f32.mrb[0].mxu0
        %917 = vdwg.mxu0
        %919 = vrot.lane.b32.xlu0 %v913, 64
        %v920 = vpop.permute.xlu0 %919
        %v922 = vmul.f32 %v824, %v920
        %923 = vset.pattern.permute.xlu0 1
        %924 = vperm.xlu0 %923, %v831
        %v925 = vpop.permute.xlu0 %924
        %v927 = vrot.slane %v925, 7
        %v928 = vsel %vm843, %v927, %v925
        %v929 = vrot.slane %v928, 6
        %v930 = vsel %vm849, %v929, %v928
        %v931 = vrot.slane %v930, 4
        %v932 = vsel %vm855, %v931, %v930
        %v933 = vsel %vm676, %v932, 0.0
        %v934 = vlaneseq
        %v935 = vshrl.u32 %v934, 7
        %v936 = vsub.s32 1, %v935
        %v937 = vrot.slane %v832, %v936
        %v938 = vmul.f32 %v933, %v937
        %939 = vset.pattern.permute.xlu0 1
        %940 = vperm.xlu0 %939, %v833
        %v941 = vpop.permute.xlu0 %940
        %v943 = vmul.f32 %v938, %v941
        %v944 = vpack.c.bf16 %v943, %v943
        %946 = vrot.lane.b32.xlu0 %v830, 120
        %v947 = vpop.permute.xlu0 %946
        %v949 = vsel %vm870, %v944, 0
        %v952 = vsel %vm874, %v947, 0
        %954 = vmatprep.subr.bf16.mxu0 0
        %955 = vmatpush1.bf16.msra.mxu0 %v952
        %956 = vmatprep.subr.bf16.mxu0 0
        %957 = vmatpush1.bf16.msra.mxu0 0
        %958 = vmatprep.subr.bf16.mxu0 0
        %959 = vmatpush1.bf16.msra.mxu0 0
        %960 = vmatprep.subr.bf16.mxu0 0
        %961 = vmatpush1.bf16.msra.mxu0 0
        %962 = vmatprep.subr.bf16.mxu0 0
        %963 = vmatpush1.bf16.msra.mxu0 0
        %964 = vmatprep.subr.bf16.mxu0 0
        %965 = vmatpush1.bf16.msra.mxu0 0
        %966 = vmatprep.subr.bf16.mxu0 0
        %967 = vmatpush1.bf16.msra.mxu0 0
        %968 = vmatprep.subr.bf16.mxu0 0
        %969 = vmatpush1.bf16.msra.mxu0 0
        %970 = vmatprep.subr.bf16.mxu0 0
        %971 = vmatpush1.bf16.msra.mxu0 0
        %972 = vmatprep.subr.bf16.mxu0 0
        %973 = vmatpush1.bf16.msra.mxu0 0
        %974 = vmatprep.subr.bf16.mxu0 0
        %975 = vmatpush1.bf16.msra.mxu0 0
        %976 = vmatprep.subr.bf16.mxu0 0
        %977 = vmatpush1.bf16.msra.mxu0 0
        %978 = vmatprep.subr.bf16.mxu0 0
        %979 = vmatpush1.bf16.msra.mxu0 0
        %980 = vmatprep.subr.bf16.mxu0 0
        %981 = vmatpush1.bf16.msra.mxu0 0
        %982 = vmatprep.subr.bf16.mxu0 0
        %983 = vmatpush1.bf16.msra.mxu0 0
        %984 = vmatprep.subr.bf16.mxu0 0
        %985 = vmatpush1.bf16.msra.mxu0 0
        %986 = vmatprep.mubr.bf16.mxu0 0
        %987 = vmatmul.mubr.bf16.gmra.mrb[0].mxu0 %v949
        %v988 = vpop.f32.mrb[0].mxu0
        %v989 = vadd.f32 0.0, %v988
        %v990 = vpop.f32.mrb[0].mxu0
        %v991 = vpop.f32.mrb[0].mxu0
        %v992 = vpop.f32.mrb[0].mxu0
        %993 = vdwg.mxu0
        %995 = vrot.lane.b32.xlu0 %v989, 72
        %v996 = vpop.permute.xlu0 %995
        %v998 = vmul.f32 %v824, %v996
        %999 = vset.pattern.permute.xlu0 2
        %1000 = vperm.xlu0 %999, %v831
        %v1001 = vpop.permute.xlu0 %1000
        %v1003 = vrot.slane %v1001, 7
        %v1004 = vsel %vm843, %v1003, %v1001
        %v1005 = vrot.slane %v1004, 6
        %v1006 = vsel %vm849, %v1005, %v1004
        %v1007 = vrot.slane %v1006, 4
        %v1008 = vsel %vm855, %v1007, %v1006
        %v1009 = vsel %vm676, %v1008, 0.0
        %v1010 = vlaneseq
        %v1011 = vshrl.u32 %v1010, 7
        %v1012 = vsub.s32 2, %v1011
        %v1013 = vrot.slane %v832, %v1012
        %v1014 = vmul.f32 %v1009, %v1013
        %1015 = vset.pattern.permute.xlu0 2
        %1016 = vperm.xlu0 %1015, %v833
        %v1017 = vpop.permute.xlu0 %1016
        %v1019 = vmul.f32 %v1014, %v1017
        %v1020 = vpack.c.bf16 %v1019, %v1019
        %1021 = vrot.lane.b32.xlu0 %v830, 112
        %v1022 = vpop.permute.xlu0 %1021
        %v1024 = vsel %vm870, %v1020, 0
        %v1027 = vsel %vm874, %v1022, 0
        %1029 = vmatprep.subr.bf16.mxu0 0
        %1030 = vmatpush1.bf16.msra.mxu0 %v1027
        %1031 = vmatprep.subr.bf16.mxu0 0
        %1032 = vmatpush1.bf16.msra.mxu0 0
        %1033 = vmatprep.subr.bf16.mxu0 0
        %1034 = vmatpush1.bf16.msra.mxu0 0
        %1035 = vmatprep.subr.bf16.mxu0 0
        %1036 = vmatpush1.bf16.msra.mxu0 0
        %1037 = vmatprep.subr.bf16.mxu0 0
        %1038 = vmatpush1.bf16.msra.mxu0 0
        %1039 = vmatprep.subr.bf16.mxu0 0
        %1040 = vmatpush1.bf16.msra.mxu0 0
        %1041 = vmatprep.subr.bf16.mxu0 0
        %1042 = vmatpush1.bf16.msra.mxu0 0
        %1043 = vmatprep.subr.bf16.mxu0 0
        %1044 = vmatpush1.bf16.msra.mxu0 0
        %1045 = vmatprep.subr.bf16.mxu0 0
        %1046 = vmatpush1.bf16.msra.mxu0 0
        %1047 = vmatprep.subr.bf16.mxu0 0
        %1048 = vmatpush1.bf16.msra.mxu0 0
        %1049 = vmatprep.subr.bf16.mxu0 0
        %1050 = vmatpush1.bf16.msra.mxu0 0
        %1051 = vmatprep.subr.bf16.mxu0 0
        %1052 = vmatpush1.bf16.msra.mxu0 0
        %1053 = vmatprep.subr.bf16.mxu0 0
        %1054 = vmatpush1.bf16.msra.mxu0 0
        %1055 = vmatprep.subr.bf16.mxu0 0
        %1056 = vmatpush1.bf16.msra.mxu0 0
        %1057 = vmatprep.subr.bf16.mxu0 0
        %1058 = vmatpush1.bf16.msra.mxu0 0
        %1059 = vmatprep.subr.bf16.mxu0 0
        %1060 = vmatpush1.bf16.msra.mxu0 0
        %1061 = vmatprep.mubr.bf16.mxu0 0
        %1062 = vmatmul.mubr.bf16.gmra.mrb[0].mxu0 %v1024
        %v1063 = vpop.f32.mrb[0].mxu0
        %v1064 = vadd.f32 0.0, %v1063
        %v1065 = vpop.f32.mrb[0].mxu0
        %v1066 = vpop.f32.mrb[0].mxu0
        %v1067 = vpop.f32.mrb[0].mxu0
        %1068 = vdwg.mxu0
        %1070 = vrot.lane.b32.xlu0 %v1064, 80
        %v1071 = vpop.permute.xlu0 %1070
        %v1073 = vmul.f32 %v824, %v1071
        %1074 = vset.pattern.permute.xlu0 3
        %1075 = vperm.xlu0 %1074, %v831
        %v1076 = vpop.permute.xlu0 %1075
        %v1078 = vrot.slane %v1076, 7
        %v1079 = vsel %vm843, %v1078, %v1076
        %v1080 = vrot.slane %v1079, 6
        %v1081 = vsel %vm849, %v1080, %v1079
        %v1082 = vrot.slane %v1081, 4
        %v1083 = vsel %vm855, %v1082, %v1081
        %v1084 = vsel %vm676, %v1083, 0.0
        %v1085 = vlaneseq
        %v1086 = vshrl.u32 %v1085, 7
        %v1087 = vsub.s32 3, %v1086
        %v1088 = vrot.slane %v832, %v1087
        %v1089 = vmul.f32 %v1084, %v1088
        %1090 = vset.pattern.permute.xlu0 3
        %1091 = vperm.xlu0 %1090, %v833
        %v1092 = vpop.permute.xlu0 %1091
        %v1094 = vmul.f32 %v1089, %v1092
        %v1095 = vpack.c.bf16 %v1094, %v1094
        %1096 = vrot.lane.b32.xlu0 %v830, 104
        %v1097 = vpop.permute.xlu0 %1096
        %v1099 = vsel %vm870, %v1095, 0
        %v1102 = vsel %vm874, %v1097, 0
        %1104 = vmatprep.subr.bf16.mxu0 0
        %1105 = vmatpush1.bf16.msra.mxu0 %v1102
        %1106 = vmatprep.subr.bf16.mxu0 0
        %1107 = vmatpush1.bf16.msra.mxu0 0
        %1108 = vmatprep.subr.bf16.mxu0 0
        %1109 = vmatpush1.bf16.msra.mxu0 0
        %1110 = vmatprep.subr.bf16.mxu0 0
        %1111 = vmatpush1.bf16.msra.mxu0 0
        %1112 = vmatprep.subr.bf16.mxu0 0
        %1113 = vmatpush1.bf16.msra.mxu0 0
        %1114 = vmatprep.subr.bf16.mxu0 0
        %1115 = vmatpush1.bf16.msra.mxu0 0
        %1116 = vmatprep.subr.bf16.mxu0 0
        %1117 = vmatpush1.bf16.msra.mxu0 0
        %1118 = vmatprep.subr.bf16.mxu0 0
        %1119 = vmatpush1.bf16.msra.mxu0 0
        %1120 = vmatprep.subr.bf16.mxu0 0
        %1121 = vmatpush1.bf16.msra.mxu0 0
        %1122 = vmatprep.subr.bf16.mxu0 0
        %1123 = vmatpush1.bf16.msra.mxu0 0
        %1124 = vmatprep.subr.bf16.mxu0 0
        %1125 = vmatpush1.bf16.msra.mxu0 0
        %1126 = vmatprep.subr.bf16.mxu0 0
        %1127 = vmatpush1.bf16.msra.mxu0 0
        %1128 = vmatprep.subr.bf16.mxu0 0
        %1129 = vmatpush1.bf16.msra.mxu0 0
        %1130 = vmatprep.subr.bf16.mxu0 0
        %1131 = vmatpush1.bf16.msra.mxu0 0
        %1132 = vmatprep.subr.bf16.mxu0 0
        %1133 = vmatpush1.bf16.msra.mxu0 0
        %1134 = vmatprep.subr.bf16.mxu0 0
        %1135 = vmatpush1.bf16.msra.mxu0 0
        %1136 = vmatprep.mubr.bf16.mxu0 0
        %1137 = vmatmul.mubr.bf16.gmra.mrb[0].mxu0 %v1099
        %v1138 = vpop.f32.mrb[0].mxu0
        %v1139 = vadd.f32 0.0, %v1138
        %v1140 = vpop.f32.mrb[0].mxu0
        %v1141 = vpop.f32.mrb[0].mxu0
        %v1142 = vpop.f32.mrb[0].mxu0
        %1143 = vdwg.mxu0
        %1145 = vrot.lane.b32.xlu0 %v1139, 88
        %v1146 = vpop.permute.xlu0 %1145
        %v1148 = vmul.f32 %v824, %v1146
        %1150 = vrot.lane.b32.xlu0 %v922, 64
        %v1151 = vpop.permute.xlu0 %1150
        %1154 = vrot.lane.b32.xlu0 %v998, 64
        %v1155 = vpop.permute.xlu0 %1154
        %1158 = vrot.lane.b32.xlu0 %v1073, 64
        %v1159 = vpop.permute.xlu0 %1158
        %1162 = vrot.lane.b32.xlu0 %v1148, 64
        %v1163 = vpop.permute.xlu0 %1162
        %v1165 = vsel %vm870, %v1151, %v1155
        %vm1166 = vcmask 130048
        %v1167 = vsel %vm1166, %v1165, %v1159
        %vm1168 = vcmask 195584
        %v1169 = vsel %vm1168, %v1167, %v1163
        %v1170 = vpack.c.bf16 %v1169, %v1169
        %v1171 = vld [vmem:[%s10] sm:$0xf]
        %v1172 = vld [vmem:[%s10 + $0x4] sm:$0xf]
        %v1173 = vld [vmem:[%s10 + $0x8] sm:$0xf]
        %v1174 = vld [vmem:[%s10 + $0xc] sm:$0xf]
        %v1175 = vld [vmem:[%s11] sm:$0x1]
        %v1177 = vlaneseq
        %v1178 = vshrl.u32 %v1177, 7
        %v1179 = vsub.s32 0, %v1178
        %v1180 = vrot.slane %v1175, %v1179
        %v1186 = vunpack.c.l.b16 %v1171
        %v1187 = vunpack.c.l.b16 %v1172
        %v1188 = vunpack.c.l.b16 %v1173
        %v1189 = vunpack.c.l.b16 %v1174
        %v1190 = vpack.c.b16 %v1187, %v1186
        %v1191 = vpack.c.b16 %v1189, %v1188
        %v1195 = vsel %vm680, %v1170, 0
        %1197 = vmatprep.subr.bf16.mxu0 0
        %1198 = vmatpush1.bf16.msra.mxu0 %v1190
        %1199 = vmatprep.subr.bf16.mxu0 0
        %1200 = vmatpush1.bf16.msra.mxu0 %v1191
        %1201 = vmatprep.subr.bf16.mxu0 0
        %1202 = vmatpush1.bf16.msra.mxu0 0
        %1203 = vmatprep.subr.bf16.mxu0 0
        %1204 = vmatpush1.bf16.msra.mxu0 0
        %1205 = vmatprep.subr.bf16.mxu0 0
        %1206 = vmatpush1.bf16.msra.mxu0 0
        %1207 = vmatprep.subr.bf16.mxu0 0
        %1208 = vmatpush1.bf16.msra.mxu0 0
        %1209 = vmatprep.subr.bf16.mxu0 0
        %1210 = vmatpush1.bf16.msra.mxu0 0
        %1211 = vmatprep.subr.bf16.mxu0 0
        %1212 = vmatpush1.bf16.msra.mxu0 0
        %1213 = vmatprep.subr.bf16.mxu0 0
        %1214 = vmatpush1.bf16.msra.mxu0 0
        %1215 = vmatprep.subr.bf16.mxu0 0
        %1216 = vmatpush1.bf16.msra.mxu0 0
        %1217 = vmatprep.subr.bf16.mxu0 0
        %1218 = vmatpush1.bf16.msra.mxu0 0
        %1219 = vmatprep.subr.bf16.mxu0 0
        %1220 = vmatpush1.bf16.msra.mxu0 0
        %1221 = vmatprep.subr.bf16.mxu0 0
        %1222 = vmatpush1.bf16.msra.mxu0 0
        %1223 = vmatprep.subr.bf16.mxu0 0
        %1224 = vmatpush1.bf16.msra.mxu0 0
        %1225 = vmatprep.subr.bf16.mxu0 0
        %1226 = vmatpush1.bf16.msra.mxu0 0
        %1227 = vmatprep.subr.bf16.mxu0 0
        %1228 = vmatpush1.bf16.msra.mxu0 0
        %1229 = vmatprep.mubr.bf16.mxu0 0
        %1230 = vmatmul.mubr.bf16.gmra.mrb[0].mxu0 %v1195
        %v1231 = vpop.f32.mrb[0].mxu0
        %v1232 = vadd.f32 %v1180, %v1231
        %v1233 = vpop.f32.mrb[0].mxu0
        %v1234 = vpop.f32.mrb[0].mxu0
        %v1235 = vpop.f32.mrb[0].mxu0
        %1236 = vdwg.mxu0
        %v1237 = vld [vmem:[%s12] sm:$0xff]
        %1239 = vset.pattern.permute.xlu0 0
        %1240 = vperm.xlu0 %1239, %v1237
        %v1241 = vpop.permute.xlu0 %1240
        %v1243 = vmul.f32 %v1232, %v1241
        %v1244 = vadd.f32 %v677, %v1243
        %1245 = vst.msk [vmem:[#allocation2] sm:$0xff] %vm680, %v1244
        %v1246 = vld [vmem:[%s3] sm:$0x1]
        %v1247 = vld [vmem:[%s4] sm:$0x1]
        %v1248 = vsel %vm680, %v1244, 0.0
        %1249 = vadd.xlane.f32.xlu0 %v1248
        %v1250 = vpop.xlane.xlu0 %1249
        %v1251 = vmul.f32 %v1250, %v684
        %v1252 = vsub.f32 %v1244, %v1251
        %v1253 = vmul.f32 %v1252, %v1252
        %v1254 = vsel %vm680, %v1253, 0.0
        %1255 = vadd.xlane.f32.xlu0 %v1254
        %v1256 = vpop.xlane.xlu0 %1255
        %v1257 = vmul.f32 %v1256, %v684
        %v1258 = vadd.f32 %v1257, 1e-05
        %v1259 = vrsqrt.pop %v1258
        %v1260 = vmul.f32 %v1252, %v1259
        %v1262 = vlaneseq
        %v1263 = vshrl.u32 %v1262, 7
        %v1264 = vsub.s32 0, %v1263
        %v1265 = vrot.slane %v1246, %v1264
        %v1267 = vmul.f32 %v1260, %v1265
        %v1269 = vlaneseq
        %v1270 = vshrl.u32 %v1269, 7
        %v1271 = vsub.s32 0, %v1270
        %v1272 = vrot.slane %v1247, %v1271
        %v1274 = vadd.f32 %v1267, %v1272
        %v1275 = vrot.slane %v1274, 7
        %v1276 = vsel %vm712, %v1275, 0.0
        %v1277 = vsel %vm716, %v1276, %v1274
        %v1278 = vpack.c.bf16 %v1277, %v1277
        %vm1279 = vcmask 257024
        %1280 = vst.msk [vmem:[#allocation3] sm:$0xf] %vm1279, %v1278
        %v1281 = vld [vmem:[%s17] sm:$0xf]
        %v1282 = vld [vmem:[%s17 + $0x4] sm:$0xf]
        %v1283 = vld [vmem:[%s17 + $0x8] sm:$0xf]
        %v1284 = vld [vmem:[%s17 + $0xc] sm:$0xf]
        %v1285 = vld [vmem:[%s18] sm:$0x1]
        %v1287 = vlaneseq
        %v1288 = vshrl.u32 %v1287, 7
        %v1289 = vsub.s32 0, %v1288
        %v1290 = vrot.slane %v1285, %v1289
        %v1296 = vunpack.c.l.b16 %v1281
        %v1297 = vunpack.c.l.b16 %v1282
        %v1298 = vunpack.c.l.b16 %v1283
        %v1299 = vunpack.c.l.b16 %v1284
        %v1300 = vpack.c.b16 %v1297, %v1296
        %v1301 = vpack.c.b16 %v1299, %v1298
        %v1305 = vsel %vm680, %v1278, 0
        %1307 = vmatprep.subr.bf16.mxu0 0
        %1308 = vmatpush1.bf16.msra.mxu0 %v1300
        %1309 = vmatprep.subr.bf16.mxu0 0
        %1310 = vmatpush1.bf16.msra.mxu0 %v1301
        %1311 = vmatprep.subr.bf16.mxu0 0
        %1312 = vmatpush1.bf16.msra.mxu0 0
        %1313 = vmatprep.subr.bf16.mxu0 0
        %1314 = vmatpush1.bf16.msra.mxu0 0
        %1315 = vmatprep.subr.bf16.mxu0 0
        %1316 = vmatpush1.bf16.msra.mxu0 0
        %1317 = vmatprep.subr.bf16.mxu0 0
        %1318 = vmatpush1.bf16.msra.mxu0 0
        %1319 = vmatprep.subr.bf16.mxu0 0
        %1320 = vmatpush1.bf16.msra.mxu0 0
        %1321 = vmatprep.subr.bf16.mxu0 0
        %1322 = vmatpush1.bf16.msra.mxu0 0
        %1323 = vmatprep.subr.bf16.mxu0 0
        %1324 = vmatpush1.bf16.msra.mxu0 0
        %1325 = vmatprep.subr.bf16.mxu0 0
        %1326 = vmatpush1.bf16.msra.mxu0 0
        %1327 = vmatprep.subr.bf16.mxu0 0
        %1328 = vmatpush1.bf16.msra.mxu0 0
        %1329 = vmatprep.subr.bf16.mxu0 0
        %1330 = vmatpush1.bf16.msra.mxu0 0
        %1331 = vmatprep.subr.bf16.mxu0 0
        %1332 = vmatpush1.bf16.msra.mxu0 0
        %1333 = vmatprep.subr.bf16.mxu0 0
        %1334 = vmatpush1.bf16.msra.mxu0 0
        %1335 = vmatprep.subr.bf16.mxu0 0
        %1336 = vmatpush1.bf16.msra.mxu0 0
        %1337 = vmatprep.subr.bf16.mxu0 0
        %1338 = vmatpush1.bf16.msra.mxu0 0
        %1339 = vmatprep.mubr.bf16.mxu0 0
        %1340 = vmatmul.mubr.bf16.gmra.mrb[0].mxu0 %v1305
        %v1341 = vpop.f32.mrb[0].mxu0
        %v1342 = vadd.f32 %v1290, %v1341
        %v1343 = vpop.f32.mrb[0].mxu0
        %v1344 = vpop.f32.mrb[0].mxu0
        %v1345 = vpop.f32.mrb[0].mxu0
        %1346 = vdwg.mxu0
        %v1347 = vxor.u32 %v1342, 2147483648
        %v1348 = vmul.f32 %v1347, 1.442695
        %v1349 = vpow.pop %v1348
        %v1350 = vadd.f32 %v1349, 1.0
        %v1351 = vrcp.pop %v1350
        %v1352 = vmul.f32 1.0, %v1351
        %1353 = vst.msk [vmem:[#allocation4] sm:$0xff] %vm680, %v1352
        %1354 = vst.msk [vmem:[#allocation5] sm:$0xff] %vm680, 0.0
      $region100: #{encoder_forward.2} parent=95 // pred_fallthru
        _
      %v1355 = vld [vmem:[#allocation3] sm:$0xf]
      %v1356 = vld [vmem:[%s653] sm:$0xff]
      %v1357 = vld [vmem:[%s653 + $0x8] sm:$0xff]
      %v1358 = vld [vmem:[%s653 + $0x10] sm:$0xff]
      %v1359 = vld [vmem:[%s653 + $0x18] sm:$0xff]
      %v1360 = vld [vmem:[%s657] sm:$0x3]
      %v1362 = vlaneseq
      %v1363 = vshrl.u32 %v1362, 7
      %v1364 = vsub.s32 0, %v1363
      %v1365 = vrot.slane %v1360, %v1364
      %v1366 = vlaneseq
      %v1367 = vshrl.u32 %v1366, 7
      %v1368 = vsub.s32 1, %v1367
      %v1369 = vrot.slane %v1360, %v1368
      %v1376 = vunpack.c.l.b16 %v1356
      %v1377 = vunpack.c.h.b16 %v1356
      %v1378 = vunpack.c.l.b16 %v1357
      %v1379 = vunpack.c.h.b16 %v1357
      %v1380 = vunpack.c.l.b16 %v1358
      %v1381 = vunpack.c.h.b16 %v1358
      %v1382 = vunpack.c.l.b16 %v1359
      %v1383 = vunpack.c.h.b16 %v1359
      %v1384 = vpack.c.b16 %v1378, %v1376
      %v1385 = vpack.c.b16 %v1379, %v1377
      %v1386 = vpack.c.b16 %v1382, %v1380
      %v1387 = vpack.c.b16 %v1383, %v1381
      %vm1392 = vcmask 261120
      %v1394 = vsel %vm1392, %v1355, 0
      %1396 = vmatprep.subr.bf16.mxu0 %v1385
      %1397 = vmatpush1.bf16.msra.mxu0 %v1384
      %1398 = vmatprep.subr.bf16.mxu0 %v1387
      %1399 = vmatpush1.bf16.msra.mxu0 %v1386
      %1400 = vmatprep.subr.bf16.mxu0 0
      %1401 = vmatpush1.bf16.msra.mxu0 0
      %1402 = vmatprep.subr.bf16.mxu0 0
      %1403 = vmatpush1.bf16.msra.mxu0 0
      %1404 = vmatprep.subr.bf16.mxu0 0
      %1405 = vmatpush1.bf16.msra.mxu0 0
      %1406 = vmatprep.subr.bf16.mxu0 0
      %1407 = vmatpush1.bf16.msra.mxu0 0
      %1408 = vmatprep.subr.bf16.mxu0 0
      %1409 = vmatpush1.bf16.msra.mxu0 0
      %1410 = vmatprep.subr.bf16.mxu0 0
      %1411 = vmatpush1.bf16.msra.mxu0 0
      %1412 = vmatprep.subr.bf16.mxu0 0
      %1413 = vmatpush1.bf16.msra.mxu0 0
      %1414 = vmatprep.subr.bf16.mxu0 0
      %1415 = vmatpush1.bf16.msra.mxu0 0
      %1416 = vmatprep.subr.bf16.mxu0 0
      %1417 = vmatpush1.bf16.msra.mxu0 0
      %1418 = vmatprep.subr.bf16.mxu0 0
      %1419 = vmatpush1.bf16.msra.mxu0 0
      %1420 = vmatprep.subr.bf16.mxu0 0
      %1421 = vmatpush1.bf16.msra.mxu0 0
      %1422 = vmatprep.subr.bf16.mxu0 0
      %1423 = vmatpush1.bf16.msra.mxu0 0
      %1424 = vmatprep.subr.bf16.mxu0 0
      %1425 = vmatpush1.bf16.msra.mxu0 0
      %1426 = vmatprep.subr.bf16.mxu0 0
      %1427 = vmatpush1.bf16.msra.mxu0 0
      %1428 = vmatprep.mubr.bf16.mxu0 0
      %1429 = vmatmul.mubr.bf16.gmra.mrb[0].mxu0 %v1394
      %v1430 = vpop.f32.mrb[0].mxu0
      %v1431 = vadd.f32 %v1365, %v1430
      %v1432 = vpop.f32.mrb[0].mxu0
      %v1433 = vadd.f32 %v1369, %v1432
      %v1434 = vpop.f32.mrb[0].mxu0
      %v1435 = vpop.f32.mrb[0].mxu0
      %1436 = vdwg.mxu0
      %v1437 = vld [vmem:[#allocation5] sm:$0xff]
      %v1438 = vmax.f32 %v1431, 0.0
      %vm1439 = vcmp.ne.f32.partialorder %v1431, %v1431
      %v1440 = vadd.f32 %v1431, 0.0
      %v1441 = vand.u32 2147483647, %v1431
      %v1442 = vsub.f32 0.0, %v1441
      %v1443 = vmul.f32 %v1442, 1.442695
      %v1444 = vpow.pop %v1443
      %v1445 = vadd.f32 %v1444, 1.0
      %v1446 = vlog2.pop %v1445
      %v1447 = vmul.f32 %v1446, 0.6931472
      %v1448 = vmul.f32 -0.5, %v1444
      %v1449 = vadd.f32 %v1448, 1.0
      %v1450 = vmul.f32 %v1449, %v1444
      %v1451 = vand.u32 2147483647, %v1444
      %vm1452 = vcmp.lt.f32.partialorder %v1451, 0.0004427343
      %v1453 = vsel %vm1452, %v1450, %v1447
      %v1454 = vadd.f32 %v1438, %v1453
      %v1455 = vsel %vm1439, %v1440, %v1454
      %v1456 = vtanh.pop %v1455
      %v1457 = vmul.f32 %v1431, %v1456
      %1460 = vrot.lane.b32.xlu0 %v1431, 48
      %v1461 = vpop.permute.xlu0 %1460
      %1462 = vrot.lane.b32.xlu0 %v1433, 48
      %v1463 = vpop.permute.xlu0 %1462
      %vm1464 = vcmask 392192
      %v1465 = vsel %vm1464, %v1461, %v1463
      %v1467 = vmul.f32 %v1457, %v1465
      %v1468 = vpack.c.bf16 %v1467, %v1467
      %v1469 = vld [vmem:[%s662] sm:$0xf]
      %v1470 = vld [vmem:[%s662 + $0x4] sm:$0xf]
      %v1471 = vld [vmem:[%s662 + $0x8] sm:$0xf]
      %v1472 = vld [vmem:[%s662 + $0xc] sm:$0xf]
      %v1473 = vld [vmem:[%s662 + $0x10] sm:$0xf]
      %v1474 = vld [vmem:[%s662 + $0x14] sm:$0xf]
      %v1475 = vld [vmem:[%s662 + $0x18] sm:$0xf]
      %v1476 = vld [vmem:[%s662 + $0x1c] sm:$0xf]
      %v1477 = vld [vmem:[%s662 + $0x20] sm:$0xf]
      %v1478 = vld [vmem:[%s662 + $0x24] sm:$0xf]
      %v1489 = vunpack.c.l.b16 %v1469
      %v1490 = vunpack.c.l.b16 %v1470
      %v1491 = vunpack.c.l.b16 %v1471
      %v1492 = vunpack.c.l.b16 %v1472
      %v1493 = vunpack.c.l.b16 %v1473
      %v1494 = vunpack.c.l.b16 %v1474
      %v1495 = vunpack.c.l.b16 %v1475
      %v1496 = vunpack.c.l.b16 %v1476
      %v1497 = vunpack.c.l.b16 %v1477
      %v1498 = vunpack.c.l.b16 %v1478
      %v1499 = vpack.c.b16 %v1490, %v1489
      %v1500 = vpack.c.b16 %v1492, %v1491
      %v1501 = vpack.c.b16 %v1494, %v1493
      %v1502 = vpack.c.b16 %v1496, %v1495
      %v1503 = vpack.c.b16 %v1498, %v1497
      %vm1509 = vcmask 654336
      %v1511 = vsel %vm1509, %v1468, 0
      %1513 = vmatprep.subr.bf16.mxu0 0
      %1514 = vmatpush1.bf16.msra.mxu0 %v1499
      %1515 = vmatprep.subr.bf16.mxu0 0
      %1516 = vmatpush1.bf16.msra.mxu0 %v1500
      %1517 = vmatprep.subr.bf16.mxu0 0
      %1518 = vmatpush1.bf16.msra.mxu0 %v1501
      %1519 = vmatprep.subr.bf16.mxu0 0
      %1520 = vmatpush1.bf16.msra.mxu0 %v1502
      %1521 = vmatprep.subr.bf16.mxu0 0
      %1522 = vmatpush1.bf16.msra.mxu0 %v1503
      %1523 = vmatprep.subr.bf16.mxu0 0
      %1524 = vmatpush1.bf16.msra.mxu0 0
      %1525 = vmatprep.subr.bf16.mxu0 0
      %1526 = vmatpush1.bf16.msra.mxu0 0
      %1527 = vmatprep.subr.bf16.mxu0 0
      %1528 = vmatpush1.bf16.msra.mxu0 0
      %1529 = vmatprep.subr.bf16.mxu0 0
      %1530 = vmatpush1.bf16.msra.mxu0 0
      %1531 = vmatprep.subr.bf16.mxu0 0
      %1532 = vmatpush1.bf16.msra.mxu0 0
      %1533 = vmatprep.subr.bf16.mxu0 0
      %1534 = vmatpush1.bf16.msra.mxu0 0
      %1535 = vmatprep.subr.bf16.mxu0 0
      %1536 = vmatpush1.bf16.msra.mxu0 0
      %1537 = vmatprep.subr.bf16.mxu0 0
      %1538 = vmatpush1.bf16.msra.mxu0 0
      %1539 = vmatprep.subr.bf16.mxu0 0
      %1540 = vmatpush1.bf16.msra.mxu0 0
      %1541 = vmatprep.subr.bf16.mxu0 0
      %1542 = vmatpush1.bf16.msra.mxu0 0
      %1543 = vmatprep.subr.bf16.mxu0 0
      %1544 = vmatpush1.bf16.msra.mxu0 0
      %1545 = vmatprep.mubr.bf16.mxu0 0
      %1546 = vmatmul.mubr.bf16.gmra.mrb[0].mxu0 %v1511
      %v1547 = vpop.f32.mrb[0].mxu0
      %v1548 = vadd.f32 0.0, %v1547
      %v1549 = vpop.f32.mrb[0].mxu0
      %v1550 = vpop.f32.mrb[0].mxu0
      %v1551 = vpop.f32.mrb[0].mxu0
      %1552 = vdwg.mxu0
      %v1553 = vadd.f32 %v1437, %v1548
      %1554 = vst.msk [vmem:[#allocation5] sm:$0xff] %vm1392, %v1553
      // Predicated region
      $region101: #{encoder_forward.2} parent=95 // pred_check
        %p1555 = pneg %p668
      $region102: #{encoder_forward.2} parent=95 // pred_check_branch
        %1557 = sbr.rel (%p1555) target = $region104
      $region103: #{encoder_forward.2} parent=95 // pred_region
        %v1558 = vld [vmem:[#allocation2] sm:$0xff]
        %v1559 = vld [vmem:[#allocation4] sm:$0xff]
        %v1560 = vld [vmem:[#allocation5] sm:$0xff]
        %v1561 = vld [vmem:[%s16] sm:$0x1]
        %v1563 = vlaneseq
        %v1564 = vshrl.u32 %v1563, 7
        %v1565 = vsub.s32 0, %v1564
        %v1566 = vrot.slane %v1561, %v1565
        %v1568 = vadd.f32 %v1560, %v1566
        %v1569 = vmul.f32 %v1559, %v1568
        %v1570 = vadd.f32 %v1558, %v1569
        %1571 = vst.msk [vmem:[%s666] sm:$0xff] %vm1392, %v1570
      $region104: #{encoder_forward.2} parent=95 // pred_fallthru
        _
      %p1572 = scmp.lt.s32.totalorder %s34, 1
      %s1573 = scalar_select %p1572, %s34, 1
      %s1574 = smul.addr %s1573, 8
      %s1575 = scalar_lea.vmem %s19, %s1574
      // Predicated region
      $region105: #{encoder_forward.2} parent=95 // pred_check
        %p1576 = pneg %p479
      $region106: #{encoder_forward.2} parent=95 // pred_check_branch
        %1578 = sbr.rel (%p1576) target = $region108
      $region107: #{encoder_forward.2} parent=95 // pred_region
        _
      $region108: #{encoder_forward.2} parent=95 // pred_fallthru
        _
    $region96: #{encoder_forward.2} parent=5 // pred_fallthru
      _
    %p1579 = scmp.le.s32.totalorder 2, %s25
    // Predicated region
    $region109: #{encoder_forward.2} parent=5 // pred_check
      %p1580 = pneg %p1579
    $region110: #{encoder_forward.2} parent=5 // pred_check_branch
      %1582 = sbr.rel (%p1580) target = $region112
    $region111: #{encoder_forward.2} parent=5 // pred_region
      %s1583 = ssub.s32 %s25, 2
      // Predicated region
      $region113: #{encoder_forward.2} parent=111 // pred_check
        %p1584 = pneg %p485
      $region114: #{encoder_forward.2} parent=111 // pred_check_branch
        %1586 = sbr.rel (%p1584) target = $region116
      $region115: #{encoder_forward.2} parent=111 // pred_region
        %p1587 = scmp.lt.s32.totalorder %s36, 1
        %s1588 = scalar_select %p1587, %s36, 1
        %s1589 = smul.addr %s1588, 8
        %s1590 = scalar_lea.vmem %s19, %s1589
      $region116: #{encoder_forward.2} parent=111 // pred_fallthru
        _
    $region112: #{encoder_forward.2} parent=5 // pred_fallthru
      _
  $region6: #{encoder_forward.2} parent=0 // loop_footer
    %s29 = sadd.s32 1, %s25
  $region7: #{encoder_forward.2} parent=0 // loop_footer_branch
    %24 = sbr.rel target = $region3
  $region8: #{encoder_forward.2} parent=0 // loop_exit
    _

</llo_original>
